<compile_context>
chip_gen: v7x
topology: tpu7x:2x2x1
jax: 0.10.0
libtpu: 0.0.40
codegen_flags: <defaults>
</compile_context>

<pallas_src>
import functools

import numpy as np
import jax
import jax.numpy as jnp
from jax import lax
from jax.experimental import pallas as pl
from jax.experimental.pallas import tpu as pltpu


ALPHA = np.array([0.1, 0.2, 0.1], np.float32)
GRANULARITY_COSTS = np.array([8.0, 256.0, 8.0], np.float32)
THRE = 0.1


# -----------------------------------------------------------------------------
# Host-side helpers
# -----------------------------------------------------------------------------
def _make_tap_masks_host(H, W):
    """(9, H*W) f32 boundary masks for a 3x3 'same' conv over a flattened lane axis.

    Tap order t = ky*3 + kx; mask is evaluated at the OUTPUT position and zeroes
    contributions whose shifted source falls outside the image (incl. row wrap).
    """
    M = H * W
    col = np.arange(M) % W
    row = np.arange(M) // W
    masks = np.ones((9, M), np.float32)
    for ky in range(3):
        for kx in range(3):
            dy, dx = ky - 1, kx - 1
            valid = np.ones(M, bool)
            if dy < 0:
                valid &= row >= -dy
            if dy > 0:
                valid &= row < H - dy
            if dx < 0:
                valid &= col >= -dx
            if dx > 0:
                valid &= col < W - dx
            masks[ky * 3 + kx] = valid.astype(np.float32)
    return jnp.asarray(masks)


# -----------------------------------------------------------------------------
# In-kernel helpers
# -----------------------------------------------------------------------------
def _tap_accumulate(y_all, mvals, H, W, cout):
    """Turn the stacked-tap matmul output into the 3x3 'same' conv result.

    y_all: (9*cout, M) value  (tap-major rows)
    mvals: (9, M) boundary masks
    returns (cout, M) f32
    """
    M = H * W
    acc = jnp.zeros((cout, M), jnp.float32)
    for ky in range(3):
        for kx in range(3):
            t = ky * 3 + kx
            y = y_all[t * cout:(t + 1) * cout]       # static, 8-sublane-aligned slice
            s = (ky - 1) * W + (kx - 1)              # flat shift: out[p] needs y[p + s]
            if s != 0:
                y = pltpu.roll(y, (-s) % M, 1)       # np.roll convention -> out[p] = y[p + s]
                y = y * mvals[t:t + 1, :]            # zero OOB / row-wrapped taps
            acc = acc + y
    return acc


def _conv3x3_stacked(x, w_stacked, mvals, H, W, cout):
    """3x3 'same' conv (nn.Conv2d semantics, no bias) as ONE MXU matmul + tap accumulate.

    x: (Cin, M), w_stacked: (9*cout, Cin) with BN scale pre-folded.
    """
    y_all = jnp.dot(w_stacked, x, preferred_element_type=jnp.float32)   # (9*cout, M)
    return _tap_accumulate(y_all, mvals, H, W, cout)


# -----------------------------------------------------------------------------
# Kernel A: GranularityConfidenceModule (one agent per grid step)
# -----------------------------------------------------------------------------
def gcm_kernel(x_ref, masks_ref, w1_ref, b1_ref, w2_ref, b2_ref, w3_ref, b3_ref,
               conf_ref, *, H, W):
    """x: (1, 256, M) channel-major  ->  conf: (1, 8, M)  (rows 0-2 valid, rows 3-7 zero)."""
    M = H * W
    mvals = masks_ref[...]                                              # (9, M)
    x = x_ref[0]                                                        # (256, M)

    h1 = _conv3x3_stacked(x, w1_ref[...], mvals, H, W, 64)
    h1 = jnp.maximum(h1 + b1_ref[...], 0.0)                             # BN shift + ReLU
    h2 = _conv3x3_stacked(h1, w2_ref[...], mvals, H, W, 32)
    h2 = jnp.maximum(h2 + b2_ref[...], 0.0)

    # 1x1 conv padded to 8 output rows (rows 3-7 have zero weight/bias), then sigmoid.
    y = jnp.dot(w3_ref[...], h2, preferred_element_type=jnp.float32) + b3_ref[...]   # (8, M)
    rmask = (lax.broadcasted_iota(jnp.int32, (8, M), 0) < 3).astype(jnp.float32)
    conf_ref[0] = jax.nn.sigmoid(y) * rmask                             # full-sublane store


def _gcm_call(params, bev, masks, H, W):
    N, Cin, M = bev.shape
    w3p = jnp.pad(params["gcm_w3"], ((0, 5), (0, 0)))                   # (8, 32)
    b3p = jnp.pad(params["gcm_b3"], ((0, 5), (0, 0)))                   # (8, 1)
    kernel = functools.partial(gcm_kernel, H=H, W=W)
    return pl.pallas_call(
        kernel,
        out_shape=jax.ShapeDtypeStruct((N, 8, M), jnp.float32),
        grid=(N,),
        in_specs=[
            pl.BlockSpec((1, Cin, M), lambda n: (n, 0, 0)),
            pl.BlockSpec(masks.shape, lambda n: (0, 0)),
            pl.BlockSpec(params["gcm_w1"].shape, lambda n: (0, 0)),
            pl.BlockSpec(params["gcm_b1"].shape, lambda n: (0, 0)),
            pl.BlockSpec(params["gcm_w2"].shape, lambda n: (0, 0)),
            pl.BlockSpec(params["gcm_b2"].shape, lambda n: (0, 0)),
            pl.BlockSpec(w3p.shape, lambda n: (0, 0)),
            pl.BlockSpec(b3p.shape, lambda n: (0, 0)),
        ],
        out_specs=pl.BlockSpec((1, 8, M), lambda n: (n, 0, 0)),
        compiler_params=pltpu.CompilerParams(dimension_semantics=("parallel",)),
    )(bev, masks,
      params["gcm_w1"], params["gcm_b1"],
      params["gcm_w2"], params["gcm_b2"],
      w3p, b3p)


# -----------------------------------------------------------------------------
# Kernel B: UMM + sparsification + granularity masking (one COLLABORATOR per grid step)
# -----------------------------------------------------------------------------
def comm_kernel(conf_ego_ref, conf_self_ref, g1_ref, g2_ref, g3_ref, masks_ref,
                w1d_ref, w1c_ref, w1o_ref, b1_ref, w2_ref, b2_ref, w3_ref, b3_ref,
                wc_ref, sparse_ref, o1_ref, o2_ref, o3_ref, *, H, W, thre):
    M = H * W
    mvals = masks_ref[...]                                              # (9, M)
    ce = conf_ego_ref[0]                                                # (8, M), rows 3-7 zero
    cs = conf_self_ref[0]                                               # (8, M), rows 3-7 zero

    # UMM layer 1: conv over comb = cat(1-conf_ego, conf_self, 0, 0) without ever building comb:
    #   W1 @ comb = sum_j W1_demand[:, j]  -  W1_demand @ conf_ego  +  W1_conf @ conf_self
    y_all = (w1o_ref[...]
             - jnp.dot(w1d_ref[...], ce, preferred_element_type=jnp.float32)
             + jnp.dot(w1c_ref[...], cs, preferred_element_type=jnp.float32))    # (288, M)
    h1 = _tap_accumulate(y_all, mvals, H, W, 32)
    h1 = jnp.maximum(h1 + b1_ref[...], 0.0)

    h2 = _conv3x3_stacked(h1, w2_ref[...], mvals, H, W, 16)
    h2 = jnp.maximum(h2 + b2_ref[...], 0.0)

    # 1x1 conv padded to 8 output rows (rows 3-7 zero weights/bias).
    utility = jnp.dot(w3_ref[...], h2, preferred_element_type=jnp.float32) + b3_ref[...]  # (8, M)

    # TransmissionSparsification (torch.max(dim=1) + scatter one-hot, first-index ties).
    # wc rows 3-7 hold +1e9 so padded rows can never win the max and stay exactly zero.
    net = utility - wc_ref[...]                                         # (8, M)
    mx = jnp.max(net, axis=0, keepdims=True)                            # (1, M)
    gid = lax.broadcasted_iota(jnp.int32, net.shape, 0).astype(jnp.float32)
    is_max = net == mx
    first = jnp.min(jnp.where(is_max, gid, jnp.float32(net.shape[0])),
                    axis=0, keepdims=True)
    one_hot = (gid == first).astype(jnp.float32)
    sparse = one_hot * (mx > thre).astype(jnp.float32)                  # (8, M), rows 3-7 zero

    sparse_ref[0] = sparse
    o1_ref[0] = g1_ref[0] * sparse[0:1]
    o2_ref[0] = g2_ref[0] * sparse[1:2]
    o3_ref[0] = g3_ref[0] * sparse[2:3]


def _comm_call(params, conf, g1, g2, g3, masks, wc, H, W, thre):
    N = g1.shape[0]
    M = H * W
    C1, C2, C3 = g1.shape[1], g2.shape[1], g3.shape[1]

    # Derived constant operands (trace-time, tiny).
    w1 = params["umm_w1"]                                   # (288, 8): in-cols 0-2 demand, 3-5 conf
    K = w1.shape[1]
    w1d = jnp.pad(w1[:, 0:3], ((0, 0), (0, K - 3)))         # demand columns (K=8 to match conf blocks)
    w1c = jnp.pad(w1[:, 3:6], ((0, 0), (0, K - 3)))         # confidence columns
    w1o = jnp.sum(w1[:, 0:3], axis=1, keepdims=True)        # constant "1" contribution (288, 1)
    w3p = jnp.pad(params["umm_w3"], ((0, 5), (0, 0)))       # (8, 16)
    b3p = jnp.pad(params["umm_b3"], ((0, 5), (0, 0)))       # (8, 1)
    wc8 = jnp.concatenate([wc, jnp.full((5, 1), 1e9, jnp.float32)], axis=0)

    kernel = functools.partial(comm_kernel, H=H, W=W, thre=thre)
    return pl.pallas_call(
        kernel,
        out_shape=(
            jax.ShapeDtypeStruct((N - 1, 8, M), jnp.float32),
            jax.ShapeDtypeStruct((N, C1, M), jnp.float32),
            jax.ShapeDtypeStruct((N, C2, M), jnp.float32),
            jax.ShapeDtypeStruct((N, C3, M), jnp.float32),
        ),
        grid=(N - 1,),
        in_specs=[
            pl.BlockSpec((1, 8, M), lambda n: (0, 0, 0)),        # ego confidence (fixed block)
            pl.BlockSpec((1, 8, M), lambda n: (n + 1, 0, 0)),    # collaborator confidence
            pl.BlockSpec((1, C1, M), lambda n: (n + 1, 0, 0)),
            pl.BlockSpec((1, C2, M), lambda n: (n + 1, 0, 0)),
            pl.BlockSpec((1, C3, M), lambda n: (n + 1, 0, 0)),
            pl.BlockSpec(masks.shape, lambda n: (0, 0)),
            pl.BlockSpec(w1d.shape, lambda n: (0, 0)),
            pl.BlockSpec(w1c.shape, lambda n: (0, 0)),
            pl.BlockSpec(w1o.shape, lambda n: (0, 0)),
            pl.BlockSpec(params["umm_b1"].shape, lambda n: (0, 0)),
            pl.BlockSpec(params["umm_w2"].shape, lambda n: (0, 0)),
            pl.BlockSpec(params["umm_b2"].shape, lambda n: (0, 0)),
            pl.BlockSpec(w3p.shape, lambda n: (0, 0)),
            pl.BlockSpec(b3p.shape, lambda n: (0, 0)),
            pl.BlockSpec(wc8.shape, lambda n: (0, 0)),
        ],
        out_specs=(
            pl.BlockSpec((1, 8, M), lambda n: (n, 0, 0)),
            pl.BlockSpec((1, C1, M), lambda n: (n + 1, 0, 0)),
            pl.BlockSpec((1, C2, M), lambda n: (n + 1, 0, 0)),
            pl.BlockSpec((1, C3, M), lambda n: (n + 1, 0, 0)),
        ),
        # o1/o2/o3 alias g1/g2/g3: the ego block (agent 0) is never visited by the grid, so it
        # passes through in place with zero kernel HBM traffic.
        input_output_aliases={2: 1, 3: 2, 4: 3},
        compiler_params=pltpu.CompilerParams(dimension_semantics=("parallel",)),
    )(conf, conf, g1, g2, g3, masks,
      w1d, w1c, w1o, params["umm_b1"],
      params["umm_w2"], params["umm_b2"],
      w3p, b3p, wc8)


# -----------------------------------------------------------------------------
# Deterministic parameter initialization (synthetic; inference-mode BN folded into weights)
# -----------------------------------------------------------------------------
def _fold_bn(gamma, beta, mean, var, eps=1e-5):
    scale = gamma / jnp.sqrt(var + eps)
    shift = beta - mean * scale
    return scale, shift


def init_params(key):
    ks = jax.random.split(key, 12)

    def conv3x3_w(k, cout, cin):            # (9, cout, cin), tap t = ky*3 + kx (torch w[:, :, ky, kx])
        fan_in = cin * 9
        return jax.random.normal(k, (9, cout, cin), jnp.float32) / jnp.sqrt(fan_in)

    def bn(k, c):
        k1, k2, k3, k4 = jax.random.split(k, 4)
        gamma = jax.random.uniform(k1, (c,), minval=0.5, maxval=1.5)
        beta = 0.1 * jax.random.normal(k2, (c,))
        mean = 0.1 * jax.random.normal(k3, (c,))
        var = jax.random.uniform(k4, (c,), minval=0.5, maxval=1.5)
        return _fold_bn(gamma, beta, mean, var)

    def stack_fold(w_taps, scale):          # fold BN scale per out-channel, stack taps -> (9*cout, cin)
        cout, cin = w_taps.shape[1], w_taps.shape[2]
        w = w_taps * scale.reshape(1, cout, 1)
        return w.reshape(9 * cout, cin).astype(jnp.float32)

    p = {}
    # GranularityConfidenceModule: 256 -> 64 -> 32 -> 3 (1x1 + sigmoid)
    s1, b1 = bn(ks[1], 64)
    p["gcm_w1"] = stack_fold(conv3x3_w(ks[0], 64, 256), s1)              # (576, 256)
    p["gcm_b1"] = b1.reshape(64, 1).astype(jnp.float32)
    s2, b2 = bn(ks[3], 32)
    p["gcm_w2"] = stack_fold(conv3x3_w(ks[2], 32, 64), s2)               # (288, 64)
    p["gcm_b2"] = b2.reshape(32, 1).astype(jnp.float32)
    p["gcm_w3"] = jax.random.normal(ks[4], (3, 32), jnp.float32) / jnp.sqrt(32.0)
    p["gcm_b3"] = 0.1 * jax.random.normal(ks[5], (3, 1), jnp.float32)
    # UtilityMatchingModule: 6 -> 32 -> 16 -> 3 (1x1). Input channels zero-padded 6 -> 8 (K=8).
    w1 = conv3x3_w(ks[6], 32, 6)
    w1 = jnp.concatenate([w1, jnp.zeros((9, 32, 2), jnp.float32)], axis=-1)
    s1u, b1u = bn(ks[7], 32)
    p["umm_w1"] = stack_fold(w1, s1u)                                    # (288, 8)
    p["umm_b1"] = b1u.reshape(32, 1).astype(jnp.float32)
    s2u, b2u = bn(ks[9], 16)
    p["umm_w2"] = stack_fold(conv3x3_w(ks[8], 16, 32), s2u)              # (144, 32)
    p["umm_b2"] = b2u.reshape(16, 1).astype(jnp.float32)
    p["umm_w3"] = jax.random.normal(ks[10], (3, 16), jnp.float32) / jnp.sqrt(16.0)
    p["umm_b3"] = 0.1 * jax.random.normal(ks[11], (3, 1), jnp.float32)
    return p


# -----------------------------------------------------------------------------
# Forward pass (mirrors AdvancedCommunication.forward)
# -----------------------------------------------------------------------------
def advanced_communication_forward(params, g1, g2, g3, unified_bev):
    """g1/g2/g3: (N, C_*, H, W) NCHW, unified_bev: (N, 256, H, W) NCHW."""
    num_agents, c1, H, W = g1.shape
    c2, c3 = g2.shape[1], g3.shape[1]
    cb = unified_bev.shape[1]
    M = H * W

    masks = _make_tap_masks_host(H, W)                         # (9, M) constants
    bev = unified_bev.reshape(num_agents, cb, M)               # free contiguous reshape
    conf = _gcm_call(params, bev, masks, H, W)                 # (N, 8, M), rows 3-7 zero
    ego_demand = (1.0 - conf[0:1, 0:3]).reshape(1, 3, H, W)

    if num_agents <= 1:
        return ego_demand, g1, g2, g3, jnp.float32(0.0)

    wc = jnp.asarray((ALPHA * GRANULARITY_COSTS).reshape(3, 1))
    # TODO(synk): original get_sparse_data indexes g2[2:]/g3[3:] and torch.stack's mismatched
    # shapes (shape-inconsistent for any num_agents); we keep the shape-consistent reading:
    # collaborators = agents [1:], ego row passed through unchanged, outputs (N, C, H, W).
    sparse_maps, o1, o2, o3 = _comm_call(
        params, conf,
        g1.reshape(num_agents, c1, M),
        g2.reshape(num_agents, c2, M),
        g3.reshape(num_agents, c3, M),
        masks, wc, H, W, THRE)

    commu_volume = jnp.sum(sparse_maps)                        # padded channel rows are zero
    return (ego_demand,
            o1.reshape(num_agents, c1, H, W),
            o2.reshape(num_agents, c2, H, W),
            o3.reshape(num_agents, c3, H, W),
            commu_volume)


# -----------------------------------------------------------------------------
# Pure-JAX reference (lax.conv) using the SAME folded weights — correctness check
# -----------------------------------------------------------------------------
def _conv3x3_ref(x, w_stacked, cout):
    cin = w_stacked.shape[1]
    w = w_stacked.reshape(3, 3, cout, cin)                      # [ky, kx, cout, cin] (tap-major)
    w = jnp.transpose(w, (2, 3, 0, 1))                          # OIHW (cross-correlation, like torch)
    return lax.conv_general_dilated(x, w, (1, 1), "SAME",
                                    dimension_numbers=("NCHW", "OIHW", "NCHW"))


def _reference_forward(params, g1, g2, g3, unified_bev):
    N = g1.shape[0]

    def gcm(x):
        h = jax.nn.relu(_conv3x3_ref(x, params["gcm_w1"], 64) + params["gcm_b1"].reshape(1, 64, 1, 1))
        h = jax.nn.relu(_conv3x3_ref(h, params["gcm_w2"], 32) + params["gcm_b2"].reshape(1, 32, 1, 1))
        y = jnp.einsum("oc,nchw->nohw", params["gcm_w3"], h) + params["gcm_b3"].reshape(1, 3, 1, 1)
        return jax.nn.sigmoid(y)

    conf = gcm(unified_bev)
    ego_demand = 1.0 - conf[0:1]
    if N <= 1:
        return ego_demand, g1, g2, g3, jnp.float32(0.0)

    demand = jnp.broadcast_to(ego_demand, (N - 1,) + ego_demand.shape[1:])
    comb = jnp.concatenate(
        [demand, conf[1:], jnp.zeros((N - 1, 2) + ego_demand.shape[2:], jnp.float32)], axis=1)
    h = jax.nn.relu(_conv3x3_ref(comb, params["umm_w1"], 32) + params["umm_b1"].reshape(1, 32, 1, 1))
    h = jax.nn.relu(_conv3x3_ref(h, params["umm_w2"], 16) + params["umm_b2"].reshape(1, 16, 1, 1))
    util = jnp.einsum("oc,nchw->nohw", params["umm_w3"], h) + params["umm_b3"].reshape(1, 3, 1, 1)

    wc = jnp.asarray((ALPHA * GRANULARITY_COSTS).reshape(1, 3, 1, 1))
    net = util - wc
    mx = jnp.max(net, axis=1, keepdims=True)
    one_hot = jax.nn.one_hot(jnp.argmax(net, axis=1), 3, axis=1, dtype=jnp.float32)
    sparse = one_hot * (mx > THRE).astype(jnp.float32)
    s1 = jnp.concatenate([g1[0:1], g1[1:] * sparse[:, 0:1]], axis=0)
    s2 = jnp.concatenate([g2[0:1], g2[1:] * sparse[:, 1:2]], axis=0)
    s3 = jnp.concatenate([g3[0:1], g3[1:] * sparse[:, 2:3]], axis=0)
    return ego_demand, s1, s2, s3, jnp.sum(sparse)


# -----------------------------------------------------------------------------
if __name__ == "__main__":
    key = jax.random.PRNGKey(0)
    pkey, k1, k2, k3, k4 = jax.random.split(key, 5)
    params = init_params(pkey)

    N, H, W = 2, 16, 16          # 2 agents: ego + 1 collaborator
    c_vox, c_feat, c_det = 8, 256, 8
    g1 = jax.random.normal(k1, (N, c_vox, H, W), jnp.float32)
    g2 = jax.random.normal(k2, (N, c_feat, H, W), jnp.float32)
    g3 = jax.random.normal(k3, (N, c_det, H, W), jnp.float32)
    unified_bev = jax.random.normal(k4, (N, 256, H, W), jnp.float32)

    fwd = jax.jit(advanced_communication_forward)
    outs = fwd(params, g1, g2, g3, unified_bev)
    jax.block_until_ready(outs)

    # Validate the roll+mask conv and the full pipeline against a lax.conv reference.
    refs = _reference_forward(params, g1, g2, g3, unified_bev)
    names = ["ego_demand", "sparse_g1", "sparse_g2", "sparse_g3", "commu_volume"]
    for name, a, b in zip(names, outs, refs):
        if not np.allclose(np.asarray(a), np.asarray(b), rtol=3e-3, atol=3e-3):
            raise AssertionError(f"mismatch in {name}")

    print("KERNEL_OK")
</pallas_src>

<mosaic_0001>
module attributes {stable_mosaic.version = 11 : i64} {
  func.func @gcm_kernel(%arg0: i32, %arg1: memref<1x256x256xf32, #tpu.memory_space<vmem>>, %arg2: memref<9x256xf32, #tpu.memory_space<vmem>>, %arg3: memref<576x256xf32, #tpu.memory_space<vmem>>, %arg4: memref<64x1xf32, #tpu.memory_space<vmem>>, %arg5: memref<288x64xf32, #tpu.memory_space<vmem>>, %arg6: memref<32x1xf32, #tpu.memory_space<vmem>>, %arg7: memref<8x32xf32, #tpu.memory_space<vmem>>, %arg8: memref<8x1xf32, #tpu.memory_space<vmem>>, %arg9: memref<1x8x256xf32, #tpu.memory_space<vmem>>) attributes {dimension_semantics = [#tpu.dimension_semantics<parallel>], iteration_bounds = array<i64: 2>, scalar_prefetch = 0 : i64, scratch_operands = 0 : i64, tpu.core_type = #tpu.core_type<tc>, window_params = [{transform_indices = @transform_0, window_bounds = array<i64: 1, 256, 256>}, {pipeline_mode = #tpu.pipeline_mode<synchronous>, transform_indices = @transform_1, window_bounds = array<i64: 9, 256>}, {pipeline_mode = #tpu.pipeline_mode<synchronous>, transform_indices = @transform_2, window_bounds = array<i64: 576, 256>}, {pipeline_mode = #tpu.pipeline_mode<synchronous>, transform_indices = @transform_3, window_bounds = array<i64: 64, 1>}, {pipeline_mode = #tpu.pipeline_mode<synchronous>, transform_indices = @transform_4, window_bounds = array<i64: 288, 64>}, {pipeline_mode = #tpu.pipeline_mode<synchronous>, transform_indices = @transform_5, window_bounds = array<i64: 32, 1>}, {pipeline_mode = #tpu.pipeline_mode<synchronous>, transform_indices = @transform_6, window_bounds = array<i64: 8, 32>}, {pipeline_mode = #tpu.pipeline_mode<synchronous>, transform_indices = @transform_7, window_bounds = array<i64: 8, 1>}, {transform_indices = @transform_8, window_bounds = array<i64: 1, 8, 256>}]} {
    %c0 = arith.constant 0 : index
    %c0_0 = arith.constant 0 : index
    %0 = vector.load %arg2[%c0, %c0_0] : memref<9x256xf32, #tpu.memory_space<vmem>>, vector<9x256xf32>
    %c0_1 = arith.constant 0 : index
    %c0_2 = arith.constant 0 : index
    %c0_3 = arith.constant 0 : index
    %1 = vector.load %arg1[%c0_1, %c0_2, %c0_3] : memref<1x256x256xf32, #tpu.memory_space<vmem>>, vector<1x256x256xf32>
    %2 = vector.shape_cast %1 : vector<1x256x256xf32> to vector<256x256xf32>
    %c0_4 = arith.constant 0 : index
    %c0_5 = arith.constant 0 : index
    %3 = vector.load %arg3[%c0_4, %c0_5] : memref<576x256xf32, #tpu.memory_space<vmem>>, vector<576x256xf32>
    %cst = arith.constant dense<0.000000e+00> : vector<576x256xf32>
    %4 = tpu.matmul %3, %2, %cst {dimension_numbers = #tpu.dot_dimension_numbers<[1], [0], [0], [1], [0, 0, 1, 1], [], []>} : vector<576x256xf32>, vector<256x256xf32>, vector<576x256xf32> -> vector<576x256xf32>
    %cst_6 = arith.constant 0.000000e+00 : f32
    %5 = vector.broadcast %cst_6 : f32 to vector<64x256xf32>
    %6 = vector.extract_strided_slice %4 {offsets = [0, 0], sizes = [64, 256], strides = [1, 1]} : vector<576x256xf32> to vector<64x256xf32>
    %c17_i32 = arith.constant 17 : i32
    %7 = tpu.dynamic_rotate %6 by %c17_i32 dim 1 : vector<64x256xf32>, i32 -> vector<64x256xf32>
    %8 = vector.extract_strided_slice %0 {offsets = [0, 0], sizes = [1, 256], strides = [1, 1]} : vector<9x256xf32> to vector<1x256xf32>
    %9 = vector.broadcast %8 : vector<1x256xf32> to vector<64x256xf32>
    %10 = arith.mulf %7, %9 : vector<64x256xf32>
    %11 = arith.addf %5, %10 : vector<64x256xf32>
    %12 = vector.extract_strided_slice %4 {offsets = [64, 0], sizes = [64, 256], strides = [1, 1]} : vector<576x256xf32> to vector<64x256xf32>
    %c16_i32 = arith.constant 16 : i32
    %13 = tpu.dynamic_rotate %12 by %c16_i32 dim 1 : vector<64x256xf32>, i32 -> vector<64x256xf32>
    %14 = vector.extract_strided_slice %0 {offsets = [1, 0], sizes = [1, 256], strides = [1, 1]} : vector<9x256xf32> to vector<1x256xf32>
    %15 = vector.broadcast %14 : vector<1x256xf32> to vector<64x256xf32>
    %16 = arith.mulf %13, %15 : vector<64x256xf32>
    %17 = arith.addf %11, %16 : vector<64x256xf32>
    %18 = vector.extract_strided_slice %4 {offsets = [128, 0], sizes = [64, 256], strides = [1, 1]} : vector<576x256xf32> to vector<64x256xf32>
    %c15_i32 = arith.constant 15 : i32
    %19 = tpu.dynamic_rotate %18 by %c15_i32 dim 1 : vector<64x256xf32>, i32 -> vector<64x256xf32>
    %20 = vector.extract_strided_slice %0 {offsets = [2, 0], sizes = [1, 256], strides = [1, 1]} : vector<9x256xf32> to vector<1x256xf32>
    %21 = vector.broadcast %20 : vector<1x256xf32> to vector<64x256xf32>
    %22 = arith.mulf %19, %21 : vector<64x256xf32>
    %23 = arith.addf %17, %22 : vector<64x256xf32>
    %24 = vector.extract_strided_slice %4 {offsets = [192, 0], sizes = [64, 256], strides = [1, 1]} : vector<576x256xf32> to vector<64x256xf32>
    %c1_i32 = arith.constant 1 : i32
    %25 = tpu.dynamic_rotate %24 by %c1_i32 dim 1 : vector<64x256xf32>, i32 -> vector<64x256xf32>
    %26 = vector.extract_strided_slice %0 {offsets = [3, 0], sizes = [1, 256], strides = [1, 1]} : vector<9x256xf32> to vector<1x256xf32>
    %27 = vector.broadcast %26 : vector<1x256xf32> to vector<64x256xf32>
    %28 = arith.mulf %25, %27 : vector<64x256xf32>
    %29 = arith.addf %23, %28 : vector<64x256xf32>
    %30 = vector.extract_strided_slice %4 {offsets = [256, 0], sizes = [64, 256], strides = [1, 1]} : vector<576x256xf32> to vector<64x256xf32>
    %31 = arith.addf %29, %30 : vector<64x256xf32>
    %32 = vector.extract_strided_slice %4 {offsets = [320, 0], sizes = [64, 256], strides = [1, 1]} : vector<576x256xf32> to vector<64x256xf32>
    %c255_i32 = arith.constant 255 : i32
    %33 = tpu.dynamic_rotate %32 by %c255_i32 dim 1 : vector<64x256xf32>, i32 -> vector<64x256xf32>
    %34 = vector.extract_strided_slice %0 {offsets = [5, 0], sizes = [1, 256], strides = [1, 1]} : vector<9x256xf32> to vector<1x256xf32>
    %35 = vector.broadcast %34 : vector<1x256xf32> to vector<64x256xf32>
    %36 = arith.mulf %33, %35 : vector<64x256xf32>
    %37 = arith.addf %31, %36 : vector<64x256xf32>
    %38 = vector.extract_strided_slice %4 {offsets = [384, 0], sizes = [64, 256], strides = [1, 1]} : vector<576x256xf32> to vector<64x256xf32>
    %c241_i32 = arith.constant 241 : i32
    %39 = tpu.dynamic_rotate %38 by %c241_i32 dim 1 : vector<64x256xf32>, i32 -> vector<64x256xf32>
    %40 = vector.extract_strided_slice %0 {offsets = [6, 0], sizes = [1, 256], strides = [1, 1]} : vector<9x256xf32> to vector<1x256xf32>
    %41 = vector.broadcast %40 : vector<1x256xf32> to vector<64x256xf32>
    %42 = arith.mulf %39, %41 : vector<64x256xf32>
    %43 = arith.addf %37, %42 : vector<64x256xf32>
    %44 = vector.extract_strided_slice %4 {offsets = [448, 0], sizes = [64, 256], strides = [1, 1]} : vector<576x256xf32> to vector<64x256xf32>
    %c240_i32 = arith.constant 240 : i32
    %45 = tpu.dynamic_rotate %44 by %c240_i32 dim 1 : vector<64x256xf32>, i32 -> vector<64x256xf32>
    %46 = vector.extract_strided_slice %0 {offsets = [7, 0], sizes = [1, 256], strides = [1, 1]} : vector<9x256xf32> to vector<1x256xf32>
    %47 = vector.broadcast %46 : vector<1x256xf32> to vector<64x256xf32>
    %48 = arith.mulf %45, %47 : vector<64x256xf32>
    %49 = arith.addf %43, %48 : vector<64x256xf32>
    %50 = vector.extract_strided_slice %4 {offsets = [512, 0], sizes = [64, 256], strides = [1, 1]} : vector<576x256xf32> to vector<64x256xf32>
    %c239_i32 = arith.constant 239 : i32
    %51 = tpu.dynamic_rotate %50 by %c239_i32 dim 1 : vector<64x256xf32>, i32 -> vector<64x256xf32>
    %52 = vector.extract_strided_slice %0 {offsets = [8, 0], sizes = [1, 256], strides = [1, 1]} : vector<9x256xf32> to vector<1x256xf32>
    %53 = vector.broadcast %52 : vector<1x256xf32> to vector<64x256xf32>
    %54 = arith.mulf %51, %53 : vector<64x256xf32>
    %55 = arith.addf %49, %54 : vector<64x256xf32>
    %c0_7 = arith.constant 0 : index
    %c0_8 = arith.constant 0 : index
    %56 = vector.load %arg4[%c0_7, %c0_8] : memref<64x1xf32, #tpu.memory_space<vmem>>, vector<64x1xf32>
    %57 = vector.broadcast %56 : vector<64x1xf32> to vector<64x256xf32>
    %58 = arith.addf %55, %57 : vector<64x256xf32>
    %cst_9 = arith.constant 0.000000e+00 : f32
    %59 = vector.broadcast %cst_9 : f32 to vector<64x256xf32>
    %60 = arith.maximumf %58, %59 : vector<64x256xf32>
    %c0_10 = arith.constant 0 : index
    %c0_11 = arith.constant 0 : index
    %61 = vector.load %arg5[%c0_10, %c0_11] : memref<288x64xf32, #tpu.memory_space<vmem>>, vector<288x64xf32>
    %cst_12 = arith.constant dense<0.000000e+00> : vector<288x256xf32>
    %62 = tpu.matmul %61, %60, %cst_12 {dimension_numbers = #tpu.dot_dimension_numbers<[1], [0], [0], [1], [0, 0, 1, 1], [], []>} : vector<288x64xf32>, vector<64x256xf32>, vector<288x256xf32> -> vector<288x256xf32>
    %cst_13 = arith.constant 0.000000e+00 : f32
    %63 = vector.broadcast %cst_13 : f32 to vector<32x256xf32>
    %64 = vector.extract_strided_slice %62 {offsets = [0, 0], sizes = [32, 256], strides = [1, 1]} : vector<288x256xf32> to vector<32x256xf32>
    %c17_i32_14 = arith.constant 17 : i32
    %65 = tpu.dynamic_rotate %64 by %c17_i32_14 dim 1 : vector<32x256xf32>, i32 -> vector<32x256xf32>
    %66 = vector.extract_strided_slice %0 {offsets = [0, 0], sizes = [1, 256], strides = [1, 1]} : vector<9x256xf32> to vector<1x256xf32>
    %67 = vector.broadcast %66 : vector<1x256xf32> to vector<32x256xf32>
    %68 = arith.mulf %65, %67 : vector<32x256xf32>
    %69 = arith.addf %63, %68 : vector<32x256xf32>
    %70 = vector.extract_strided_slice %62 {offsets = [32, 0], sizes = [32, 256], strides = [1, 1]} : vector<288x256xf32> to vector<32x256xf32>
    %c16_i32_15 = arith.constant 16 : i32
    %71 = tpu.dynamic_rotate %70 by %c16_i32_15 dim 1 : vector<32x256xf32>, i32 -> vector<32x256xf32>
    %72 = vector.extract_strided_slice %0 {offsets = [1, 0], sizes = [1, 256], strides = [1, 1]} : vector<9x256xf32> to vector<1x256xf32>
    %73 = vector.broadcast %72 : vector<1x256xf32> to vector<32x256xf32>
    %74 = arith.mulf %71, %73 : vector<32x256xf32>
    %75 = arith.addf %69, %74 : vector<32x256xf32>
    %76 = vector.extract_strided_slice %62 {offsets = [64, 0], sizes = [32, 256], strides = [1, 1]} : vector<288x256xf32> to vector<32x256xf32>
    %c15_i32_16 = arith.constant 15 : i32
    %77 = tpu.dynamic_rotate %76 by %c15_i32_16 dim 1 : vector<32x256xf32>, i32 -> vector<32x256xf32>
    %78 = vector.extract_strided_slice %0 {offsets = [2, 0], sizes = [1, 256], strides = [1, 1]} : vector<9x256xf32> to vector<1x256xf32>
    %79 = vector.broadcast %78 : vector<1x256xf32> to vector<32x256xf32>
    %80 = arith.mulf %77, %79 : vector<32x256xf32>
    %81 = arith.addf %75, %80 : vector<32x256xf32>
    %82 = vector.extract_strided_slice %62 {offsets = [96, 0], sizes = [32, 256], strides = [1, 1]} : vector<288x256xf32> to vector<32x256xf32>
    %c1_i32_17 = arith.constant 1 : i32
    %83 = tpu.dynamic_rotate %82 by %c1_i32_17 dim 1 : vector<32x256xf32>, i32 -> vector<32x256xf32>
    %84 = vector.extract_strided_slice %0 {offsets = [3, 0], sizes = [1, 256], strides = [1, 1]} : vector<9x256xf32> to vector<1x256xf32>
    %85 = vector.broadcast %84 : vector<1x256xf32> to vector<32x256xf32>
    %86 = arith.mulf %83, %85 : vector<32x256xf32>
    %87 = arith.addf %81, %86 : vector<32x256xf32>
    %88 = vector.extract_strided_slice %62 {offsets = [128, 0], sizes = [32, 256], strides = [1, 1]} : vector<288x256xf32> to vector<32x256xf32>
    %89 = arith.addf %87, %88 : vector<32x256xf32>
    %90 = vector.extract_strided_slice %62 {offsets = [160, 0], sizes = [32, 256], strides = [1, 1]} : vector<288x256xf32> to vector<32x256xf32>
    %c255_i32_18 = arith.constant 255 : i32
    %91 = tpu.dynamic_rotate %90 by %c255_i32_18 dim 1 : vector<32x256xf32>, i32 -> vector<32x256xf32>
    %92 = vector.extract_strided_slice %0 {offsets = [5, 0], sizes = [1, 256], strides = [1, 1]} : vector<9x256xf32> to vector<1x256xf32>
    %93 = vector.broadcast %92 : vector<1x256xf32> to vector<32x256xf32>
    %94 = arith.mulf %91, %93 : vector<32x256xf32>
    %95 = arith.addf %89, %94 : vector<32x256xf32>
    %96 = vector.extract_strided_slice %62 {offsets = [192, 0], sizes = [32, 256], strides = [1, 1]} : vector<288x256xf32> to vector<32x256xf32>
    %c241_i32_19 = arith.constant 241 : i32
    %97 = tpu.dynamic_rotate %96 by %c241_i32_19 dim 1 : vector<32x256xf32>, i32 -> vector<32x256xf32>
    %98 = vector.extract_strided_slice %0 {offsets = [6, 0], sizes = [1, 256], strides = [1, 1]} : vector<9x256xf32> to vector<1x256xf32>
    %99 = vector.broadcast %98 : vector<1x256xf32> to vector<32x256xf32>
    %100 = arith.mulf %97, %99 : vector<32x256xf32>
    %101 = arith.addf %95, %100 : vector<32x256xf32>
    %102 = vector.extract_strided_slice %62 {offsets = [224, 0], sizes = [32, 256], strides = [1, 1]} : vector<288x256xf32> to vector<32x256xf32>
    %c240_i32_20 = arith.constant 240 : i32
    %103 = tpu.dynamic_rotate %102 by %c240_i32_20 dim 1 : vector<32x256xf32>, i32 -> vector<32x256xf32>
    %104 = vector.extract_strided_slice %0 {offsets = [7, 0], sizes = [1, 256], strides = [1, 1]} : vector<9x256xf32> to vector<1x256xf32>
    %105 = vector.broadcast %104 : vector<1x256xf32> to vector<32x256xf32>
    %106 = arith.mulf %103, %105 : vector<32x256xf32>
    %107 = arith.addf %101, %106 : vector<32x256xf32>
    %108 = vector.extract_strided_slice %62 {offsets = [256, 0], sizes = [32, 256], strides = [1, 1]} : vector<288x256xf32> to vector<32x256xf32>
    %c239_i32_21 = arith.constant 239 : i32
    %109 = tpu.dynamic_rotate %108 by %c239_i32_21 dim 1 : vector<32x256xf32>, i32 -> vector<32x256xf32>
    %110 = vector.extract_strided_slice %0 {offsets = [8, 0], sizes = [1, 256], strides = [1, 1]} : vector<9x256xf32> to vector<1x256xf32>
    %111 = vector.broadcast %110 : vector<1x256xf32> to vector<32x256xf32>
    %112 = arith.mulf %109, %111 : vector<32x256xf32>
    %113 = arith.addf %107, %112 : vector<32x256xf32>
    %c0_22 = arith.constant 0 : index
    %c0_23 = arith.constant 0 : index
    %114 = vector.load %arg6[%c0_22, %c0_23] : memref<32x1xf32, #tpu.memory_space<vmem>>, vector<32x1xf32>
    %115 = vector.broadcast %114 : vector<32x1xf32> to vector<32x256xf32>
    %116 = arith.addf %113, %115 : vector<32x256xf32>
    %cst_24 = arith.constant 0.000000e+00 : f32
    %117 = vector.broadcast %cst_24 : f32 to vector<32x256xf32>
    %118 = arith.maximumf %116, %117 : vector<32x256xf32>
    %c0_25 = arith.constant 0 : index
    %c0_26 = arith.constant 0 : index
    %119 = vector.load %arg7[%c0_25, %c0_26] : memref<8x32xf32, #tpu.memory_space<vmem>>, vector<8x32xf32>
    %cst_27 = arith.constant dense<0.000000e+00> : vector<8x256xf32>
    %120 = tpu.matmul %119, %118, %cst_27 {dimension_numbers = #tpu.dot_dimension_numbers<[1], [0], [0], [1], [0, 0, 1, 1], [], []>} : vector<8x32xf32>, vector<32x256xf32>, vector<8x256xf32> -> vector<8x256xf32>
    %c0_28 = arith.constant 0 : index
    %c0_29 = arith.constant 0 : index
    %121 = vector.load %arg8[%c0_28, %c0_29] : memref<8x1xf32, #tpu.memory_space<vmem>>, vector<8x1xf32>
    %122 = vector.broadcast %121 : vector<8x1xf32> to vector<8x256xf32>
    %123 = arith.addf %120, %122 : vector<8x256xf32>
    %124 = tpu.iota {dimensions = array<i32: 0>} : vector<8x256xi32>
    %c3_i32 = arith.constant 3 : i32
    %125 = vector.broadcast %c3_i32 : i32 to vector<8x256xi32>
    %126 = arith.cmpi slt, %124, %125 : vector<8x256xi32>
    %127 = arith.extui %126 : vector<8x256xi1> to vector<8x256xi32>
    %128 = arith.sitofp %127 : vector<8x256xi32> to vector<8x256xf32>
    %129 = arith.negf %123 : vector<8x256xf32>
    %130 = math.exp %129 : vector<8x256xf32>
    %cst_30 = arith.constant 1.000000e+00 : f32
    %131 = vector.broadcast %cst_30 : f32 to vector<8x256xf32>
    %132 = arith.addf %131, %130 : vector<8x256xf32>
    %133 = arith.divf %131, %132 : vector<8x256xf32>
    %134 = arith.mulf %133, %128 : vector<8x256xf32>
    %c0_31 = arith.constant 0 : index
    %c0_32 = arith.constant 0 : index
    %c0_33 = arith.constant 0 : index
    %135 = vector.load %arg9[%c0_31, %c0_32, %c0_33] : memref<1x8x256xf32, #tpu.memory_space<vmem>>, vector<1x8x256xf32>
    %136 = vector.shape_cast %135 : vector<1x8x256xf32> to vector<8x256xf32>
    %137 = vector.shape_cast %134 : vector<8x256xf32> to vector<1x8x256xf32>
    tpu.vector_store %arg9[%c0_31, %c0_32, %c0_33], %137 {strides = array<i32>} : memref<1x8x256xf32, #tpu.memory_space<vmem>>, vector<1x8x256xf32>,
    return
  }
  func.func @transform_0(%arg0: i32) -> (i32, i32, i32) {
    %c0_i32 = arith.constant 0 : i32
    %c0_i32_0 = arith.constant 0 : i32
    %c0_i32_1 = arith.constant 0 : i32
    return %arg0, %c0_i32, %c0_i32_0 : i32, i32, i32
  }
  func.func @transform_1(%arg0: i32) -> (i32, i32) {
    %c0_i32 = arith.constant 0 : i32
    %c0_i32_0 = arith.constant 0 : i32
    %c0_i32_1 = arith.constant 0 : i32
    return %c0_i32, %c0_i32_0 : i32, i32
  }
  func.func @transform_2(%arg0: i32) -> (i32, i32) {
    %c0_i32 = arith.constant 0 : i32
    %c0_i32_0 = arith.constant 0 : i32
    %c0_i32_1 = arith.constant 0 : i32
    return %c0_i32, %c0_i32_0 : i32, i32
  }
  func.func @transform_3(%arg0: i32) -> (i32, i32) {
    %c0_i32 = arith.constant 0 : i32
    %c0_i32_0 = arith.constant 0 : i32
    %c0_i32_1 = arith.constant 0 : i32
    return %c0_i32, %c0_i32_0 : i32, i32
  }
  func.func @transform_4(%arg0: i32) -> (i32, i32) {
    %c0_i32 = arith.constant 0 : i32
    %c0_i32_0 = arith.constant 0 : i32
    %c0_i32_1 = arith.constant 0 : i32
    return %c0_i32, %c0_i32_0 : i32, i32
  }
  func.func @transform_5(%arg0: i32) -> (i32, i32) {
    %c0_i32 = arith.constant 0 : i32
    %c0_i32_0 = arith.constant 0 : i32
    %c0_i32_1 = arith.constant 0 : i32
    return %c0_i32, %c0_i32_0 : i32, i32
  }
  func.func @transform_6(%arg0: i32) -> (i32, i32) {
    %c0_i32 = arith.constant 0 : i32
    %c0_i32_0 = arith.constant 0 : i32
    %c0_i32_1 = arith.constant 0 : i32
    return %c0_i32, %c0_i32_0 : i32, i32
  }
  func.func @transform_7(%arg0: i32) -> (i32, i32) {
    %c0_i32 = arith.constant 0 : i32
    %c0_i32_0 = arith.constant 0 : i32
    %c0_i32_1 = arith.constant 0 : i32
    return %c0_i32, %c0_i32_0 : i32, i32
  }
  func.func @transform_8(%arg0: i32) -> (i32, i32, i32) {
    %c0_i32 = arith.constant 0 : i32
    %c0_i32_0 = arith.constant 0 : i32
    %c0_i32_1 = arith.constant 0 : i32
    return %arg0, %c0_i32, %c0_i32_0 : i32, i32, i32
  }
}

module attributes {stable_mosaic.version = 11 : i64} {
  func.func @comm_kernel(%arg0: i32, %arg1: memref<1x8x256xf32, #tpu.memory_space<vmem>>, %arg2: memref<1x8x256xf32, #tpu.memory_space<vmem>>, %arg3: memref<1x8x256xf32, #tpu.memory_space<vmem>>, %arg4: memref<1x256x256xf32, #tpu.memory_space<vmem>>, %arg5: memref<1x8x256xf32, #tpu.memory_space<vmem>>, %arg6: memref<9x256xf32, #tpu.memory_space<vmem>>, %arg7: memref<288x8xf32, #tpu.memory_space<vmem>>, %arg8: memref<288x8xf32, #tpu.memory_space<vmem>>, %arg9: memref<288x1xf32, #tpu.memory_space<vmem>>, %arg10: memref<32x1xf32, #tpu.memory_space<vmem>>, %arg11: memref<144x32xf32, #tpu.memory_space<vmem>>, %arg12: memref<16x1xf32, #tpu.memory_space<vmem>>, %arg13: memref<8x16xf32, #tpu.memory_space<vmem>>, %arg14: memref<8x1xf32, #tpu.memory_space<vmem>>, %arg15: memref<8x1xf32, #tpu.memory_space<vmem>>, %arg16: memref<1x8x256xf32, #tpu.memory_space<vmem>>, %arg17: memref<1x8x256xf32, #tpu.memory_space<vmem>>, %arg18: memref<1x256x256xf32, #tpu.memory_space<vmem>>, %arg19: memref<1x8x256xf32, #tpu.memory_space<vmem>>) attributes {dimension_semantics = [#tpu.dimension_semantics<parallel>], iteration_bounds = array<i64: 1>, scalar_prefetch = 0 : i64, scratch_operands = 0 : i64, tpu.core_type = #tpu.core_type<tc>, window_params = [{transform_indices = @transform_0, window_bounds = array<i64: 1, 8, 256>}, {transform_indices = @transform_1, window_bounds = array<i64: 1, 8, 256>}, {transform_indices = @transform_2, window_bounds = array<i64: 1, 8, 256>}, {transform_indices = @transform_3, window_bounds = array<i64: 1, 256, 256>}, {transform_indices = @transform_4, window_bounds = array<i64: 1, 8, 256>}, {pipeline_mode = #tpu.pipeline_mode<synchronous>, transform_indices = @transform_5, window_bounds = array<i64: 9, 256>}, {pipeline_mode = #tpu.pipeline_mode<synchronous>, transform_indices = @transform_6, window_bounds = array<i64: 288, 8>}, {pipeline_mode = #tpu.pipeline_mode<synchronous>, transform_indices = @transform_7, window_bounds = array<i64: 288, 8>}, {pipeline_mode = #tpu.pipeline_mode<synchronous>, transform_indices = @transform_8, window_bounds = array<i64: 288, 1>}, {pipeline_mode = #tpu.pipeline_mode<synchronous>, transform_indices = @transform_9, window_bounds = array<i64: 32, 1>}, {pipeline_mode = #tpu.pipeline_mode<synchronous>, transform_indices = @transform_10, window_bounds = array<i64: 144, 32>}, {pipeline_mode = #tpu.pipeline_mode<synchronous>, transform_indices = @transform_11, window_bounds = array<i64: 16, 1>}, {pipeline_mode = #tpu.pipeline_mode<synchronous>, transform_indices = @transform_12, window_bounds = array<i64: 8, 16>}, {pipeline_mode = #tpu.pipeline_mode<synchronous>, transform_indices = @transform_13, window_bounds = array<i64: 8, 1>}, {pipeline_mode = #tpu.pipeline_mode<synchronous>, transform_indices = @transform_14, window_bounds = array<i64: 8, 1>}, {transform_indices = @transform_15, window_bounds = array<i64: 1, 8, 256>}, {transform_indices = @transform_16, window_bounds = array<i64: 1, 8, 256>}, {transform_indices = @transform_17, window_bounds = array<i64: 1, 256, 256>}, {transform_indices = @transform_18, window_bounds = array<i64: 1, 8, 256>}]} {
    %c0 = arith.constant 0 : index
    %c0_0 = arith.constant 0 : index
    %0 = vector.load %arg6[%c0, %c0_0] : memref<9x256xf32, #tpu.memory_space<vmem>>, vector<9x256xf32>
    %c0_1 = arith.constant 0 : index
    %c0_2 = arith.constant 0 : index
    %c0_3 = arith.constant 0 : index
    %1 = vector.load %arg1[%c0_1, %c0_2, %c0_3] : memref<1x8x256xf32, #tpu.memory_space<vmem>>, vector<1x8x256xf32>
    %2 = vector.shape_cast %1 : vector<1x8x256xf32> to vector<8x256xf32>
    %c0_4 = arith.constant 0 : index
    %c0_5 = arith.constant 0 : index
    %c0_6 = arith.constant 0 : index
    %3 = vector.load %arg2[%c0_4, %c0_5, %c0_6] : memref<1x8x256xf32, #tpu.memory_space<vmem>>, vector<1x8x256xf32>
    %4 = vector.shape_cast %3 : vector<1x8x256xf32> to vector<8x256xf32>
    %c0_7 = arith.constant 0 : index
    %c0_8 = arith.constant 0 : index
    %5 = vector.load %arg9[%c0_7, %c0_8] : memref<288x1xf32, #tpu.memory_space<vmem>>, vector<288x1xf32>
    %c0_9 = arith.constant 0 : index
    %c0_10 = arith.constant 0 : index
    %6 = vector.load %arg7[%c0_9, %c0_10] : memref<288x8xf32, #tpu.memory_space<vmem>>, vector<288x8xf32>
    %cst = arith.constant dense<0.000000e+00> : vector<288x256xf32>
    %7 = tpu.matmul %6, %2, %cst {dimension_numbers = #tpu.dot_dimension_numbers<[1], [0], [0], [1], [0, 0, 1, 1], [], []>} : vector<288x8xf32>, vector<8x256xf32>, vector<288x256xf32> -> vector<288x256xf32>
    %8 = vector.broadcast %5 : vector<288x1xf32> to vector<288x256xf32>
    %9 = arith.subf %8, %7 : vector<288x256xf32>
    %c0_11 = arith.constant 0 : index
    %c0_12 = arith.constant 0 : index
    %10 = vector.load %arg8[%c0_11, %c0_12] : memref<288x8xf32, #tpu.memory_space<vmem>>, vector<288x8xf32>
    %cst_13 = arith.constant dense<0.000000e+00> : vector<288x256xf32>
    %11 = tpu.matmul %10, %4, %cst_13 {dimension_numbers = #tpu.dot_dimension_numbers<[1], [0], [0], [1], [0, 0, 1, 1], [], []>} : vector<288x8xf32>, vector<8x256xf32>, vector<288x256xf32> -> vector<288x256xf32>
    %12 = arith.addf %9, %11 : vector<288x256xf32>
    %cst_14 = arith.constant 0.000000e+00 : f32
    %13 = vector.broadcast %cst_14 : f32 to vector<32x256xf32>
    %14 = vector.extract_strided_slice %12 {offsets = [0, 0], sizes = [32, 256], strides = [1, 1]} : vector<288x256xf32> to vector<32x256xf32>
    %c17_i32 = arith.constant 17 : i32
    %15 = tpu.dynamic_rotate %14 by %c17_i32 dim 1 : vector<32x256xf32>, i32 -> vector<32x256xf32>
    %16 = vector.extract_strided_slice %0 {offsets = [0, 0], sizes = [1, 256], strides = [1, 1]} : vector<9x256xf32> to vector<1x256xf32>
    %17 = vector.broadcast %16 : vector<1x256xf32> to vector<32x256xf32>
    %18 = arith.mulf %15, %17 : vector<32x256xf32>
    %19 = arith.addf %13, %18 : vector<32x256xf32>
    %20 = vector.extract_strided_slice %12 {offsets = [32, 0], sizes = [32, 256], strides = [1, 1]} : vector<288x256xf32> to vector<32x256xf32>
    %c16_i32 = arith.constant 16 : i32
    %21 = tpu.dynamic_rotate %20 by %c16_i32 dim 1 : vector<32x256xf32>, i32 -> vector<32x256xf32>
    %22 = vector.extract_strided_slice %0 {offsets = [1, 0], sizes = [1, 256], strides = [1, 1]} : vector<9x256xf32> to vector<1x256xf32>
    %23 = vector.broadcast %22 : vector<1x256xf32> to vector<32x256xf32>
    %24 = arith.mulf %21, %23 : vector<32x256xf32>
    %25 = arith.addf %19, %24 : vector<32x256xf32>
    %26 = vector.extract_strided_slice %12 {offsets = [64, 0], sizes = [32, 256], strides = [1, 1]} : vector<288x256xf32> to vector<32x256xf32>
    %c15_i32 = arith.constant 15 : i32
    %27 = tpu.dynamic_rotate %26 by %c15_i32 dim 1 : vector<32x256xf32>, i32 -> vector<32x256xf32>
    %28 = vector.extract_strided_slice %0 {offsets = [2, 0], sizes = [1, 256], strides = [1, 1]} : vector<9x256xf32> to vector<1x256xf32>
    %29 = vector.broadcast %28 : vector<1x256xf32> to vector<32x256xf32>
    %30 = arith.mulf %27, %29 : vector<32x256xf32>
    %31 = arith.addf %25, %30 : vector<32x256xf32>
    %32 = vector.extract_strided_slice %12 {offsets = [96, 0], sizes = [32, 256], strides = [1, 1]} : vector<288x256xf32> to vector<32x256xf32>
    %c1_i32 = arith.constant 1 : i32
    %33 = tpu.dynamic_rotate %32 by %c1_i32 dim 1 : vector<32x256xf32>, i32 -> vector<32x256xf32>
    %34 = vector.extract_strided_slice %0 {offsets = [3, 0], sizes = [1, 256], strides = [1, 1]} : vector<9x256xf32> to vector<1x256xf32>
    %35 = vector.broadcast %34 : vector<1x256xf32> to vector<32x256xf32>
    %36 = arith.mulf %33, %35 : vector<32x256xf32>
    %37 = arith.addf %31, %36 : vector<32x256xf32>
    %38 = vector.extract_strided_slice %12 {offsets = [128, 0], sizes = [32, 256], strides = [1, 1]} : vector<288x256xf32> to vector<32x256xf32>
    %39 = arith.addf %37, %38 : vector<32x256xf32>
    %40 = vector.extract_strided_slice %12 {offsets = [160, 0], sizes = [32, 256], strides = [1, 1]} : vector<288x256xf32> to vector<32x256xf32>
    %c255_i32 = arith.constant 255 : i32
    %41 = tpu.dynamic_rotate %40 by %c255_i32 dim 1 : vector<32x256xf32>, i32 -> vector<32x256xf32>
    %42 = vector.extract_strided_slice %0 {offsets = [5, 0], sizes = [1, 256], strides = [1, 1]} : vector<9x256xf32> to vector<1x256xf32>
    %43 = vector.broadcast %42 : vector<1x256xf32> to vector<32x256xf32>
    %44 = arith.mulf %41, %43 : vector<32x256xf32>
    %45 = arith.addf %39, %44 : vector<32x256xf32>
    %46 = vector.extract_strided_slice %12 {offsets = [192, 0], sizes = [32, 256], strides = [1, 1]} : vector<288x256xf32> to vector<32x256xf32>
    %c241_i32 = arith.constant 241 : i32
    %47 = tpu.dynamic_rotate %46 by %c241_i32 dim 1 : vector<32x256xf32>, i32 -> vector<32x256xf32>
    %48 = vector.extract_strided_slice %0 {offsets = [6, 0], sizes = [1, 256], strides = [1, 1]} : vector<9x256xf32> to vector<1x256xf32>
    %49 = vector.broadcast %48 : vector<1x256xf32> to vector<32x256xf32>
    %50 = arith.mulf %47, %49 : vector<32x256xf32>
    %51 = arith.addf %45, %50 : vector<32x256xf32>
    %52 = vector.extract_strided_slice %12 {offsets = [224, 0], sizes = [32, 256], strides = [1, 1]} : vector<288x256xf32> to vector<32x256xf32>
    %c240_i32 = arith.constant 240 : i32
    %53 = tpu.dynamic_rotate %52 by %c240_i32 dim 1 : vector<32x256xf32>, i32 -> vector<32x256xf32>
    %54 = vector.extract_strided_slice %0 {offsets = [7, 0], sizes = [1, 256], strides = [1, 1]} : vector<9x256xf32> to vector<1x256xf32>
    %55 = vector.broadcast %54 : vector<1x256xf32> to vector<32x256xf32>
    %56 = arith.mulf %53, %55 : vector<32x256xf32>
    %57 = arith.addf %51, %56 : vector<32x256xf32>
    %58 = vector.extract_strided_slice %12 {offsets = [256, 0], sizes = [32, 256], strides = [1, 1]} : vector<288x256xf32> to vector<32x256xf32>
    %c239_i32 = arith.constant 239 : i32
    %59 = tpu.dynamic_rotate %58 by %c239_i32 dim 1 : vector<32x256xf32>, i32 -> vector<32x256xf32>
    %60 = vector.extract_strided_slice %0 {offsets = [8, 0], sizes = [1, 256], strides = [1, 1]} : vector<9x256xf32> to vector<1x256xf32>
    %61 = vector.broadcast %60 : vector<1x256xf32> to vector<32x256xf32>
    %62 = arith.mulf %59, %61 : vector<32x256xf32>
    %63 = arith.addf %57, %62 : vector<32x256xf32>
    %c0_15 = arith.constant 0 : index
    %c0_16 = arith.constant 0 : index
    %64 = vector.load %arg10[%c0_15, %c0_16] : memref<32x1xf32, #tpu.memory_space<vmem>>, vector<32x1xf32>
    %65 = vector.broadcast %64 : vector<32x1xf32> to vector<32x256xf32>
    %66 = arith.addf %63, %65 : vector<32x256xf32>
    %cst_17 = arith.constant 0.000000e+00 : f32
    %67 = vector.broadcast %cst_17 : f32 to vector<32x256xf32>
    %68 = arith.maximumf %66, %67 : vector<32x256xf32>
    %c0_18 = arith.constant 0 : index
    %c0_19 = arith.constant 0 : index
    %69 = vector.load %arg11[%c0_18, %c0_19] : memref<144x32xf32, #tpu.memory_space<vmem>>, vector<144x32xf32>
    %cst_20 = arith.constant dense<0.000000e+00> : vector<144x256xf32>
    %70 = tpu.matmul %69, %68, %cst_20 {dimension_numbers = #tpu.dot_dimension_numbers<[1], [0], [0], [1], [0, 0, 1, 1], [], []>} : vector<144x32xf32>, vector<32x256xf32>, vector<144x256xf32> -> vector<144x256xf32>
    %cst_21 = arith.constant 0.000000e+00 : f32
    %71 = vector.broadcast %cst_21 : f32 to vector<16x256xf32>
    %72 = vector.extract_strided_slice %70 {offsets = [0, 0], sizes = [16, 256], strides = [1, 1]} : vector<144x256xf32> to vector<16x256xf32>
    %c17_i32_22 = arith.constant 17 : i32
    %73 = tpu.dynamic_rotate %72 by %c17_i32_22 dim 1 : vector<16x256xf32>, i32 -> vector<16x256xf32>
    %74 = vector.extract_strided_slice %0 {offsets = [0, 0], sizes = [1, 256], strides = [1, 1]} : vector<9x256xf32> to vector<1x256xf32>
    %75 = vector.broadcast %74 : vector<1x256xf32> to vector<16x256xf32>
    %76 = arith.mulf %73, %75 : vector<16x256xf32>
    %77 = arith.addf %71, %76 : vector<16x256xf32>
    %78 = vector.extract_strided_slice %70 {offsets = [16, 0], sizes = [16, 256], strides = [1, 1]} : vector<144x256xf32> to vector<16x256xf32>
    %c16_i32_23 = arith.constant 16 : i32
    %79 = tpu.dynamic_rotate %78 by %c16_i32_23 dim 1 : vector<16x256xf32>, i32 -> vector<16x256xf32>
    %80 = vector.extract_strided_slice %0 {offsets = [1, 0], sizes = [1, 256], strides = [1, 1]} : vector<9x256xf32> to vector<1x256xf32>
    %81 = vector.broadcast %80 : vector<1x256xf32> to vector<16x256xf32>
    %82 = arith.mulf %79, %81 : vector<16x256xf32>
    %83 = arith.addf %77, %82 : vector<16x256xf32>
    %84 = vector.extract_strided_slice %70 {offsets = [32, 0], sizes = [16, 256], strides = [1, 1]} : vector<144x256xf32> to vector<16x256xf32>
    %c15_i32_24 = arith.constant 15 : i32
    %85 = tpu.dynamic_rotate %84 by %c15_i32_24 dim 1 : vector<16x256xf32>, i32 -> vector<16x256xf32>
    %86 = vector.extract_strided_slice %0 {offsets = [2, 0], sizes = [1, 256], strides = [1, 1]} : vector<9x256xf32> to vector<1x256xf32>
    %87 = vector.broadcast %86 : vector<1x256xf32> to vector<16x256xf32>
    %88 = arith.mulf %85, %87 : vector<16x256xf32>
    %89 = arith.addf %83, %88 : vector<16x256xf32>
    %90 = vector.extract_strided_slice %70 {offsets = [48, 0], sizes = [16, 256], strides = [1, 1]} : vector<144x256xf32> to vector<16x256xf32>
    %c1_i32_25 = arith.constant 1 : i32
    %91 = tpu.dynamic_rotate %90 by %c1_i32_25 dim 1 : vector<16x256xf32>, i32 -> vector<16x256xf32>
    %92 = vector.extract_strided_slice %0 {offsets = [3, 0], sizes = [1, 256], strides = [1, 1]} : vector<9x256xf32> to vector<1x256xf32>
    %93 = vector.broadcast %92 : vector<1x256xf32> to vector<16x256xf32>
    %94 = arith.mulf %91, %93 : vector<16x256xf32>
    %95 = arith.addf %89, %94 : vector<16x256xf32>
    %96 = vector.extract_strided_slice %70 {offsets = [64, 0], sizes = [16, 256], strides = [1, 1]} : vector<144x256xf32> to vector<16x256xf32>
    %97 = arith.addf %95, %96 : vector<16x256xf32>
    %98 = vector.extract_strided_slice %70 {offsets = [80, 0], sizes = [16, 256], strides = [1, 1]} : vector<144x256xf32> to vector<16x256xf32>
    %c255_i32_26 = arith.constant 255 : i32
    %99 = tpu.dynamic_rotate %98 by %c255_i32_26 dim 1 : vector<16x256xf32>, i32 -> vector<16x256xf32>
    %100 = vector.extract_strided_slice %0 {offsets = [5, 0], sizes = [1, 256], strides = [1, 1]} : vector<9x256xf32> to vector<1x256xf32>
    %101 = vector.broadcast %100 : vector<1x256xf32> to vector<16x256xf32>
    %102 = arith.mulf %99, %101 : vector<16x256xf32>
    %103 = arith.addf %97, %102 : vector<16x256xf32>
    %104 = vector.extract_strided_slice %70 {offsets = [96, 0], sizes = [16, 256], strides = [1, 1]} : vector<144x256xf32> to vector<16x256xf32>
    %c241_i32_27 = arith.constant 241 : i32
    %105 = tpu.dynamic_rotate %104 by %c241_i32_27 dim 1 : vector<16x256xf32>, i32 -> vector<16x256xf32>
    %106 = vector.extract_strided_slice %0 {offsets = [6, 0], sizes = [1, 256], strides = [1, 1]} : vector<9x256xf32> to vector<1x256xf32>
    %107 = vector.broadcast %106 : vector<1x256xf32> to vector<16x256xf32>
    %108 = arith.mulf %105, %107 : vector<16x256xf32>
    %109 = arith.addf %103, %108 : vector<16x256xf32>
    %110 = vector.extract_strided_slice %70 {offsets = [112, 0], sizes = [16, 256], strides = [1, 1]} : vector<144x256xf32> to vector<16x256xf32>
    %c240_i32_28 = arith.constant 240 : i32
    %111 = tpu.dynamic_rotate %110 by %c240_i32_28 dim 1 : vector<16x256xf32>, i32 -> vector<16x256xf32>
    %112 = vector.extract_strided_slice %0 {offsets = [7, 0], sizes = [1, 256], strides = [1, 1]} : vector<9x256xf32> to vector<1x256xf32>
    %113 = vector.broadcast %112 : vector<1x256xf32> to vector<16x256xf32>
    %114 = arith.mulf %111, %113 : vector<16x256xf32>
    %115 = arith.addf %109, %114 : vector<16x256xf32>
    %116 = vector.extract_strided_slice %70 {offsets = [128, 0], sizes = [16, 256], strides = [1, 1]} : vector<144x256xf32> to vector<16x256xf32>
    %c239_i32_29 = arith.constant 239 : i32
    %117 = tpu.dynamic_rotate %116 by %c239_i32_29 dim 1 : vector<16x256xf32>, i32 -> vector<16x256xf32>
    %118 = vector.extract_strided_slice %0 {offsets = [8, 0], sizes = [1, 256], strides = [1, 1]} : vector<9x256xf32> to vector<1x256xf32>
    %119 = vector.broadcast %118 : vector<1x256xf32> to vector<16x256xf32>
    %120 = arith.mulf %117, %119 : vector<16x256xf32>
    %121 = arith.addf %115, %120 : vector<16x256xf32>
    %c0_30 = arith.constant 0 : index
    %c0_31 = arith.constant 0 : index
    %122 = vector.load %arg12[%c0_30, %c0_31] : memref<16x1xf32, #tpu.memory_space<vmem>>, vector<16x1xf32>
    %123 = vector.broadcast %122 : vector<16x1xf32> to vector<16x256xf32>
    %124 = arith.addf %121, %123 : vector<16x256xf32>
    %cst_32 = arith.constant 0.000000e+00 : f32
    %125 = vector.broadcast %cst_32 : f32 to vector<16x256xf32>
    %126 = arith.maximumf %124, %125 : vector<16x256xf32>
    %c0_33 = arith.constant 0 : index
    %c0_34 = arith.constant 0 : index
    %127 = vector.load %arg13[%c0_33, %c0_34] : memref<8x16xf32, #tpu.memory_space<vmem>>, vector<8x16xf32>
    %cst_35 = arith.constant dense<0.000000e+00> : vector<8x256xf32>
    %128 = tpu.matmul %127, %126, %cst_35 {dimension_numbers = #tpu.dot_dimension_numbers<[1], [0], [0], [1], [0, 0, 1, 1], [], []>} : vector<8x16xf32>, vector<16x256xf32>, vector<8x256xf32> -> vector<8x256xf32>
    %c0_36 = arith.constant 0 : index
    %c0_37 = arith.constant 0 : index
    %129 = vector.load %arg14[%c0_36, %c0_37] : memref<8x1xf32, #tpu.memory_space<vmem>>, vector<8x1xf32>
    %130 = vector.broadcast %129 : vector<8x1xf32> to vector<8x256xf32>
    %131 = arith.addf %128, %130 : vector<8x256xf32>
    %c0_38 = arith.constant 0 : index
    %c0_39 = arith.constant 0 : index
    %132 = vector.load %arg15[%c0_38, %c0_39] : memref<8x1xf32, #tpu.memory_space<vmem>>, vector<8x1xf32>
    %133 = vector.broadcast %132 : vector<8x1xf32> to vector<8x256xf32>
    %134 = arith.subf %131, %133 : vector<8x256xf32>
    %cst_40 = arith.constant dense<0xFF800000> : vector<256xf32>
    %135 = vector.multi_reduction <maximumf>, %134, %cst_40 [0] : vector<8x256xf32> to vector<256xf32>
    %136 = vector.shape_cast %135 : vector<256xf32> to vector<1x256xf32>
    %137 = tpu.iota {dimensions = array<i32: 0>} : vector<8x256xi32>
    %138 = arith.sitofp %137 : vector<8x256xi32> to vector<8x256xf32>
    %139 = vector.broadcast %136 : vector<1x256xf32> to vector<8x256xf32>
    %140 = arith.cmpf oeq, %134, %139 : vector<8x256xf32>
    %cst_41 = arith.constant 8.000000e+00 : f32
    %141 = vector.broadcast %cst_41 : f32 to vector<8x256xf32>
    %142 = arith.select %140, %138, %141 : vector<8x256xi1>, vector<8x256xf32>
    %cst_42 = arith.constant dense<0x7F800000> : vector<256xf32>
    %143 = vector.multi_reduction <minimumf>, %142, %cst_42 [0] : vector<8x256xf32> to vector<256xf32>
    %144 = vector.shape_cast %143 : vector<256xf32> to vector<1x256xf32>
    %145 = vector.broadcast %144 : vector<1x256xf32> to vector<8x256xf32>
    %146 = arith.cmpf oeq, %138, %145 : vector<8x256xf32>
    %147 = arith.extui %146 : vector<8x256xi1> to vector<8x256xi32>
    %148 = arith.sitofp %147 : vector<8x256xi32> to vector<8x256xf32>
    %cst_43 = arith.constant 1.000000e-01 : f32
    %149 = vector.broadcast %cst_43 : f32 to vector<1x256xf32>
    %150 = arith.cmpf ogt, %136, %149 : vector<1x256xf32>
    %151 = arith.extui %150 : vector<1x256xi1> to vector<1x256xi32>
    %152 = arith.sitofp %151 : vector<1x256xi32> to vector<1x256xf32>
    %153 = vector.broadcast %152 : vector<1x256xf32> to vector<8x256xf32>
    %154 = arith.mulf %148, %153 : vector<8x256xf32>
    %c0_44 = arith.constant 0 : index
    %c0_45 = arith.constant 0 : index
    %c0_46 = arith.constant 0 : index
    %155 = vector.load %arg16[%c0_44, %c0_45, %c0_46] : memref<1x8x256xf32, #tpu.memory_space<vmem>>, vector<1x8x256xf32>
    %156 = vector.shape_cast %155 : vector<1x8x256xf32> to vector<8x256xf32>
    %157 = vector.shape_cast %154 : vector<8x256xf32> to vector<1x8x256xf32>
    tpu.vector_store %arg16[%c0_44, %c0_45, %c0_46], %157 {strides = array<i32>} : memref<1x8x256xf32, #tpu.memory_space<vmem>>, vector<1x8x256xf32>,
    %c0_47 = arith.constant 0 : index
    %c0_48 = arith.constant 0 : index
    %c0_49 = arith.constant 0 : index
    %158 = vector.load %arg3[%c0_47, %c0_48, %c0_49] : memref<1x8x256xf32, #tpu.memory_space<vmem>>, vector<1x8x256xf32>
    %159 = vector.shape_cast %158 : vector<1x8x256xf32> to vector<8x256xf32>
    %160 = vector.extract_strided_slice %154 {offsets = [0, 0], sizes = [1, 256], strides = [1, 1]} : vector<8x256xf32> to vector<1x256xf32>
    %161 = vector.broadcast %160 : vector<1x256xf32> to vector<8x256xf32>
    %162 = arith.mulf %159, %161 : vector<8x256xf32>
    %c0_50 = arith.constant 0 : index
    %c0_51 = arith.constant 0 : index
    %c0_52 = arith.constant 0 : index
    %163 = vector.load %arg17[%c0_50, %c0_51, %c0_52] : memref<1x8x256xf32, #tpu.memory_space<vmem>>, vector<1x8x256xf32>
    %164 = vector.shape_cast %163 : vector<1x8x256xf32> to vector<8x256xf32>
    %165 = vector.shape_cast %162 : vector<8x256xf32> to vector<1x8x256xf32>
    tpu.vector_store %arg17[%c0_50, %c0_51, %c0_52], %165 {strides = array<i32>} : memref<1x8x256xf32, #tpu.memory_space<vmem>>, vector<1x8x256xf32>,
    %c0_53 = arith.constant 0 : index
    %c0_54 = arith.constant 0 : index
    %c0_55 = arith.constant 0 : index
    %166 = vector.load %arg4[%c0_53, %c0_54, %c0_55] : memref<1x256x256xf32, #tpu.memory_space<vmem>>, vector<1x256x256xf32>
    %167 = vector.shape_cast %166 : vector<1x256x256xf32> to vector<256x256xf32>
    %168 = vector.extract_strided_slice %154 {offsets = [1, 0], sizes = [1, 256], strides = [1, 1]} : vector<8x256xf32> to vector<1x256xf32>
    %169 = vector.broadcast %168 : vector<1x256xf32> to vector<256x256xf32>
    %170 = arith.mulf %167, %169 : vector<256x256xf32>
    %c0_56 = arith.constant 0 : index
    %c0_57 = arith.constant 0 : index
    %c0_58 = arith.constant 0 : index
    %171 = vector.load %arg18[%c0_56, %c0_57, %c0_58] : memref<1x256x256xf32, #tpu.memory_space<vmem>>, vector<1x256x256xf32>
    %172 = vector.shape_cast %171 : vector<1x256x256xf32> to vector<256x256xf32>
    %173 = vector.shape_cast %170 : vector<256x256xf32> to vector<1x256x256xf32>
    tpu.vector_store %arg18[%c0_56, %c0_57, %c0_58], %173 {strides = array<i32>} : memref<1x256x256xf32, #tpu.memory_space<vmem>>, vector<1x256x256xf32>,
    %c0_59 = arith.constant 0 : index
    %c0_60 = arith.constant 0 : index
    %c0_61 = arith.constant 0 : index
    %174 = vector.load %arg5[%c0_59, %c0_60, %c0_61] : memref<1x8x256xf32, #tpu.memory_space<vmem>>, vector<1x8x256xf32>
    %175 = vector.shape_cast %174 : vector<1x8x256xf32> to vector<8x256xf32>
    %176 = vector.extract_strided_slice %154 {offsets = [2, 0], sizes = [1, 256], strides = [1, 1]} : vector<8x256xf32> to vector<1x256xf32>
    %177 = vector.broadcast %176 : vector<1x256xf32> to vector<8x256xf32>
    %178 = arith.mulf %175, %177 : vector<8x256xf32>
    %c0_62 = arith.constant 0 : index
    %c0_63 = arith.constant 0 : index
    %c0_64 = arith.constant 0 : index
    %179 = vector.load %arg19[%c0_62, %c0_63, %c0_64] : memref<1x8x256xf32, #tpu.memory_space<vmem>>, vector<1x8x256xf32>
    %180 = vector.shape_cast %179 : vector<1x8x256xf32> to vector<8x256xf32>
    %181 = vector.shape_cast %178 : vector<8x256xf32> to vector<1x8x256xf32>
    tpu.vector_store %arg19[%c0_62, %c0_63, %c0_64], %181 {strides = array<i32>} : memref<1x8x256xf32, #tpu.memory_space<vmem>>, vector<1x8x256xf32>,
    return
  }
  func.func @transform_0(%arg0: i32) -> (i32, i32, i32) {
    %c0_i32 = arith.constant 0 : i32
    %c0_i32_0 = arith.constant 0 : i32
    %c0_i32_1 = arith.constant 0 : i32
    %c0_i32_2 = arith.constant 0 : i32
    return %c0_i32, %c0_i32_0, %c0_i32_1 : i32, i32, i32
  }
  func.func @transform_1(%arg0: i32) -> (i32, i32, i32) {
    %c1_i32 = arith.constant 1 : i32
    %0 = arith.addi %arg0, %c1_i32 : i32
    %c0_i32 = arith.constant 0 : i32
    %c0_i32_0 = arith.constant 0 : i32
    %c0_i32_1 = arith.constant 0 : i32
    return %0, %c0_i32, %c0_i32_0 : i32, i32, i32
  }
  func.func @transform_2(%arg0: i32) -> (i32, i32, i32) {
    %c1_i32 = arith.constant 1 : i32
    %0 = arith.addi %arg0, %c1_i32 : i32
    %c0_i32 = arith.constant 0 : i32
    %c0_i32_0 = arith.constant 0 : i32
    %c0_i32_1 = arith.constant 0 : i32
    return %0, %c0_i32, %c0_i32_0 : i32, i32, i32
  }
  func.func @transform_3(%arg0: i32) -> (i32, i32, i32) {
    %c1_i32 = arith.constant 1 : i32
    %0 = arith.addi %arg0, %c1_i32 : i32
    %c0_i32 = arith.constant 0 : i32
    %c0_i32_0 = arith.constant 0 : i32
    %c0_i32_1 = arith.constant 0 : i32
    return %0, %c0_i32, %c0_i32_0 : i32, i32, i32
  }
  func.func @transform_4(%arg0: i32) -> (i32, i32, i32) {
    %c1_i32 = arith.constant 1 : i32
    %0 = arith.addi %arg0, %c1_i32 : i32
    %c0_i32 = arith.constant 0 : i32
    %c0_i32_0 = arith.constant 0 : i32
    %c0_i32_1 = arith.constant 0 : i32
    return %0, %c0_i32, %c0_i32_0 : i32, i32, i32
  }
  func.func @transform_5(%arg0: i32) -> (i32, i32) {
    %c0_i32 = arith.constant 0 : i32
    %c0_i32_0 = arith.constant 0 : i32
    %c0_i32_1 = arith.constant 0 : i32
    return %c0_i32, %c0_i32_0 : i32, i32
  }
  func.func @transform_6(%arg0: i32) -> (i32, i32) {
    %c0_i32 = arith.constant 0 : i32
    %c0_i32_0 = arith.constant 0 : i32
    %c0_i32_1 = arith.constant 0 : i32
    return %c0_i32, %c0_i32_0 : i32, i32
  }
  func.func @transform_7(%arg0: i32) -> (i32, i32) {
    %c0_i32 = arith.constant 0 : i32
    %c0_i32_0 = arith.constant 0 : i32
    %c0_i32_1 = arith.constant 0 : i32
    return %c0_i32, %c0_i32_0 : i32, i32
  }
  func.func @transform_8(%arg0: i32) -> (i32, i32) {
    %c0_i32 = arith.constant 0 : i32
    %c0_i32_0 = arith.constant 0 : i32
    %c0_i32_1 = arith.constant 0 : i32
    return %c0_i32, %c0_i32_0 : i32, i32
  }
  func.func @transform_9(%arg0: i32) -> (i32, i32) {
    %c0_i32 = arith.constant 0 : i32
    %c0_i32_0 = arith.constant 0 : i32
    %c0_i32_1 = arith.constant 0 : i32
    return %c0_i32, %c0_i32_0 : i32, i32
  }
  func.func @transform_10(%arg0: i32) -> (i32, i32) {
    %c0_i32 = arith.constant 0 : i32
    %c0_i32_0 = arith.constant 0 : i32
    %c0_i32_1 = arith.constant 0 : i32
    return %c0_i32, %c0_i32_0 : i32, i32
  }
  func.func @transform_11(%arg0: i32) -> (i32, i32) {
    %c0_i32 = arith.constant 0 : i32
    %c0_i32_0 = arith.constant 0 : i32
    %c0_i32_1 = arith.constant 0 : i32
    return %c0_i32, %c0_i32_0 : i32, i32
  }
  func.func @transform_12(%arg0: i32) -> (i32, i32) {
    %c0_i32 = arith.constant 0 : i32
    %c0_i32_0 = arith.constant 0 : i32
    %c0_i32_1 = arith.constant 0 : i32
    return %c0_i32, %c0_i32_0 : i32, i32
  }
  func.func @transform_13(%arg0: i32) -> (i32, i32) {
    %c0_i32 = arith.constant 0 : i32
    %c0_i32_0 = arith.constant 0 : i32
    %c0_i32_1 = arith.constant 0 : i32
    return %c0_i32, %c0_i32_0 : i32, i32
  }
  func.func @transform_14(%arg0: i32) -> (i32, i32) {
    %c0_i32 = arith.constant 0 : i32
    %c0_i32_0 = arith.constant 0 : i32
    %c0_i32_1 = arith.constant 0 : i32
    return %c0_i32, %c0_i32_0 : i32, i32
  }
  func.func @transform_15(%arg0: i32) -> (i32, i32, i32) {
    %c0_i32 = arith.constant 0 : i32
    %c0_i32_0 = arith.constant 0 : i32
    %c0_i32_1 = arith.constant 0 : i32
    return %arg0, %c0_i32, %c0_i32_0 : i32, i32, i32
  }
  func.func @transform_16(%arg0: i32) -> (i32, i32, i32) {
    %c1_i32 = arith.constant 1 : i32
    %0 = arith.addi %arg0, %c1_i32 : i32
    %c0_i32 = arith.constant 0 : i32
    %c0_i32_0 = arith.constant 0 : i32
    %c0_i32_1 = arith.constant 0 : i32
    return %0, %c0_i32, %c0_i32_0 : i32, i32, i32
  }
  func.func @transform_17(%arg0: i32) -> (i32, i32, i32) {
    %c1_i32 = arith.constant 1 : i32
    %0 = arith.addi %arg0, %c1_i32 : i32
    %c0_i32 = arith.constant 0 : i32
    %c0_i32_0 = arith.constant 0 : i32
    %c0_i32_1 = arith.constant 0 : i32
    return %0, %c0_i32, %c0_i32_0 : i32, i32, i32
  }
  func.func @transform_18(%arg0: i32) -> (i32, i32, i32) {
    %c1_i32 = arith.constant 1 : i32
    %0 = arith.addi %arg0, %c1_i32 : i32
    %c0_i32 = arith.constant 0 : i32
    %c0_i32_0 = arith.constant 0 : i32
    %c0_i32_1 = arith.constant 0 : i32
    return %0, %c0_i32, %c0_i32_0 : i32, i32, i32
  }
}

</mosaic_0001>

<llo_original>
// kernel: advanced_communication_forward.2
$region0: #{advanced_communication_forward.2}
  #allocation0 [shape = 'u32[]', space=smem, size = 0x4, offset = 0x4, fixed_abs, tag = 'smem constant byte address 0x4 - core index']
  #allocation1 [shape = 'u32[144,128]{1,0:T(1,128)}', space=vmem, size = 0x12000, scoped, tag = 'internal scratch']
  %s0 = inlined_call_operand.vmem [shape: f32[2,256,256], index: 0, kind: input, shape index: {}]
  %s1 = inlined_call_operand.vmem [shape: f32[9,256], index: 1, kind: input, shape index: {}]
  %s2 = inlined_call_operand.vmem [shape: f32[576,256], index: 2, kind: input, shape index: {}]
  %s3 = inlined_call_operand.vmem [shape: f32[64,1], index: 3, kind: input, shape index: {}]
  %s4 = inlined_call_operand.vmem [shape: f32[288,64], index: 4, kind: input, shape index: {}]
  %s5 = inlined_call_operand.vmem [shape: f32[32,1], index: 5, kind: input, shape index: {}]
  %s6 = inlined_call_operand.vmem [shape: f32[8,32], index: 6, kind: input, shape index: {}]
  %s7 = inlined_call_operand.vmem [shape: f32[8,1], index: 7, kind: input, shape index: {}]
  %s8 = inlined_call_operand.vmem [shape: f32[2,8,256], index: 8, kind: output, shape index: {}]
  %s9 = sld [smem:[#allocation0]]
  $region65: #{advanced_communication_forward.2} parent=0
    _
  %s11 = ssub.s32 1, %s9
  %s12 = scalar_select 0, %s11, %s9
  loop: start=0, step=1, limit=4
  $region2: #{advanced_communication_forward.2} parent=0 // loop_pre_header
    _
  $region3: #{advanced_communication_forward.2} parent=0 // loop_header
    %s14 = sphi 0, %s18
    %p15 = scmp.ge.s32.totalorder %s14, 4
    %s24 = sphi 0, %s26
    %s27 = sphi 0, %s24
    %s28 = sphi 0, %s27
    %s44 = sphi 0, %s28
    %s48 = sphi 0, %s48
    %s50 = sphi 0, %s48
    %s51 = sphi 0, %s50
    %s65 = sphi 0, %s51
    %s69 = sphi 0, %s69
    %s71 = sphi 0, %s69
    %s72 = sphi 0, %s71
    %s86 = sphi 0, %s72
    %s90 = sphi 0, %s90
    %s92 = sphi 0, %s90
    %s93 = sphi 0, %s92
    %s107 = sphi 0, %s93
    %s111 = sphi 0, %s111
    %s113 = sphi 0, %s111
    %s114 = sphi 0, %s113
    %s128 = sphi 0, %s114
    %s132 = sphi 0, %s132
    %s134 = sphi 0, %s132
    %s135 = sphi 0, %s134
    %s149 = sphi 0, %s135
    %s153 = sphi 0, %s153
    %s155 = sphi 0, %s153
    %s156 = sphi 0, %s155
    %s170 = sphi 0, %s156
    %s174 = sphi 0, %s174
    %s176 = sphi 0, %s174
    %s177 = sphi 0, %s176
    %s191 = sphi 0, %s177
    %s197 = sphi 0, %s199
    %s200 = sphi 0, %s197
    %s201 = sphi 0, %s200
    %s217 = sphi 0, %s201
  $region4: #{advanced_communication_forward.2} parent=0 // loop_header_branch
    %17 = sbr.rel (%p15) target = $region8
  $region5: #{advanced_communication_forward.2} parent=0 // loop_body
    %s19 = ssub.s32 %s14, 1
    %s20 = ssub.s32 %s14, 2
    %s21 = sadd.s32 %s14, 1
    %s22 = ssub.s32 %s14, %s21
    %p23 = scmp.eq.s32.totalorder %s22, 0
    %s25 = sadd.s32 %s24, 1
    %s26 = scalar_select %p23, %s24, %s25
    %p29 = pneg %p23
    %p30 = scmp.eq.s32.totalorder %s14, 1
    %p31 = por %p29, %p30
    %p32 = scmp.ne.s32.totalorder %s24, %s27
    %p33 = scmp.eq.s32.totalorder %s14, 0
    %p34 = por %p32, %p33
    %p35 = scmp.ne.s32.totalorder %s24, %s27
    %p36 = scmp.eq.s32.totalorder %s19, 1
    %p37 = por %p35, %p36
    %p38 = scmp.ne.s32.totalorder %s27, %s28
    %p39 = scmp.eq.s32.totalorder %s19, 0
    %p40 = por %p38, %p39
    %p41 = scmp.ne.s32.totalorder %s27, %s28
    %p42 = scmp.eq.s32.totalorder %s20, 1
    %p43 = por %p41, %p42
    %p45 = scmp.ne.s32.totalorder %s28, %s44
    %p46 = scmp.eq.s32.totalorder %s20, 0
    %p47 = por %p45, %p46
    %s49 = sadd.s32 %s48, 1
    %p52 = scmp.eq.s32.totalorder %s14, 1
    %p53 = scmp.ne.s32.totalorder %s48, %s50
    %p54 = scmp.eq.s32.totalorder %s14, 0
    %p55 = por %p53, %p54
    %p56 = scmp.ne.s32.totalorder %s48, %s50
    %p57 = scmp.eq.s32.totalorder %s19, 1
    %p58 = por %p56, %p57
    %p59 = scmp.ne.s32.totalorder %s50, %s51
    %p60 = scmp.eq.s32.totalorder %s19, 0
    %p61 = por %p59, %p60
    %p62 = scmp.ne.s32.totalorder %s50, %s51
    %p63 = scmp.eq.s32.totalorder %s20, 1
    %p64 = por %p62, %p63
    %p66 = scmp.ne.s32.totalorder %s51, %s65
    %p67 = scmp.eq.s32.totalorder %s20, 0
    %p68 = por %p66, %p67
    %s70 = sadd.s32 %s69, 1
    %p73 = scmp.eq.s32.totalorder %s14, 1
    %p74 = scmp.ne.s32.totalorder %s69, %s71
    %p75 = scmp.eq.s32.totalorder %s14, 0
    %p76 = por %p74, %p75
    %p77 = scmp.ne.s32.totalorder %s69, %s71
    %p78 = scmp.eq.s32.totalorder %s19, 1
    %p79 = por %p77, %p78
    %p80 = scmp.ne.s32.totalorder %s71, %s72
    %p81 = scmp.eq.s32.totalorder %s19, 0
    %p82 = por %p80, %p81
    %p83 = scmp.ne.s32.totalorder %s71, %s72
    %p84 = scmp.eq.s32.totalorder %s20, 1
    %p85 = por %p83, %p84
    %p87 = scmp.ne.s32.totalorder %s72, %s86
    %p88 = scmp.eq.s32.totalorder %s20, 0
    %p89 = por %p87, %p88
    %s91 = sadd.s32 %s90, 1
    %p94 = scmp.eq.s32.totalorder %s14, 1
    %p95 = scmp.ne.s32.totalorder %s90, %s92
    %p96 = scmp.eq.s32.totalorder %s14, 0
    %p97 = por %p95, %p96
    %p98 = scmp.ne.s32.totalorder %s90, %s92
    %p99 = scmp.eq.s32.totalorder %s19, 1
    %p100 = por %p98, %p99
    %p101 = scmp.ne.s32.totalorder %s92, %s93
    %p102 = scmp.eq.s32.totalorder %s19, 0
    %p103 = por %p101, %p102
    %p104 = scmp.ne.s32.totalorder %s92, %s93
    %p105 = scmp.eq.s32.totalorder %s20, 1
    %p106 = por %p104, %p105
    %p108 = scmp.ne.s32.totalorder %s93, %s107
    %p109 = scmp.eq.s32.totalorder %s20, 0
    %p110 = por %p108, %p109
    %s112 = sadd.s32 %s111, 1
    %p115 = scmp.eq.s32.totalorder %s14, 1
    %p116 = scmp.ne.s32.totalorder %s111, %s113
    %p117 = scmp.eq.s32.totalorder %s14, 0
    %p118 = por %p116, %p117
    %p119 = scmp.ne.s32.totalorder %s111, %s113
    %p120 = scmp.eq.s32.totalorder %s19, 1
    %p121 = por %p119, %p120
    %p122 = scmp.ne.s32.totalorder %s113, %s114
    %p123 = scmp.eq.s32.totalorder %s19, 0
    %p124 = por %p122, %p123
    %p125 = scmp.ne.s32.totalorder %s113, %s114
    %p126 = scmp.eq.s32.totalorder %s20, 1
    %p127 = por %p125, %p126
    %p129 = scmp.ne.s32.totalorder %s114, %s128
    %p130 = scmp.eq.s32.totalorder %s20, 0
    %p131 = por %p129, %p130
    %s133 = sadd.s32 %s132, 1
    %p136 = scmp.eq.s32.totalorder %s14, 1
    %p137 = scmp.ne.s32.totalorder %s132, %s134
    %p138 = scmp.eq.s32.totalorder %s14, 0
    %p139 = por %p137, %p138
    %p140 = scmp.ne.s32.totalorder %s132, %s134
    %p141 = scmp.eq.s32.totalorder %s19, 1
    %p142 = por %p140, %p141
    %p143 = scmp.ne.s32.totalorder %s134, %s135
    %p144 = scmp.eq.s32.totalorder %s19, 0
    %p145 = por %p143, %p144
    %p146 = scmp.ne.s32.totalorder %s134, %s135
    %p147 = scmp.eq.s32.totalorder %s20, 1
    %p148 = por %p146, %p147
    %p150 = scmp.ne.s32.totalorder %s135, %s149
    %p151 = scmp.eq.s32.totalorder %s20, 0
    %p152 = por %p150, %p151
    %s154 = sadd.s32 %s153, 1
    %p157 = scmp.eq.s32.totalorder %s14, 1
    %p158 = scmp.ne.s32.totalorder %s153, %s155
    %p159 = scmp.eq.s32.totalorder %s14, 0
    %p160 = por %p158, %p159
    %p161 = scmp.ne.s32.totalorder %s153, %s155
    %p162 = scmp.eq.s32.totalorder %s19, 1
    %p163 = por %p161, %p162
    %p164 = scmp.ne.s32.totalorder %s155, %s156
    %p165 = scmp.eq.s32.totalorder %s19, 0
    %p166 = por %p164, %p165
    %p167 = scmp.ne.s32.totalorder %s155, %s156
    %p168 = scmp.eq.s32.totalorder %s20, 1
    %p169 = por %p167, %p168
    %p171 = scmp.ne.s32.totalorder %s156, %s170
    %p172 = scmp.eq.s32.totalorder %s20, 0
    %p173 = por %p171, %p172
    %s175 = sadd.s32 %s174, 1
    %p178 = scmp.eq.s32.totalorder %s14, 1
    %p179 = scmp.ne.s32.totalorder %s174, %s176
    %p180 = scmp.eq.s32.totalorder %s14, 0
    %p181 = por %p179, %p180
    %p182 = scmp.ne.s32.totalorder %s174, %s176
    %p183 = scmp.eq.s32.totalorder %s19, 1
    %p184 = por %p182, %p183
    %p185 = scmp.ne.s32.totalorder %s176, %s177
    %p186 = scmp.eq.s32.totalorder %s19, 0
    %p187 = por %p185, %p186
    %p188 = scmp.ne.s32.totalorder %s176, %s177
    %p189 = scmp.eq.s32.totalorder %s20, 1
    %p190 = por %p188, %p189
    %p192 = scmp.ne.s32.totalorder %s177, %s191
    %p193 = scmp.eq.s32.totalorder %s20, 0
    %p194 = por %p192, %p193
    %s195 = ssub.s32 %s14, %s21
    %p196 = scmp.eq.s32.totalorder %s195, 0
    %s198 = sadd.s32 %s197, 1
    %s199 = scalar_select %p196, %s197, %s198
    %p202 = pneg %p196
    %p203 = scmp.eq.s32.totalorder %s14, 1
    %p204 = por %p202, %p203
    %p205 = scmp.ne.s32.totalorder %s197, %s200
    %p206 = scmp.eq.s32.totalorder %s14, 0
    %p207 = por %p205, %p206
    %p208 = scmp.ne.s32.totalorder %s197, %s200
    %p209 = scmp.eq.s32.totalorder %s19, 1
    %p210 = por %p208, %p209
    %p211 = scmp.ne.s32.totalorder %s200, %s201
    %p212 = scmp.eq.s32.totalorder %s19, 0
    %p213 = por %p211, %p212
    %p214 = scmp.ne.s32.totalorder %s200, %s201
    %p215 = scmp.eq.s32.totalorder %s20, 1
    %p216 = por %p214, %p215
    %p218 = scmp.ne.s32.totalorder %s201, %s217
    %p219 = scmp.eq.s32.totalorder %s20, 0
    %p220 = por %p218, %p219
    %p221 = scmp.le.s32.totalorder 1, %s14
    %p222 = scmp.lt.s32.totalorder %s14, 3
    %p223 = pnand %p221, %p222
    %p224 = pneg %p223
    // Predicated region
    $region9: #{advanced_communication_forward.2} parent=5 // pred_check
      _
    $region10: #{advanced_communication_forward.2} parent=5 // pred_check_branch
      %226 = sbr.rel (%p223) target = $region12
    $region11: #{advanced_communication_forward.2} parent=5 // pred_region
      %s227 = ssub.s32 %s14, 1
      // Predicated region
      $region13: #{advanced_communication_forward.2} parent=11 // pred_check
        %p228 = pneg %p61
      $region14: #{advanced_communication_forward.2} parent=11 // pred_check_branch
        %230 = sbr.rel (%p228) target = $region16
      $region15: #{advanced_communication_forward.2} parent=11 // pred_region
        _
      $region16: #{advanced_communication_forward.2} parent=11 // pred_fallthru
        _
      // Predicated region
      $region17: #{advanced_communication_forward.2} parent=11 // pred_check
        %p231 = pneg %p82
      $region18: #{advanced_communication_forward.2} parent=11 // pred_check_branch
        %233 = sbr.rel (%p231) target = $region20
      $region19: #{advanced_communication_forward.2} parent=11 // pred_region
        _
      $region20: #{advanced_communication_forward.2} parent=11 // pred_fallthru
        _
      // Predicated region
      $region21: #{advanced_communication_forward.2} parent=11 // pred_check
        %p234 = pneg %p103
      $region22: #{advanced_communication_forward.2} parent=11 // pred_check_branch
        %236 = sbr.rel (%p234) target = $region24
      $region23: #{advanced_communication_forward.2} parent=11 // pred_region
        _
      $region24: #{advanced_communication_forward.2} parent=11 // pred_fallthru
        _
      // Predicated region
      $region25: #{advanced_communication_forward.2} parent=11 // pred_check
        %p237 = pneg %p124
      $region26: #{advanced_communication_forward.2} parent=11 // pred_check_branch
        %239 = sbr.rel (%p237) target = $region28
      $region27: #{advanced_communication_forward.2} parent=11 // pred_region
        _
      $region28: #{advanced_communication_forward.2} parent=11 // pred_fallthru
        _
      // Predicated region
      $region29: #{advanced_communication_forward.2} parent=11 // pred_check
        %p240 = pneg %p145
      $region30: #{advanced_communication_forward.2} parent=11 // pred_check_branch
        %242 = sbr.rel (%p240) target = $region32
      $region31: #{advanced_communication_forward.2} parent=11 // pred_region
        _
      $region32: #{advanced_communication_forward.2} parent=11 // pred_fallthru
        _
      // Predicated region
      $region33: #{advanced_communication_forward.2} parent=11 // pred_check
        %p243 = pneg %p166
      $region34: #{advanced_communication_forward.2} parent=11 // pred_check_branch
        %245 = sbr.rel (%p243) target = $region36
      $region35: #{advanced_communication_forward.2} parent=11 // pred_region
        _
      $region36: #{advanced_communication_forward.2} parent=11 // pred_fallthru
        _
      // Predicated region
      $region37: #{advanced_communication_forward.2} parent=11 // pred_check
        %p246 = pneg %p187
      $region38: #{advanced_communication_forward.2} parent=11 // pred_check_branch
        %248 = sbr.rel (%p246) target = $region40
      $region39: #{advanced_communication_forward.2} parent=11 // pred_region
        _
      $region40: #{advanced_communication_forward.2} parent=11 // pred_fallthru
        _
    $region12: #{advanced_communication_forward.2} parent=5 // pred_fallthru
      _
    %p249 = scmp.lt.s32.totalorder %s14, 2
    // Predicated region
    $region41: #{advanced_communication_forward.2} parent=5 // pred_check
      %p250 = pneg %p249
    $region42: #{advanced_communication_forward.2} parent=5 // pred_check_branch
      %252 = sbr.rel (%p250) target = $region44
    $region43: #{advanced_communication_forward.2} parent=5 // pred_region
      // Predicated region
      $region45: #{advanced_communication_forward.2} parent=43 // pred_check
        %p253 = pneg %p34
      $region46: #{advanced_communication_forward.2} parent=43 // pred_check_branch
        %255 = sbr.rel (%p253) target = $region48
      $region47: #{advanced_communication_forward.2} parent=43 // pred_region
        %p256 = scmp.lt.s32.totalorder %s14, 1
        %s257 = scalar_select %p256, %s14, 1
        %s258 = smul.addr %s257, 64
        %s259 = smul.addr %s258, 8
        %s260 = scalar_lea.vmem %s0, %s259
      $region48: #{advanced_communication_forward.2} parent=43 // pred_fallthru
        _
    $region44: #{advanced_communication_forward.2} parent=5 // pred_fallthru
      _
    %p261 = scmp.le.s32.totalorder 1, %s14
    %p262 = scmp.lt.s32.totalorder %s14, 3
    %p263 = pnand %p261, %p262
    %p264 = pneg %p263
    // Predicated region
    $region49: #{advanced_communication_forward.2} parent=5 // pred_check
      _
    $region50: #{advanced_communication_forward.2} parent=5 // pred_check_branch
      %266 = sbr.rel (%p263) target = $region52
    $region51: #{advanced_communication_forward.2} parent=5 // pred_region
      %s267 = ssub.s32 %s14, 1
      %p268 = scmp.lt.s32.totalorder %s19, 1
      %s269 = scalar_select %p268, %s19, 1
      %s270 = smul.addr %s269, 64
      %s271 = smul.addr %s270, 8
      %s272 = scalar_lea.vmem %s0, %s271
      %p273 = pneg %p40
      %p274 = pneg %p37
      %p275 = pneg %p61
      %p276 = pneg %p58
      %p277 = pneg %p82
      %p278 = pneg %p79
      %p279 = pneg %p103
      %p280 = pneg %p100
      %p281 = pneg %p124
      %p282 = pneg %p121
      %p283 = pneg %p145
      %p284 = pneg %p142
      %p285 = pneg %p166
      %p286 = pneg %p163
      %p287 = pneg %p187
      %p288 = pneg %p184
      %p289 = pneg %p213
      %p290 = pneg %p210
      %p291 = scmp.lt.s32.totalorder %s19, 1
      %s292 = scalar_select %p291, %s19, 1
      %s293 = smul.addr %s292, 2
      %s294 = smul.addr %s293, 8
      %s295 = scalar_lea.vmem %s8, %s294
      %p296 = scmp.lt.s32.totalorder %s19, 1
      %s297 = scalar_select %p296, %s19, 1
      %s298 = smul.addr %s297, 64
      %s299 = smul.addr %s298, 8
      %s300 = scalar_lea.vmem %s0, %s299
      %p301 = scmp.lt.s32.totalorder %s19, 1
      %s302 = scalar_select %p301, %s19, 1
      %s303 = smul.addr %s302, 2
      %s304 = smul.addr %s303, 8
      %s305 = scalar_lea.vmem %s8, %s304
      %v306 = vld [vmem:[%s1] sm:$0xff]
      %v307 = vld [vmem:[%s1 + $0x8] sm:$0xff]
      %v308 = vld [vmem:[%s1 + $0x10] sm:$0x1]
      %v309 = vld [vmem:[%s1 + $0x18] sm:$0x1]
      %v310 = vld [vmem:[%s300] sm:$0xff]
      %v311 = vld [vmem:[%s300 + $0x8] sm:$0xff]
      %v312 = vld [vmem:[%s300 + $0x10] sm:$0xff]
      %v313 = vld [vmem:[%s300 + $0x18] sm:$0xff]
      %v314 = vld [vmem:[%s300 + $0x20] sm:$0xff]
      %v315 = vld [vmem:[%s300 + $0x28] sm:$0xff]
      %v316 = vld [vmem:[%s300 + $0x30] sm:$0xff]
      %v317 = vld [vmem:[%s300 + $0x38] sm:$0xff]
      %v318 = vld [vmem:[%s300 + $0x40] sm:$0xff]
      %v319 = vld [vmem:[%s300 + $0x48] sm:$0xff]
      %v320 = vld [vmem:[%s300 + $0x50] sm:$0xff]
      %v321 = vld [vmem:[%s300 + $0x58] sm:$0xff]
      %v322 = vld [vmem:[%s300 + $0x60] sm:$0xff]
      %v323 = vld [vmem:[%s300 + $0x68] sm:$0xff]
      %v324 = vld [vmem:[%s300 + $0x70] sm:$0xff]
      %v325 = vld [vmem:[%s300 + $0x78] sm:$0xff]
      %v326 = vld [vmem:[%s300 + $0x80] sm:$0xff]
      %v327 = vld [vmem:[%s300 + $0x88] sm:$0xff]
      %v328 = vld [vmem:[%s300 + $0x90] sm:$0xff]
      %v329 = vld [vmem:[%s300 + $0x98] sm:$0xff]
      %v330 = vld [vmem:[%s300 + $0xa0] sm:$0xff]
      %v331 = vld [vmem:[%s300 + $0xa8] sm:$0xff]
      %v332 = vld [vmem:[%s300 + $0xb0] sm:$0xff]
      %v333 = vld [vmem:[%s300 + $0xb8] sm:$0xff]
      %v334 = vld [vmem:[%s300 + $0xc0] sm:$0xff]
      %v335 = vld [vmem:[%s300 + $0xc8] sm:$0xff]
      %v336 = vld [vmem:[%s300 + $0xd0] sm:$0xff]
      %v337 = vld [vmem:[%s300 + $0xd8] sm:$0xff]
      %v338 = vld [vmem:[%s300 + $0xe0] sm:$0xff]
      %v339 = vld [vmem:[%s300 + $0xe8] sm:$0xff]
      %v340 = vld [vmem:[%s300 + $0xf0] sm:$0xff]
      %v341 = vld [vmem:[%s300 + $0xf8] sm:$0xff]
      %v342 = vld [vmem:[%s300 + $0x100] sm:$0xff]
      %v343 = vld [vmem:[%s300 + $0x108] sm:$0xff]
      %v344 = vld [vmem:[%s300 + $0x110] sm:$0xff]
      %v345 = vld [vmem:[%s300 + $0x118] sm:$0xff]
      %v346 = vld [vmem:[%s300 + $0x120] sm:$0xff]
      %v347 = vld [vmem:[%s300 + $0x128] sm:$0xff]
      %v348 = vld [vmem:[%s300 + $0x130] sm:$0xff]
      %v349 = vld [vmem:[%s300 + $0x138] sm:$0xff]
      %v350 = vld [vmem:[%s300 + $0x140] sm:$0xff]
      %v351 = vld [vmem:[%s300 + $0x148] sm:$0xff]
      %v352 = vld [vmem:[%s300 + $0x150] sm:$0xff]
      %v353 = vld [vmem:[%s300 + $0x158] sm:$0xff]
      %v354 = vld [vmem:[%s300 + $0x160] sm:$0xff]
      %v355 = vld [vmem:[%s300 + $0x168] sm:$0xff]
      %v356 = vld [vmem:[%s300 + $0x170] sm:$0xff]
      %v357 = vld [vmem:[%s300 + $0x178] sm:$0xff]
      %v358 = vld [vmem:[%s300 + $0x180] sm:$0xff]
      %v359 = vld [vmem:[%s300 + $0x188] sm:$0xff]
      %v360 = vld [vmem:[%s300 + $0x190] sm:$0xff]
      %v361 = vld [vmem:[%s300 + $0x198] sm:$0xff]
      %v362 = vld [vmem:[%s300 + $0x1a0] sm:$0xff]
      %v363 = vld [vmem:[%s300 + $0x1a8] sm:$0xff]
      %v364 = vld [vmem:[%s300 + $0x1b0] sm:$0xff]
      %v365 = vld [vmem:[%s300 + $0x1b8] sm:$0xff]
      %v366 = vld [vmem:[%s300 + $0x1c0] sm:$0xff]
      %v367 = vld [vmem:[%s300 + $0x1c8] sm:$0xff]
      %v368 = vld [vmem:[%s300 + $0x1d0] sm:$0xff]
      %v369 = vld [vmem:[%s300 + $0x1d8] sm:$0xff]
      %v370 = vld [vmem:[%s300 + $0x1e0] sm:$0xff]
      %v371 = vld [vmem:[%s300 + $0x1e8] sm:$0xff]
      %v372 = vld [vmem:[%s300 + $0x1f0] sm:$0xff]
      %v373 = vld [vmem:[%s300 + $0x1f8] sm:$0xff]
      %v374 = vld [vmem:[%s2] sm:$0xff]
      %v375 = vld [vmem:[%s2 + $0x8] sm:$0xff]
      %v376 = vld [vmem:[%s2 + $0x10] sm:$0xff]
      %v377 = vld [vmem:[%s2 + $0x18] sm:$0xff]
      %v378 = vld [vmem:[%s2 + $0x20] sm:$0xff]
      %v379 = vld [vmem:[%s2 + $0x28] sm:$0xff]
      %v380 = vld [vmem:[%s2 + $0x30] sm:$0xff]
      %v381 = vld [vmem:[%s2 + $0x38] sm:$0xff]
      %v382 = vld [vmem:[%s2 + $0x40] sm:$0xff]
      %v383 = vld [vmem:[%s2 + $0x48] sm:$0xff]
      %v384 = vld [vmem:[%s2 + $0x50] sm:$0xff]
      %v385 = vld [vmem:[%s2 + $0x58] sm:$0xff]
      %v386 = vld [vmem:[%s2 + $0x60] sm:$0xff]
      %v387 = vld [vmem:[%s2 + $0x68] sm:$0xff]
      %v388 = vld [vmem:[%s2 + $0x70] sm:$0xff]
      %v389 = vld [vmem:[%s2 + $0x78] sm:$0xff]
      %v390 = vld [vmem:[%s2 + $0x80] sm:$0xff]
      %v391 = vld [vmem:[%s2 + $0x88] sm:$0xff]
      %v392 = vld [vmem:[%s2 + $0x90] sm:$0xff]
      %v393 = vld [vmem:[%s2 + $0x98] sm:$0xff]
      %v394 = vld [vmem:[%s2 + $0xa0] sm:$0xff]
      %v395 = vld [vmem:[%s2 + $0xa8] sm:$0xff]
      %v396 = vld [vmem:[%s2 + $0xb0] sm:$0xff]
      %v397 = vld [vmem:[%s2 + $0xb8] sm:$0xff]
      %v398 = vld [vmem:[%s2 + $0xc0] sm:$0xff]
      %v399 = vld [vmem:[%s2 + $0xc8] sm:$0xff]
      %v400 = vld [vmem:[%s2 + $0xd0] sm:$0xff]
      %v401 = vld [vmem:[%s2 + $0xd8] sm:$0xff]
      %v402 = vld [vmem:[%s2 + $0xe0] sm:$0xff]
      %v403 = vld [vmem:[%s2 + $0xe8] sm:$0xff]
      %v404 = vld [vmem:[%s2 + $0xf0] sm:$0xff]
      %v405 = vld [vmem:[%s2 + $0xf8] sm:$0xff]
      %v406 = vld [vmem:[%s2 + $0x100] sm:$0xff]
      %v407 = vld [vmem:[%s2 + $0x108] sm:$0xff]
      %v408 = vld [vmem:[%s2 + $0x110] sm:$0xff]
      %v409 = vld [vmem:[%s2 + $0x118] sm:$0xff]
      %v410 = vld [vmem:[%s2 + $0x120] sm:$0xff]
      %v411 = vld [vmem:[%s2 + $0x128] sm:$0xff]
      %v412 = vld [vmem:[%s2 + $0x130] sm:$0xff]
      %v413 = vld [vmem:[%s2 + $0x138] sm:$0xff]
      %v414 = vld [vmem:[%s2 + $0x140] sm:$0xff]
      %v415 = vld [vmem:[%s2 + $0x148] sm:$0xff]
      %v416 = vld [vmem:[%s2 + $0x150] sm:$0xff]
      %v417 = vld [vmem:[%s2 + $0x158] sm:$0xff]
      %v418 = vld [vmem:[%s2 + $0x160] sm:$0xff]
      %v419 = vld [vmem:[%s2 + $0x168] sm:$0xff]
      %v420 = vld [vmem:[%s2 + $0x170] sm:$0xff]
      %v421 = vld [vmem:[%s2 + $0x178] sm:$0xff]
      %v422 = vld [vmem:[%s2 + $0x180] sm:$0xff]
      %v423 = vld [vmem:[%s2 + $0x188] sm:$0xff]
      %v424 = vld [vmem:[%s2 + $0x190] sm:$0xff]
      %v425 = vld [vmem:[%s2 + $0x198] sm:$0xff]
      %v426 = vld [vmem:[%s2 + $0x1a0] sm:$0xff]
      %v427 = vld [vmem:[%s2 + $0x1a8] sm:$0xff]
      %v428 = vld [vmem:[%s2 + $0x1b0] sm:$0xff]
      %v429 = vld [vmem:[%s2 + $0x1b8] sm:$0xff]
      %v430 = vld [vmem:[%s2 + $0x1c0] sm:$0xff]
      %v431 = vld [vmem:[%s2 + $0x1c8] sm:$0xff]
      %v432 = vld [vmem:[%s2 + $0x1d0] sm:$0xff]
      %v433 = vld [vmem:[%s2 + $0x1d8] sm:$0xff]
      %v434 = vld [vmem:[%s2 + $0x1e0] sm:$0xff]
      %v435 = vld [vmem:[%s2 + $0x1e8] sm:$0xff]
      %v436 = vld [vmem:[%s2 + $0x1f0] sm:$0xff]
      %v437 = vld [vmem:[%s2 + $0x1f8] sm:$0xff]
      %v438 = vld [vmem:[%s2 + $0x200] sm:$0xff]
      %v439 = vld [vmem:[%s2 + $0x208] sm:$0xff]
      %v440 = vld [vmem:[%s2 + $0x210] sm:$0xff]
      %v441 = vld [vmem:[%s2 + $0x218] sm:$0xff]
      %v442 = vld [vmem:[%s2 + $0x220] sm:$0xff]
      %v443 = vld [vmem:[%s2 + $0x228] sm:$0xff]
      %v444 = vld [vmem:[%s2 + $0x230] sm:$0xff]
      %v445 = vld [vmem:[%s2 + $0x238] sm:$0xff]
      %v446 = vld [vmem:[%s2 + $0x240] sm:$0xff]
      %v447 = vld [vmem:[%s2 + $0x248] sm:$0xff]
      %v448 = vld [vmem:[%s2 + $0x250] sm:$0xff]
      %v449 = vld [vmem:[%s2 + $0x258] sm:$0xff]
      %v450 = vld [vmem:[%s2 + $0x260] sm:$0xff]
      %v451 = vld [vmem:[%s2 + $0x268] sm:$0xff]
      %v452 = vld [vmem:[%s2 + $0x270] sm:$0xff]
      %v453 = vld [vmem:[%s2 + $0x278] sm:$0xff]
      %v454 = vld [vmem:[%s2 + $0x280] sm:$0xff]
      %v455 = vld [vmem:[%s2 + $0x288] sm:$0xff]
      %v456 = vld [vmem:[%s2 + $0x290] sm:$0xff]
      %v457 = vld [vmem:[%s2 + $0x298] sm:$0xff]
      %v458 = vld [vmem:[%s2 + $0x2a0] sm:$0xff]
      %v459 = vld [vmem:[%s2 + $0x2a8] sm:$0xff]
      %v460 = vld [vmem:[%s2 + $0x2b0] sm:$0xff]
      %v461 = vld [vmem:[%s2 + $0x2b8] sm:$0xff]
      %v462 = vld [vmem:[%s2 + $0x2c0] sm:$0xff]
      %v463 = vld [vmem:[%s2 + $0x2c8] sm:$0xff]
      %v464 = vld [vmem:[%s2 + $0x2d0] sm:$0xff]
      %v465 = vld [vmem:[%s2 + $0x2d8] sm:$0xff]
      %v466 = vld [vmem:[%s2 + $0x2e0] sm:$0xff]
      %v467 = vld [vmem:[%s2 + $0x2e8] sm:$0xff]
      %v468 = vld [vmem:[%s2 + $0x2f0] sm:$0xff]
      %v469 = vld [vmem:[%s2 + $0x2f8] sm:$0xff]
      %v470 = vld [vmem:[%s2 + $0x300] sm:$0xff]
      %v471 = vld [vmem:[%s2 + $0x308] sm:$0xff]
      %v472 = vld [vmem:[%s2 + $0x310] sm:$0xff]
      %v473 = vld [vmem:[%s2 + $0x318] sm:$0xff]
      %v474 = vld [vmem:[%s2 + $0x320] sm:$0xff]
      %v475 = vld [vmem:[%s2 + $0x328] sm:$0xff]
      %v476 = vld [vmem:[%s2 + $0x330] sm:$0xff]
      %v477 = vld [vmem:[%s2 + $0x338] sm:$0xff]
      %v478 = vld [vmem:[%s2 + $0x340] sm:$0xff]
      %v479 = vld [vmem:[%s2 + $0x348] sm:$0xff]
      %v480 = vld [vmem:[%s2 + $0x350] sm:$0xff]
      %v481 = vld [vmem:[%s2 + $0x358] sm:$0xff]
      %v482 = vld [vmem:[%s2 + $0x360] sm:$0xff]
      %v483 = vld [vmem:[%s2 + $0x368] sm:$0xff]
      %v484 = vld [vmem:[%s2 + $0x370] sm:$0xff]
      %v485 = vld [vmem:[%s2 + $0x378] sm:$0xff]
      %v486 = vld [vmem:[%s2 + $0x380] sm:$0xff]
      %v487 = vld [vmem:[%s2 + $0x388] sm:$0xff]
      %v488 = vld [vmem:[%s2 + $0x390] sm:$0xff]
      %v489 = vld [vmem:[%s2 + $0x398] sm:$0xff]
      %v490 = vld [vmem:[%s2 + $0x3a0] sm:$0xff]
      %v491 = vld [vmem:[%s2 + $0x3a8] sm:$0xff]
      %v492 = vld [vmem:[%s2 + $0x3b0] sm:$0xff]
      %v493 = vld [vmem:[%s2 + $0x3b8] sm:$0xff]
      %v494 = vld [vmem:[%s2 + $0x3c0] sm:$0xff]
      %v495 = vld [vmem:[%s2 + $0x3c8] sm:$0xff]
      %v496 = vld [vmem:[%s2 + $0x3d0] sm:$0xff]
      %v497 = vld [vmem:[%s2 + $0x3d8] sm:$0xff]
      %v498 = vld [vmem:[%s2 + $0x3e0] sm:$0xff]
      %v499 = vld [vmem:[%s2 + $0x3e8] sm:$0xff]
      %v500 = vld [vmem:[%s2 + $0x3f0] sm:$0xff]
      %v501 = vld [vmem:[%s2 + $0x3f8] sm:$0xff]
      %v502 = vld [vmem:[%s2 + $0x400] sm:$0xff]
      %v503 = vld [vmem:[%s2 + $0x408] sm:$0xff]
      %v504 = vld [vmem:[%s2 + $0x410] sm:$0xff]
      %v505 = vld [vmem:[%s2 + $0x418] sm:$0xff]
      %v506 = vld [vmem:[%s2 + $0x420] sm:$0xff]
      %v507 = vld [vmem:[%s2 + $0x428] sm:$0xff]
      %v508 = vld [vmem:[%s2 + $0x430] sm:$0xff]
      %v509 = vld [vmem:[%s2 + $0x438] sm:$0xff]
      %v510 = vld [vmem:[%s2 + $0x440] sm:$0xff]
      %v511 = vld [vmem:[%s2 + $0x448] sm:$0xff]
      %v512 = vld [vmem:[%s2 + $0x450] sm:$0xff]
      %v513 = vld [vmem:[%s2 + $0x458] sm:$0xff]
      %v514 = vld [vmem:[%s2 + $0x460] sm:$0xff]
      %v515 = vld [vmem:[%s2 + $0x468] sm:$0xff]
      %v516 = vld [vmem:[%s2 + $0x470] sm:$0xff]
      %v517 = vld [vmem:[%s2 + $0x478] sm:$0xff]
      %518 = vmatprep.subr.mxu0 %v311
      %519 = vmatpush1.msra.mxu0 %v310
      %520 = vmatprep.subr.mxu0 %v313
      %521 = vmatpush1.msra.mxu0 %v312
      %522 = vmatprep.subr.mxu0 %v315
      %523 = vmatpush1.msra.mxu0 %v314
      %524 = vmatprep.subr.mxu0 %v317
      %525 = vmatpush1.msra.mxu0 %v316
      %526 = vmatprep.subr.mxu0 %v319
      %527 = vmatpush1.msra.mxu0 %v318
      %528 = vmatprep.subr.mxu0 %v321
      %529 = vmatpush1.msra.mxu0 %v320
      %530 = vmatprep.subr.mxu0 %v323
      %531 = vmatpush1.msra.mxu0 %v322
      %532 = vmatprep.subr.mxu0 %v325
      %533 = vmatpush1.msra.mxu0 %v324
      %534 = vmatprep.subr.mxu0 %v327
      %535 = vmatpush1.msra.mxu0 %v326
      %536 = vmatprep.subr.mxu0 %v329
      %537 = vmatpush1.msra.mxu0 %v328
      %538 = vmatprep.subr.mxu0 %v331
      %539 = vmatpush1.msra.mxu0 %v330
      %540 = vmatprep.subr.mxu0 %v333
      %541 = vmatpush1.msra.mxu0 %v332
      %542 = vmatprep.subr.mxu0 %v335
      %543 = vmatpush1.msra.mxu0 %v334
      %544 = vmatprep.subr.mxu0 %v337
      %545 = vmatpush1.msra.mxu0 %v336
      %546 = vmatprep.subr.mxu0 %v339
      %547 = vmatpush1.msra.mxu0 %v338
      %548 = vmatprep.subr.mxu0 %v341
      %549 = vmatpush1.msra.mxu0 %v340
      %550 = vmatprep.subr.mxu0 %v343
      %551 = vmatpush1.msra.mxu0 %v342
      %552 = vmatprep.subr.mxu0 %v345
      %553 = vmatpush1.msra.mxu0 %v344
      %554 = vmatprep.subr.mxu0 %v347
      %555 = vmatpush1.msra.mxu0 %v346
      %556 = vmatprep.subr.mxu0 %v349
      %557 = vmatpush1.msra.mxu0 %v348
      %558 = vmatprep.subr.mxu0 %v351
      %559 = vmatpush1.msra.mxu0 %v350
      %560 = vmatprep.subr.mxu0 %v353
      %561 = vmatpush1.msra.mxu0 %v352
      %562 = vmatprep.subr.mxu0 %v355
      %563 = vmatpush1.msra.mxu0 %v354
      %564 = vmatprep.subr.mxu0 %v357
      %565 = vmatpush1.msra.mxu0 %v356
      %566 = vmatprep.subr.mxu0 %v359
      %567 = vmatpush1.msra.mxu0 %v358
      %568 = vmatprep.subr.mxu0 %v361
      %569 = vmatpush1.msra.mxu0 %v360
      %570 = vmatprep.subr.mxu0 %v363
      %571 = vmatpush1.msra.mxu0 %v362
      %572 = vmatprep.subr.mxu0 %v365
      %573 = vmatpush1.msra.mxu0 %v364
      %574 = vmatprep.subr.mxu0 %v367
      %575 = vmatpush1.msra.mxu0 %v366
      %576 = vmatprep.subr.mxu0 %v369
      %577 = vmatpush1.msra.mxu0 %v368
      %578 = vmatprep.subr.mxu0 %v371
      %579 = vmatpush1.msra.mxu0 %v370
      %580 = vmatprep.subr.mxu0 %v373
      %581 = vmatpush1.msra.mxu0 %v372
      %582 = vmatprep.mubr.f32.mxu0 %v375
      %583 = vmatmul.mubr.f32.gmra.mrb[0].mxu0 %v374
      %v584 = vpop.f32.mrb[0].mxu0
      %v585 = vadd.f32 0.0, %v584
      %v586 = vpop.f32.mrb[0].mxu0
      %v587 = vadd.f32 0.0, %v586
      %588 = vmatprep.mubr.f32.mxu0 %v377
      %589 = vmatmul.mubr.f32.gmra.mrb[0].mxu0 %v376
      %v590 = vpop.f32.mrb[0].mxu0
      %v591 = vadd.f32 0.0, %v590
      %v592 = vpop.f32.mrb[0].mxu0
      %v593 = vadd.f32 0.0, %v592
      %594 = vmatprep.mubr.f32.mxu0 %v379
      %595 = vmatmul.mubr.f32.gmra.mrb[0].mxu0 %v378
      %v596 = vpop.f32.mrb[0].mxu0
      %v597 = vadd.f32 0.0, %v596
      %v598 = vpop.f32.mrb[0].mxu0
      %v599 = vadd.f32 0.0, %v598
      %600 = vmatprep.mubr.f32.mxu0 %v381
      %601 = vmatmul.mubr.f32.gmra.mrb[0].mxu0 %v380
      %v602 = vpop.f32.mrb[0].mxu0
      %v603 = vadd.f32 0.0, %v602
      %v604 = vpop.f32.mrb[0].mxu0
      %v605 = vadd.f32 0.0, %v604
      %606 = vmatprep.mubr.f32.mxu0 %v383
      %607 = vmatmul.mubr.f32.gmra.mrb[0].mxu0 %v382
      %v608 = vpop.f32.mrb[0].mxu0
      %v609 = vadd.f32 0.0, %v608
      %v610 = vpop.f32.mrb[0].mxu0
      %v611 = vadd.f32 0.0, %v610
      %612 = vmatprep.mubr.f32.mxu0 %v385
      %613 = vmatmul.mubr.f32.gmra.mrb[0].mxu0 %v384
      %v614 = vpop.f32.mrb[0].mxu0
      %v615 = vadd.f32 0.0, %v614
      %v616 = vpop.f32.mrb[0].mxu0
      %v617 = vadd.f32 0.0, %v616
      %618 = vmatprep.mubr.f32.mxu0 %v387
      %619 = vmatmul.mubr.f32.gmra.mrb[0].mxu0 %v386
      %v620 = vpop.f32.mrb[0].mxu0
      %v621 = vadd.f32 0.0, %v620
      %v622 = vpop.f32.mrb[0].mxu0
      %v623 = vadd.f32 0.0, %v622
      %624 = vmatprep.mubr.f32.mxu0 %v389
      %625 = vmatmul.mubr.f32.gmra.mrb[0].mxu0 %v388
      %v626 = vpop.f32.mrb[0].mxu0
      %v627 = vadd.f32 0.0, %v626
      %v628 = vpop.f32.mrb[0].mxu0
      %v629 = vadd.f32 0.0, %v628
      %630 = vmatprep.mubr.f32.mxu0 %v391
      %631 = vmatmul.mubr.f32.gmra.mrb[0].mxu0 %v390
      %v632 = vpop.f32.mrb[0].mxu0
      %v633 = vadd.f32 0.0, %v632
      %v634 = vpop.f32.mrb[0].mxu0
      %v635 = vadd.f32 0.0, %v634
      %636 = vmatprep.mubr.f32.mxu0 %v393
      %637 = vmatmul.mubr.f32.gmra.mrb[0].mxu0 %v392
      %v638 = vpop.f32.mrb[0].mxu0
      %v639 = vadd.f32 0.0, %v638
      %v640 = vpop.f32.mrb[0].mxu0
      %v641 = vadd.f32 0.0, %v640
      %642 = vmatprep.mubr.f32.mxu0 %v395
      %643 = vmatmul.mubr.f32.gmra.mrb[0].mxu0 %v394
      %v644 = vpop.f32.mrb[0].mxu0
      %v645 = vadd.f32 0.0, %v644
      %v646 = vpop.f32.mrb[0].mxu0
      %v647 = vadd.f32 0.0, %v646
      %648 = vmatprep.mubr.f32.mxu0 %v397
      %649 = vmatmul.mubr.f32.gmra.mrb[0].mxu0 %v396
      %v650 = vpop.f32.mrb[0].mxu0
      %v651 = vadd.f32 0.0, %v650
      %v652 = vpop.f32.mrb[0].mxu0
      %v653 = vadd.f32 0.0, %v652
      %654 = vmatprep.mubr.f32.mxu0 %v399
      %655 = vmatmul.mubr.f32.gmra.mrb[0].mxu0 %v398
      %v656 = vpop.f32.mrb[0].mxu0
      %v657 = vadd.f32 0.0, %v656
      %v658 = vpop.f32.mrb[0].mxu0
      %v659 = vadd.f32 0.0, %v658
      %660 = vmatprep.mubr.f32.mxu0 %v401
      %661 = vmatmul.mubr.f32.gmra.mrb[0].mxu0 %v400
      %v662 = vpop.f32.mrb[0].mxu0
      %v663 = vadd.f32 0.0, %v662
      %v664 = vpop.f32.mrb[0].mxu0
      %v665 = vadd.f32 0.0, %v664
      %666 = vmatprep.mubr.f32.mxu0 %v403
      %667 = vmatmul.mubr.f32.gmra.mrb[0].mxu0 %v402
      %v668 = vpop.f32.mrb[0].mxu0
      %v669 = vadd.f32 0.0, %v668
      %v670 = vpop.f32.mrb[0].mxu0
      %v671 = vadd.f32 0.0, %v670
      %672 = vmatprep.mubr.f32.mxu0 %v405
      %673 = vmatmul.mubr.f32.gmra.mrb[0].mxu0 %v404
      %v674 = vpop.f32.mrb[0].mxu0
      %v675 = vadd.f32 0.0, %v674
      %v676 = vpop.f32.mrb[0].mxu0
      %v677 = vadd.f32 0.0, %v676
      %678 = vmatprep.mubr.f32.mxu0 %v407
      %679 = vmatmul.mubr.f32.gmra.mrb[0].mxu0 %v406
      %v680 = vpop.f32.mrb[0].mxu0
      %v681 = vadd.f32 0.0, %v680
      %v682 = vpop.f32.mrb[0].mxu0
      %v683 = vadd.f32 0.0, %v682
      %684 = vmatprep.mubr.f32.mxu0 %v409
      %685 = vmatmul.mubr.f32.gmra.mrb[0].mxu0 %v408
      %v686 = vpop.f32.mrb[0].mxu0
      %v687 = vadd.f32 0.0, %v686
      %v688 = vpop.f32.mrb[0].mxu0
      %v689 = vadd.f32 0.0, %v688
      %690 = vmatprep.mubr.f32.mxu0 %v411
      %691 = vmatmul.mubr.f32.gmra.mrb[0].mxu0 %v410
      %v692 = vpop.f32.mrb[0].mxu0
      %v693 = vadd.f32 0.0, %v692
      %v694 = vpop.f32.mrb[0].mxu0
      %v695 = vadd.f32 0.0, %v694
      %696 = vmatprep.mubr.f32.mxu0 %v413
      %697 = vmatmul.mubr.f32.gmra.mrb[0].mxu0 %v412
      %v698 = vpop.f32.mrb[0].mxu0
      %v699 = vadd.f32 0.0, %v698
      %v700 = vpop.f32.mrb[0].mxu0
      %v701 = vadd.f32 0.0, %v700
      %702 = vmatprep.mubr.f32.mxu0 %v415
      %703 = vmatmul.mubr.f32.gmra.mrb[0].mxu0 %v414
      %v704 = vpop.f32.mrb[0].mxu0
      %v705 = vadd.f32 0.0, %v704
      %v706 = vpop.f32.mrb[0].mxu0
      %v707 = vadd.f32 0.0, %v706
      %708 = vmatprep.mubr.f32.mxu0 %v417
      %709 = vmatmul.mubr.f32.gmra.mrb[0].mxu0 %v416
      %v710 = vpop.f32.mrb[0].mxu0
      %v711 = vadd.f32 0.0, %v710
      %v712 = vpop.f32.mrb[0].mxu0
      %v713 = vadd.f32 0.0, %v712
      %714 = vmatprep.mubr.f32.mxu0 %v419
      %715 = vmatmul.mubr.f32.gmra.mrb[0].mxu0 %v418
      %v716 = vpop.f32.mrb[0].mxu0
      %v717 = vadd.f32 0.0, %v716
      %v718 = vpop.f32.mrb[0].mxu0
      %v719 = vadd.f32 0.0, %v718
      %720 = vmatprep.mubr.f32.mxu0 %v421
      %721 = vmatmul.mubr.f32.gmra.mrb[0].mxu0 %v420
      %v722 = vpop.f32.mrb[0].mxu0
      %v723 = vadd.f32 0.0, %v722
      %v724 = vpop.f32.mrb[0].mxu0
      %v725 = vadd.f32 0.0, %v724
      %726 = vmatprep.mubr.f32.mxu0 %v423
      %727 = vmatmul.mubr.f32.gmra.mrb[0].mxu0 %v422
      %v728 = vpop.f32.mrb[0].mxu0
      %v729 = vadd.f32 0.0, %v728
      %v730 = vpop.f32.mrb[0].mxu0
      %v731 = vadd.f32 0.0, %v730
      %732 = vmatprep.mubr.f32.mxu0 %v425
      %733 = vmatmul.mubr.f32.gmra.mrb[0].mxu0 %v424
      %v734 = vpop.f32.mrb[0].mxu0
      %v735 = vadd.f32 0.0, %v734
      %v736 = vpop.f32.mrb[0].mxu0
      %v737 = vadd.f32 0.0, %v736
      %738 = vmatprep.mubr.f32.mxu0 %v427
      %739 = vmatmul.mubr.f32.gmra.mrb[0].mxu0 %v426
      %v740 = vpop.f32.mrb[0].mxu0
      %v741 = vadd.f32 0.0, %v740
      %v742 = vpop.f32.mrb[0].mxu0
      %v743 = vadd.f32 0.0, %v742
      %744 = vmatprep.mubr.f32.mxu0 %v429
      %745 = vmatmul.mubr.f32.gmra.mrb[0].mxu0 %v428
      %v746 = vpop.f32.mrb[0].mxu0
      %v747 = vadd.f32 0.0, %v746
      %v748 = vpop.f32.mrb[0].mxu0
      %v749 = vadd.f32 0.0, %v748
      %750 = vmatprep.mubr.f32.mxu0 %v431
      %751 = vmatmul.mubr.f32.gmra.mrb[0].mxu0 %v430
      %v752 = vpop.f32.mrb[0].mxu0
      %v753 = vadd.f32 0.0, %v752
      %v754 = vpop.f32.mrb[0].mxu0
      %v755 = vadd.f32 0.0, %v754
      %756 = vmatprep.mubr.f32.mxu0 %v433
      %757 = vmatmul.mubr.f32.gmra.mrb[0].mxu0 %v432
      %v758 = vpop.f32.mrb[0].mxu0
      %v759 = vadd.f32 0.0, %v758
      %v760 = vpop.f32.mrb[0].mxu0
      %v761 = vadd.f32 0.0, %v760
      %762 = vmatprep.mubr.f32.mxu0 %v435
      %763 = vmatmul.mubr.f32.gmra.mrb[0].mxu0 %v434
      %v764 = vpop.f32.mrb[0].mxu0
      %v765 = vadd.f32 0.0, %v764
      %v766 = vpop.f32.mrb[0].mxu0
      %v767 = vadd.f32 0.0, %v766
      %768 = vmatprep.mubr.f32.mxu0 %v437
      %769 = vmatmul.mubr.f32.gmra.mrb[0].mxu0 %v436
      %v770 = vpop.f32.mrb[0].mxu0
      %v771 = vadd.f32 0.0, %v770
      %v772 = vpop.f32.mrb[0].mxu0
      %v773 = vadd.f32 0.0, %v772
      %774 = vmatprep.mubr.f32.mxu0 %v439
      %775 = vmatmul.mubr.f32.gmra.mrb[0].mxu0 %v438
      %v776 = vpop.f32.mrb[0].mxu0
      %v777 = vadd.f32 0.0, %v776
      %v778 = vpop.f32.mrb[0].mxu0
      %v779 = vadd.f32 0.0, %v778
      %780 = vmatprep.mubr.f32.mxu0 %v441
      %781 = vmatmul.mubr.f32.gmra.mrb[0].mxu0 %v440
      %v782 = vpop.f32.mrb[0].mxu0
      %v783 = vadd.f32 0.0, %v782
      %v784 = vpop.f32.mrb[0].mxu0
      %v785 = vadd.f32 0.0, %v784
      %786 = vmatprep.mubr.f32.mxu0 %v443
      %787 = vmatmul.mubr.f32.gmra.mrb[0].mxu0 %v442
      %v788 = vpop.f32.mrb[0].mxu0
      %v789 = vadd.f32 0.0, %v788
      %v790 = vpop.f32.mrb[0].mxu0
      %v791 = vadd.f32 0.0, %v790
      %792 = vmatprep.mubr.f32.mxu0 %v445
      %793 = vmatmul.mubr.f32.gmra.mrb[0].mxu0 %v444
      %v794 = vpop.f32.mrb[0].mxu0
      %v795 = vadd.f32 0.0, %v794
      %v796 = vpop.f32.mrb[0].mxu0
      %v797 = vadd.f32 0.0, %v796
      %798 = vmatprep.mubr.f32.mxu0 %v447
      %799 = vmatmul.mubr.f32.gmra.mrb[0].mxu0 %v446
      %v800 = vpop.f32.mrb[0].mxu0
      %v801 = vadd.f32 0.0, %v800
      %v802 = vpop.f32.mrb[0].mxu0
      %v803 = vadd.f32 0.0, %v802
      %804 = vmatprep.mubr.f32.mxu0 %v449
      %805 = vmatmul.mubr.f32.gmra.mrb[0].mxu0 %v448
      %v806 = vpop.f32.mrb[0].mxu0
      %v807 = vadd.f32 0.0, %v806
      %v808 = vpop.f32.mrb[0].mxu0
      %v809 = vadd.f32 0.0, %v808
      %810 = vmatprep.mubr.f32.mxu0 %v451
      %811 = vmatmul.mubr.f32.gmra.mrb[0].mxu0 %v450
      %v812 = vpop.f32.mrb[0].mxu0
      %v813 = vadd.f32 0.0, %v812
      %v814 = vpop.f32.mrb[0].mxu0
      %v815 = vadd.f32 0.0, %v814
      %816 = vmatprep.mubr.f32.mxu0 %v453
      %817 = vmatmul.mubr.f32.gmra.mrb[0].mxu0 %v452
      %v818 = vpop.f32.mrb[0].mxu0
      %v819 = vadd.f32 0.0, %v818
      %v820 = vpop.f32.mrb[0].mxu0
      %v821 = vadd.f32 0.0, %v820
      %822 = vmatprep.mubr.f32.mxu0 %v455
      %823 = vmatmul.mubr.f32.gmra.mrb[0].mxu0 %v454
      %v824 = vpop.f32.mrb[0].mxu0
      %v825 = vadd.f32 0.0, %v824
      %v826 = vpop.f32.mrb[0].mxu0
      %v827 = vadd.f32 0.0, %v826
      %828 = vmatprep.mubr.f32.mxu0 %v457
      %829 = vmatmul.mubr.f32.gmra.mrb[0].mxu0 %v456
      %v830 = vpop.f32.mrb[0].mxu0
      %v831 = vadd.f32 0.0, %v830
      %v832 = vpop.f32.mrb[0].mxu0
      %v833 = vadd.f32 0.0, %v832
      %834 = vmatprep.mubr.f32.mxu0 %v459
      %835 = vmatmul.mubr.f32.gmra.mrb[0].mxu0 %v458
      %v836 = vpop.f32.mrb[0].mxu0
      %v837 = vadd.f32 0.0, %v836
      %v838 = vpop.f32.mrb[0].mxu0
      %v839 = vadd.f32 0.0, %v838
      %840 = vmatprep.mubr.f32.mxu0 %v461
      %841 = vmatmul.mubr.f32.gmra.mrb[0].mxu0 %v460
      %v842 = vpop.f32.mrb[0].mxu0
      %v843 = vadd.f32 0.0, %v842
      %v844 = vpop.f32.mrb[0].mxu0
      %v845 = vadd.f32 0.0, %v844
      %846 = vmatprep.mubr.f32.mxu0 %v463
      %847 = vmatmul.mubr.f32.gmra.mrb[0].mxu0 %v462
      %v848 = vpop.f32.mrb[0].mxu0
      %v849 = vadd.f32 0.0, %v848
      %v850 = vpop.f32.mrb[0].mxu0
      %v851 = vadd.f32 0.0, %v850
      %852 = vmatprep.mubr.f32.mxu0 %v465
      %853 = vmatmul.mubr.f32.gmra.mrb[0].mxu0 %v464
      %v854 = vpop.f32.mrb[0].mxu0
      %v855 = vadd.f32 0.0, %v854
      %v856 = vpop.f32.mrb[0].mxu0
      %v857 = vadd.f32 0.0, %v856
      %858 = vmatprep.mubr.f32.mxu0 %v467
      %859 = vmatmul.mubr.f32.gmra.mrb[0].mxu0 %v466
      %v860 = vpop.f32.mrb[0].mxu0
      %v861 = vadd.f32 0.0, %v860
      %v862 = vpop.f32.mrb[0].mxu0
      %v863 = vadd.f32 0.0, %v862
      %864 = vmatprep.mubr.f32.mxu0 %v469
      %865 = vmatmul.mubr.f32.gmra.mrb[0].mxu0 %v468
      %v866 = vpop.f32.mrb[0].mxu0
      %v867 = vadd.f32 0.0, %v866
      %v868 = vpop.f32.mrb[0].mxu0
      %v869 = vadd.f32 0.0, %v868
      %870 = vmatprep.mubr.f32.mxu0 %v471
      %871 = vmatmul.mubr.f32.gmra.mrb[0].mxu0 %v470
      %v872 = vpop.f32.mrb[0].mxu0
      %v873 = vadd.f32 0.0, %v872
      %v874 = vpop.f32.mrb[0].mxu0
      %v875 = vadd.f32 0.0, %v874
      %876 = vmatprep.mubr.f32.mxu0 %v473
      %877 = vmatmul.mubr.f32.gmra.mrb[0].mxu0 %v472
      %v878 = vpop.f32.mrb[0].mxu0
      %v879 = vadd.f32 0.0, %v878
      %v880 = vpop.f32.mrb[0].mxu0
      %v881 = vadd.f32 0.0, %v880
      %882 = vmatprep.mubr.f32.mxu0 %v475
      %883 = vmatmul.mubr.f32.gmra.mrb[0].mxu0 %v474
      %v884 = vpop.f32.mrb[0].mxu0
      %v885 = vadd.f32 0.0, %v884
      %v886 = vpop.f32.mrb[0].mxu0
      %v887 = vadd.f32 0.0, %v886
      %888 = vmatprep.mubr.f32.mxu0 %v477
      %889 = vmatmul.mubr.f32.gmra.mrb[0].mxu0 %v476
      %v890 = vpop.f32.mrb[0].mxu0
      %v891 = vadd.f32 0.0, %v890
      %v892 = vpop.f32.mrb[0].mxu0
      %v893 = vadd.f32 0.0, %v892
      %894 = vmatprep.mubr.f32.mxu0 %v479
      %895 = vmatmul.mubr.f32.gmra.mrb[0].mxu0 %v478
      %v896 = vpop.f32.mrb[0].mxu0
      %v897 = vadd.f32 0.0, %v896
      %v898 = vpop.f32.mrb[0].mxu0
      %v899 = vadd.f32 0.0, %v898
      %900 = vmatprep.mubr.f32.mxu0 %v481
      %901 = vmatmul.mubr.f32.gmra.mrb[0].mxu0 %v480
      %v902 = vpop.f32.mrb[0].mxu0
      %v903 = vadd.f32 0.0, %v902
      %v904 = vpop.f32.mrb[0].mxu0
      %v905 = vadd.f32 0.0, %v904
      %906 = vmatprep.mubr.f32.mxu0 %v483
      %907 = vmatmul.mubr.f32.gmra.mrb[0].mxu0 %v482
      %v908 = vpop.f32.mrb[0].mxu0
      %v909 = vadd.f32 0.0, %v908
      %v910 = vpop.f32.mrb[0].mxu0
      %v911 = vadd.f32 0.0, %v910
      %912 = vmatprep.mubr.f32.mxu0 %v485
      %913 = vmatmul.mubr.f32.gmra.mrb[0].mxu0 %v484
      %v914 = vpop.f32.mrb[0].mxu0
      %v915 = vadd.f32 0.0, %v914
      %v916 = vpop.f32.mrb[0].mxu0
      %v917 = vadd.f32 0.0, %v916
      %918 = vmatprep.mubr.f32.mxu0 %v487
      %919 = vmatmul.mubr.f32.gmra.mrb[0].mxu0 %v486
      %v920 = vpop.f32.mrb[0].mxu0
      %v921 = vadd.f32 0.0, %v920
      %v922 = vpop.f32.mrb[0].mxu0
      %v923 = vadd.f32 0.0, %v922
      %924 = vmatprep.mubr.f32.mxu0 %v489
      %925 = vmatmul.mubr.f32.gmra.mrb[0].mxu0 %v488
      %v926 = vpop.f32.mrb[0].mxu0
      %v927 = vadd.f32 0.0, %v926
      %v928 = vpop.f32.mrb[0].mxu0
      %v929 = vadd.f32 0.0, %v928
      %930 = vmatprep.mubr.f32.mxu0 %v491
      %931 = vmatmul.mubr.f32.gmra.mrb[0].mxu0 %v490
      %v932 = vpop.f32.mrb[0].mxu0
      %v933 = vadd.f32 0.0, %v932
      %v934 = vpop.f32.mrb[0].mxu0
      %v935 = vadd.f32 0.0, %v934
      %936 = vmatprep.mubr.f32.mxu0 %v493
      %937 = vmatmul.mubr.f32.gmra.mrb[0].mxu0 %v492
      %v938 = vpop.f32.mrb[0].mxu0
      %v939 = vadd.f32 0.0, %v938
      %v940 = vpop.f32.mrb[0].mxu0
      %v941 = vadd.f32 0.0, %v940
      %942 = vmatprep.mubr.f32.mxu0 %v495
      %943 = vmatmul.mubr.f32.gmra.mrb[0].mxu0 %v494
      %v944 = vpop.f32.mrb[0].mxu0
      %v945 = vadd.f32 0.0, %v944
      %v946 = vpop.f32.mrb[0].mxu0
      %v947 = vadd.f32 0.0, %v946
      %948 = vmatprep.mubr.f32.mxu0 %v497
      %949 = vmatmul.mubr.f32.gmra.mrb[0].mxu0 %v496
      %v950 = vpop.f32.mrb[0].mxu0
      %v951 = vadd.f32 0.0, %v950
      %v952 = vpop.f32.mrb[0].mxu0
      %v953 = vadd.f32 0.0, %v952
      %954 = vmatprep.mubr.f32.mxu0 %v499
      %955 = vmatmul.mubr.f32.gmra.mrb[0].mxu0 %v498
      %v956 = vpop.f32.mrb[0].mxu0
      %v957 = vadd.f32 0.0, %v956
      %v958 = vpop.f32.mrb[0].mxu0
      %v959 = vadd.f32 0.0, %v958
      %960 = vmatprep.mubr.f32.mxu0 %v501
      %961 = vmatmul.mubr.f32.gmra.mrb[0].mxu0 %v500
      %v962 = vpop.f32.mrb[0].mxu0
      %v963 = vadd.f32 0.0, %v962
      %v964 = vpop.f32.mrb[0].mxu0
      %v965 = vadd.f32 0.0, %v964
      %966 = vmatprep.mubr.f32.mxu0 %v503
      %967 = vmatmul.mubr.f32.gmra.mrb[0].mxu0 %v502
      %v968 = vpop.f32.mrb[0].mxu0
      %v969 = vadd.f32 0.0, %v968
      %v970 = vpop.f32.mrb[0].mxu0
      %v971 = vadd.f32 0.0, %v970
      %972 = vmatprep.mubr.f32.mxu0 %v505
      %973 = vmatmul.mubr.f32.gmra.mrb[0].mxu0 %v504
      %v974 = vpop.f32.mrb[0].mxu0
      %v975 = vadd.f32 0.0, %v974
      %v976 = vpop.f32.mrb[0].mxu0
      %v977 = vadd.f32 0.0, %v976
      %978 = vmatprep.mubr.f32.mxu0 %v507
      %979 = vmatmul.mubr.f32.gmra.mrb[0].mxu0 %v506
      %v980 = vpop.f32.mrb[0].mxu0
      %v981 = vadd.f32 0.0, %v980
      %v982 = vpop.f32.mrb[0].mxu0
      %v983 = vadd.f32 0.0, %v982
      %984 = vmatprep.mubr.f32.mxu0 %v509
      %985 = vmatmul.mubr.f32.gmra.mrb[0].mxu0 %v508
      %v986 = vpop.f32.mrb[0].mxu0
      %v987 = vadd.f32 0.0, %v986
      %v988 = vpop.f32.mrb[0].mxu0
      %v989 = vadd.f32 0.0, %v988
      %990 = vmatprep.mubr.f32.mxu0 %v511
      %991 = vmatmul.mubr.f32.gmra.mrb[0].mxu0 %v510
      %v992 = vpop.f32.mrb[0].mxu0
      %v993 = vadd.f32 0.0, %v992
      %v994 = vpop.f32.mrb[0].mxu0
      %v995 = vadd.f32 0.0, %v994
      %996 = vmatprep.mubr.f32.mxu0 %v513
      %997 = vmatmul.mubr.f32.gmra.mrb[0].mxu0 %v512
      %v998 = vpop.f32.mrb[0].mxu0
      %v999 = vadd.f32 0.0, %v998
      %v1000 = vpop.f32.mrb[0].mxu0
      %v1001 = vadd.f32 0.0, %v1000
      %1002 = vmatprep.mubr.f32.mxu0 %v515
      %1003 = vmatmul.mubr.f32.gmra.mrb[0].mxu0 %v514
      %v1004 = vpop.f32.mrb[0].mxu0
      %v1005 = vadd.f32 0.0, %v1004
      %v1006 = vpop.f32.mrb[0].mxu0
      %v1007 = vadd.f32 0.0, %v1006
      %1008 = vmatprep.mubr.f32.mxu0 %v517
      %1009 = vmatmul.mubr.f32.gmra.mrb[0].mxu0 %v516
      %v1010 = vpop.f32.mrb[0].mxu0
      %v1011 = vadd.f32 0.0, %v1010
      %v1012 = vpop.f32.mrb[0].mxu0
      %v1013 = vadd.f32 0.0, %v1012
      %1014 = vdwg.mxu0
      %1015 = vrot.lane.b32.xlu0 %v585, 17
      %v1016 = vpop.permute.xlu0 %1015
      %1017 = vrot.lane.b32.xlu0 %v591, 17
      %v1018 = vpop.permute.xlu0 %1017
      %1019 = vrot.lane.b32.xlu0 %v597, 17
      %v1020 = vpop.permute.xlu0 %1019
      %1021 = vrot.lane.b32.xlu0 %v603, 17
      %v1022 = vpop.permute.xlu0 %1021
      %1023 = vrot.lane.b32.xlu0 %v609, 17
      %v1024 = vpop.permute.xlu0 %1023
      %1025 = vrot.lane.b32.xlu0 %v615, 17
      %v1026 = vpop.permute.xlu0 %1025
      %1027 = vrot.lane.b32.xlu0 %v621, 17
      %v1028 = vpop.permute.xlu0 %1027
      %1029 = vrot.lane.b32.xlu0 %v627, 17
      %v1030 = vpop.permute.xlu0 %1029
      %1031 = vrot.lane.b32.xlu0 %v587, 17
      %v1032 = vpop.permute.xlu0 %1031
      %1033 = vrot.lane.b32.xlu0 %v593, 17
      %v1034 = vpop.permute.xlu0 %1033
      %1035 = vrot.lane.b32.xlu0 %v599, 17
      %v1036 = vpop.permute.xlu0 %1035
      %1037 = vrot.lane.b32.xlu0 %v605, 17
      %v1038 = vpop.permute.xlu0 %1037
      %1039 = vrot.lane.b32.xlu0 %v611, 17
      %v1040 = vpop.permute.xlu0 %1039
      %1041 = vrot.lane.b32.xlu0 %v617, 17
      %v1042 = vpop.permute.xlu0 %1041
      %1043 = vrot.lane.b32.xlu0 %v623, 17
      %v1044 = vpop.permute.xlu0 %1043
      %1045 = vrot.lane.b32.xlu0 %v629, 17
      %v1046 = vpop.permute.xlu0 %1045
      %v1047 = vlaneseq
      %v1048 = vand.u32 %v1047, 127
      %vm1049 = vcmp.lt.s32.totalorder %v1048, 17
      %v1050 = vsel %vm1049, %v1016, %v1032
      %v1051 = vsel %vm1049, %v1018, %v1034
      %v1052 = vsel %vm1049, %v1020, %v1036
      %v1053 = vsel %vm1049, %v1022, %v1038
      %v1054 = vsel %vm1049, %v1024, %v1040
      %v1055 = vsel %vm1049, %v1026, %v1042
      %v1056 = vsel %vm1049, %v1028, %v1044
      %v1057 = vsel %vm1049, %v1030, %v1046
      %v1058 = vsel %vm1049, %v1032, %v1016
      %v1059 = vsel %vm1049, %v1034, %v1018
      %v1060 = vsel %vm1049, %v1036, %v1020
      %v1061 = vsel %vm1049, %v1038, %v1022
      %v1062 = vsel %vm1049, %v1040, %v1024
      %v1063 = vsel %vm1049, %v1042, %v1026
      %v1064 = vsel %vm1049, %v1044, %v1028
      %v1065 = vsel %vm1049, %v1046, %v1030
      %v1066 = vlaneseq
      %v1067 = vshrl.u32 %v1066, 7
      %v1068 = vsub.s32 0, %v1067
      %v1069 = vrot.slane %v306, %v1068
      %v1070 = vlaneseq
      %v1071 = vshrl.u32 %v1070, 7
      %v1072 = vsub.s32 0, %v1071
      %v1073 = vrot.slane %v307, %v1072
      %v1074 = vmul.f32 %v1058, %v1069
      %v1075 = vmul.f32 %v1050, %v1073
      %v1076 = vmul.f32 %v1059, %v1069
      %v1077 = vmul.f32 %v1051, %v1073
      %v1078 = vmul.f32 %v1060, %v1069
      %v1079 = vmul.f32 %v1052, %v1073
      %v1080 = vmul.f32 %v1061, %v1069
      %v1081 = vmul.f32 %v1053, %v1073
      %v1082 = vmul.f32 %v1062, %v1069
      %v1083 = vmul.f32 %v1054, %v1073
      %v1084 = vmul.f32 %v1063, %v1069
      %v1085 = vmul.f32 %v1055, %v1073
      %v1086 = vmul.f32 %v1064, %v1069
      %v1087 = vmul.f32 %v1056, %v1073
      %v1088 = vmul.f32 %v1065, %v1069
      %v1089 = vmul.f32 %v1057, %v1073
      %v1090 = vadd.f32 %v1074, 0.0
      %v1091 = vadd.f32 %v1075, 0.0
      %v1092 = vadd.f32 %v1076, 0.0
      %v1093 = vadd.f32 %v1077, 0.0
      %v1094 = vadd.f32 %v1078, 0.0
      %v1095 = vadd.f32 %v1079, 0.0
      %v1096 = vadd.f32 %v1080, 0.0
      %v1097 = vadd.f32 %v1081, 0.0
      %v1098 = vadd.f32 %v1082, 0.0
      %v1099 = vadd.f32 %v1083, 0.0
      %v1100 = vadd.f32 %v1084, 0.0
      %v1101 = vadd.f32 %v1085, 0.0
      %v1102 = vadd.f32 %v1086, 0.0
      %v1103 = vadd.f32 %v1087, 0.0
      %v1104 = vadd.f32 %v1088, 0.0
      %v1105 = vadd.f32 %v1089, 0.0
      %1106 = vrot.lane.b32.xlu0 %v633, 16
      %v1107 = vpop.permute.xlu0 %1106
      %1108 = vrot.lane.b32.xlu0 %v639, 16
      %v1109 = vpop.permute.xlu0 %1108
      %1110 = vrot.lane.b32.xlu0 %v645, 16
      %v1111 = vpop.permute.xlu0 %1110
      %1112 = vrot.lane.b32.xlu0 %v651, 16
      %v1113 = vpop.permute.xlu0 %1112
      %1114 = vrot.lane.b32.xlu0 %v657, 16
      %v1115 = vpop.permute.xlu0 %1114
      %1116 = vrot.lane.b32.xlu0 %v663, 16
      %v1117 = vpop.permute.xlu0 %1116
      %1118 = vrot.lane.b32.xlu0 %v669, 16
      %v1119 = vpop.permute.xlu0 %1118
      %1120 = vrot.lane.b32.xlu0 %v675, 16
      %v1121 = vpop.permute.xlu0 %1120
      %1122 = vrot.lane.b32.xlu0 %v635, 16
      %v1123 = vpop.permute.xlu0 %1122
      %1124 = vrot.lane.b32.xlu0 %v641, 16
      %v1125 = vpop.permute.xlu0 %1124
      %1126 = vrot.lane.b32.xlu0 %v647, 16
      %v1127 = vpop.permute.xlu0 %1126
      %1128 = vrot.lane.b32.xlu0 %v653, 16
      %v1129 = vpop.permute.xlu0 %1128
      %1130 = vrot.lane.b32.xlu0 %v659, 16
      %v1131 = vpop.permute.xlu0 %1130
      %1132 = vrot.lane.b32.xlu0 %v665, 16
      %v1133 = vpop.permute.xlu0 %1132
      %1134 = vrot.lane.b32.xlu0 %v671, 16
      %v1135 = vpop.permute.xlu0 %1134
      %1136 = vrot.lane.b32.xlu0 %v677, 16
      %v1137 = vpop.permute.xlu0 %1136
      %vm1138 = vcmp.lt.s32.totalorder %v1048, 16
      %v1139 = vsel %vm1138, %v1107, %v1123
      %v1140 = vsel %vm1138, %v1109, %v1125
      %v1141 = vsel %vm1138, %v1111, %v1127
      %v1142 = vsel %vm1138, %v1113, %v1129
      %v1143 = vsel %vm1138, %v1115, %v1131
      %v1144 = vsel %vm1138, %v1117, %v1133
      %v1145 = vsel %vm1138, %v1119, %v1135
      %v1146 = vsel %vm1138, %v1121, %v1137
      %v1147 = vsel %vm1138, %v1123, %v1107
      %v1148 = vsel %vm1138, %v1125, %v1109
      %v1149 = vsel %vm1138, %v1127, %v1111
      %v1150 = vsel %vm1138, %v1129, %v1113
      %v1151 = vsel %vm1138, %v1131, %v1115
      %v1152 = vsel %vm1138, %v1133, %v1117
      %v1153 = vsel %vm1138, %v1135, %v1119
      %v1154 = vsel %vm1138, %v1137, %v1121
      %v1155 = vlaneseq
      %v1156 = vshrl.u32 %v1155, 7
      %v1157 = vsub.s32 1, %v1156
      %v1158 = vrot.slane %v306, %v1157
      %v1159 = vlaneseq
      %v1160 = vshrl.u32 %v1159, 7
      %v1161 = vsub.s32 1, %v1160
      %v1162 = vrot.slane %v307, %v1161
      %v1163 = vmul.f32 %v1147, %v1158
      %v1164 = vmul.f32 %v1139, %v1162
      %v1165 = vmul.f32 %v1148, %v1158
      %v1166 = vmul.f32 %v1140, %v1162
      %v1167 = vmul.f32 %v1149, %v1158
      %v1168 = vmul.f32 %v1141, %v1162
      %v1169 = vmul.f32 %v1150, %v1158
      %v1170 = vmul.f32 %v1142, %v1162
      %v1171 = vmul.f32 %v1151, %v1158
      %v1172 = vmul.f32 %v1143, %v1162
      %v1173 = vmul.f32 %v1152, %v1158
      %v1174 = vmul.f32 %v1144, %v1162
      %v1175 = vmul.f32 %v1153, %v1158
      %v1176 = vmul.f32 %v1145, %v1162
      %v1177 = vmul.f32 %v1154, %v1158
      %v1178 = vmul.f32 %v1146, %v1162
      %v1179 = vadd.f32 %v1090, %v1163
      %v1180 = vadd.f32 %v1091, %v1164
      %v1181 = vadd.f32 %v1092, %v1165
      %v1182 = vadd.f32 %v1093, %v1166
      %v1183 = vadd.f32 %v1094, %v1167
      %v1184 = vadd.f32 %v1095, %v1168
      %v1185 = vadd.f32 %v1096, %v1169
      %v1186 = vadd.f32 %v1097, %v1170
      %v1187 = vadd.f32 %v1098, %v1171
      %v1188 = vadd.f32 %v1099, %v1172
      %v1189 = vadd.f32 %v1100, %v1173
      %v1190 = vadd.f32 %v1101, %v1174
      %v1191 = vadd.f32 %v1102, %v1175
      %v1192 = vadd.f32 %v1103, %v1176
      %v1193 = vadd.f32 %v1104, %v1177
      %v1194 = vadd.f32 %v1105, %v1178
      %1195 = vrot.lane.b32.xlu0 %v681, 15
      %v1196 = vpop.permute.xlu0 %1195
      %1197 = vrot.lane.b32.xlu0 %v687, 15
      %v1198 = vpop.permute.xlu0 %1197
      %1199 = vrot.lane.b32.xlu0 %v693, 15
      %v1200 = vpop.permute.xlu0 %1199
      %1201 = vrot.lane.b32.xlu0 %v699, 15
      %v1202 = vpop.permute.xlu0 %1201
      %1203 = vrot.lane.b32.xlu0 %v705, 15
      %v1204 = vpop.permute.xlu0 %1203
      %1205 = vrot.lane.b32.xlu0 %v711, 15
      %v1206 = vpop.permute.xlu0 %1205
      %1207 = vrot.lane.b32.xlu0 %v717, 15
      %v1208 = vpop.permute.xlu0 %1207
      %1209 = vrot.lane.b32.xlu0 %v723, 15
      %v1210 = vpop.permute.xlu0 %1209
      %1211 = vrot.lane.b32.xlu0 %v683, 15
      %v1212 = vpop.permute.xlu0 %1211
      %1213 = vrot.lane.b32.xlu0 %v689, 15
      %v1214 = vpop.permute.xlu0 %1213
      %1215 = vrot.lane.b32.xlu0 %v695, 15
      %v1216 = vpop.permute.xlu0 %1215
      %1217 = vrot.lane.b32.xlu0 %v701, 15
      %v1218 = vpop.permute.xlu0 %1217
      %1219 = vrot.lane.b32.xlu0 %v707, 15
      %v1220 = vpop.permute.xlu0 %1219
      %1221 = vrot.lane.b32.xlu0 %v713, 15
      %v1222 = vpop.permute.xlu0 %1221
      %1223 = vrot.lane.b32.xlu0 %v719, 15
      %v1224 = vpop.permute.xlu0 %1223
      %1225 = vrot.lane.b32.xlu0 %v725, 15
      %v1226 = vpop.permute.xlu0 %1225
      %vm1227 = vcmp.lt.s32.totalorder %v1048, 15
      %v1228 = vsel %vm1227, %v1196, %v1212
      %v1229 = vsel %vm1227, %v1198, %v1214
      %v1230 = vsel %vm1227, %v1200, %v1216
      %v1231 = vsel %vm1227, %v1202, %v1218
      %v1232 = vsel %vm1227, %v1204, %v1220
      %v1233 = vsel %vm1227, %v1206, %v1222
      %v1234 = vsel %vm1227, %v1208, %v1224
      %v1235 = vsel %vm1227, %v1210, %v1226
      %v1236 = vsel %vm1227, %v1212, %v1196
      %v1237 = vsel %vm1227, %v1214, %v1198
      %v1238 = vsel %vm1227, %v1216, %v1200
      %v1239 = vsel %vm1227, %v1218, %v1202
      %v1240 = vsel %vm1227, %v1220, %v1204
      %v1241 = vsel %vm1227, %v1222, %v1206
      %v1242 = vsel %vm1227, %v1224, %v1208
      %v1243 = vsel %vm1227, %v1226, %v1210
      %v1244 = vlaneseq
      %v1245 = vshrl.u32 %v1244, 7
      %v1246 = vsub.s32 2, %v1245
      %v1247 = vrot.slane %v306, %v1246
      %v1248 = vlaneseq
      %v1249 = vshrl.u32 %v1248, 7
      %v1250 = vsub.s32 2, %v1249
      %v1251 = vrot.slane %v307, %v1250
      %v1252 = vmul.f32 %v1236, %v1247
      %v1253 = vmul.f32 %v1228, %v1251
      %v1254 = vmul.f32 %v1237, %v1247
      %v1255 = vmul.f32 %v1229, %v1251
      %v1256 = vmul.f32 %v1238, %v1247
      %v1257 = vmul.f32 %v1230, %v1251
      %v1258 = vmul.f32 %v1239, %v1247
      %v1259 = vmul.f32 %v1231, %v1251
      %v1260 = vmul.f32 %v1240, %v1247
      %v1261 = vmul.f32 %v1232, %v1251
      %v1262 = vmul.f32 %v1241, %v1247
      %v1263 = vmul.f32 %v1233, %v1251
      %v1264 = vmul.f32 %v1242, %v1247
      %v1265 = vmul.f32 %v1234, %v1251
      %v1266 = vmul.f32 %v1243, %v1247
      %v1267 = vmul.f32 %v1235, %v1251
      %v1268 = vadd.f32 %v1179, %v1252
      %v1269 = vadd.f32 %v1180, %v1253
      %v1270 = vadd.f32 %v1181, %v1254
      %v1271 = vadd.f32 %v1182, %v1255
      %v1272 = vadd.f32 %v1183, %v1256
      %v1273 = vadd.f32 %v1184, %v1257
      %v1274 = vadd.f32 %v1185, %v1258
      %v1275 = vadd.f32 %v1186, %v1259
      %v1276 = vadd.f32 %v1187, %v1260
      %v1277 = vadd.f32 %v1188, %v1261
      %v1278 = vadd.f32 %v1189, %v1262
      %v1279 = vadd.f32 %v1190, %v1263
      %v1280 = vadd.f32 %v1191, %v1264
      %v1281 = vadd.f32 %v1192, %v1265
      %v1282 = vadd.f32 %v1193, %v1266
      %v1283 = vadd.f32 %v1194, %v1267
      %1284 = vrot.lane.b32.xlu0 %v729, 1
      %v1285 = vpop.permute.xlu0 %1284
      %1286 = vrot.lane.b32.xlu0 %v735, 1
      %v1287 = vpop.permute.xlu0 %1286
      %1288 = vrot.lane.b32.xlu0 %v741, 1
      %v1289 = vpop.permute.xlu0 %1288
      %1290 = vrot.lane.b32.xlu0 %v747, 1
      %v1291 = vpop.permute.xlu0 %1290
      %1292 = vrot.lane.b32.xlu0 %v753, 1
      %v1293 = vpop.permute.xlu0 %1292
      %1294 = vrot.lane.b32.xlu0 %v759, 1
      %v1295 = vpop.permute.xlu0 %1294
      %1296 = vrot.lane.b32.xlu0 %v765, 1
      %v1297 = vpop.permute.xlu0 %1296
      %1298 = vrot.lane.b32.xlu0 %v771, 1
      %v1299 = vpop.permute.xlu0 %1298
      %1300 = vrot.lane.b32.xlu0 %v731, 1
      %v1301 = vpop.permute.xlu0 %1300
      %1302 = vrot.lane.b32.xlu0 %v737, 1
      %v1303 = vpop.permute.xlu0 %1302
      %1304 = vrot.lane.b32.xlu0 %v743, 1
      %v1305 = vpop.permute.xlu0 %1304
      %1306 = vrot.lane.b32.xlu0 %v749, 1
      %v1307 = vpop.permute.xlu0 %1306
      %1308 = vrot.lane.b32.xlu0 %v755, 1
      %v1309 = vpop.permute.xlu0 %1308
      %1310 = vrot.lane.b32.xlu0 %v761, 1
      %v1311 = vpop.permute.xlu0 %1310
      %1312 = vrot.lane.b32.xlu0 %v767, 1
      %v1313 = vpop.permute.xlu0 %1312
      %1314 = vrot.lane.b32.xlu0 %v773, 1
      %v1315 = vpop.permute.xlu0 %1314
      %vm1316 = vcmp.lt.s32.totalorder %v1048, 1
      %v1317 = vsel %vm1316, %v1285, %v1301
      %v1318 = vsel %vm1316, %v1287, %v1303
      %v1319 = vsel %vm1316, %v1289, %v1305
      %v1320 = vsel %vm1316, %v1291, %v1307
      %v1321 = vsel %vm1316, %v1293, %v1309
      %v1322 = vsel %vm1316, %v1295, %v1311
      %v1323 = vsel %vm1316, %v1297, %v1313
      %v1324 = vsel %vm1316, %v1299, %v1315
      %v1325 = vsel %vm1316, %v1301, %v1285
      %v1326 = vsel %vm1316, %v1303, %v1287
      %v1327 = vsel %vm1316, %v1305, %v1289
      %v1328 = vsel %vm1316, %v1307, %v1291
      %v1329 = vsel %vm1316, %v1309, %v1293
      %v1330 = vsel %vm1316, %v1311, %v1295
      %v1331 = vsel %vm1316, %v1313, %v1297
      %v1332 = vsel %vm1316, %v1315, %v1299
      %v1333 = vlaneseq
      %v1334 = vshrl.u32 %v1333, 7
      %v1335 = vsub.s32 3, %v1334
      %v1336 = vrot.slane %v306, %v1335
      %v1337 = vlaneseq
      %v1338 = vshrl.u32 %v1337, 7
      %v1339 = vsub.s32 3, %v1338
      %v1340 = vrot.slane %v307, %v1339
      %v1341 = vmul.f32 %v1325, %v1336
      %v1342 = vmul.f32 %v1317, %v1340
      %v1343 = vmul.f32 %v1326, %v1336
      %v1344 = vmul.f32 %v1318, %v1340
      %v1345 = vmul.f32 %v1327, %v1336
      %v1346 = vmul.f32 %v1319, %v1340
      %v1347 = vmul.f32 %v1328, %v1336
      %v1348 = vmul.f32 %v1320, %v1340
      %v1349 = vmul.f32 %v1329, %v1336
      %v1350 = vmul.f32 %v1321, %v1340
      %v1351 = vmul.f32 %v1330, %v1336
      %v1352 = vmul.f32 %v1322, %v1340
      %v1353 = vmul.f32 %v1331, %v1336
      %v1354 = vmul.f32 %v1323, %v1340
      %v1355 = vmul.f32 %v1332, %v1336
      %v1356 = vmul.f32 %v1324, %v1340
      %v1357 = vadd.f32 %v1268, %v1341
      %v1358 = vadd.f32 %v1269, %v1342
      %v1359 = vadd.f32 %v1270, %v1343
      %v1360 = vadd.f32 %v1271, %v1344
      %v1361 = vadd.f32 %v1272, %v1345
      %v1362 = vadd.f32 %v1273, %v1346
      %v1363 = vadd.f32 %v1274, %v1347
      %v1364 = vadd.f32 %v1275, %v1348
      %v1365 = vadd.f32 %v1276, %v1349
      %v1366 = vadd.f32 %v1277, %v1350
      %v1367 = vadd.f32 %v1278, %v1351
      %v1368 = vadd.f32 %v1279, %v1352
      %v1369 = vadd.f32 %v1280, %v1353
      %v1370 = vadd.f32 %v1281, %v1354
      %v1371 = vadd.f32 %v1282, %v1355
      %v1372 = vadd.f32 %v1283, %v1356
      %v1373 = vadd.f32 %v1357, %v777
      %v1374 = vadd.f32 %v1358, %v779
      %v1375 = vadd.f32 %v1359, %v783
      %v1376 = vadd.f32 %v1360, %v785
      %v1377 = vadd.f32 %v1361, %v789
      %v1378 = vadd.f32 %v1362, %v791
      %v1379 = vadd.f32 %v1363, %v795
      %v1380 = vadd.f32 %v1364, %v797
      %v1381 = vadd.f32 %v1365, %v801
      %v1382 = vadd.f32 %v1366, %v803
      %v1383 = vadd.f32 %v1367, %v807
      %v1384 = vadd.f32 %v1368, %v809
      %v1385 = vadd.f32 %v1369, %v813
      %v1386 = vadd.f32 %v1370, %v815
      %v1387 = vadd.f32 %v1371, %v819
      %v1388 = vadd.f32 %v1372, %v821
      %1389 = vrot.lane.b32.xlu0 %v825, 127
      %v1390 = vpop.permute.xlu0 %1389
      %1391 = vrot.lane.b32.xlu0 %v831, 127
      %v1392 = vpop.permute.xlu0 %1391
      %1393 = vrot.lane.b32.xlu0 %v837, 127
      %v1394 = vpop.permute.xlu0 %1393
      %1395 = vrot.lane.b32.xlu0 %v843, 127
      %v1396 = vpop.permute.xlu0 %1395
      %1397 = vrot.lane.b32.xlu0 %v849, 127
      %v1398 = vpop.permute.xlu0 %1397
      %1399 = vrot.lane.b32.xlu0 %v855, 127
      %v1400 = vpop.permute.xlu0 %1399
      %1401 = vrot.lane.b32.xlu0 %v861, 127
      %v1402 = vpop.permute.xlu0 %1401
      %1403 = vrot.lane.b32.xlu0 %v867, 127
      %v1404 = vpop.permute.xlu0 %1403
      %1405 = vrot.lane.b32.xlu0 %v827, 127
      %v1406 = vpop.permute.xlu0 %1405
      %1407 = vrot.lane.b32.xlu0 %v833, 127
      %v1408 = vpop.permute.xlu0 %1407
      %1409 = vrot.lane.b32.xlu0 %v839, 127
      %v1410 = vpop.permute.xlu0 %1409
      %1411 = vrot.lane.b32.xlu0 %v845, 127
      %v1412 = vpop.permute.xlu0 %1411
      %1413 = vrot.lane.b32.xlu0 %v851, 127
      %v1414 = vpop.permute.xlu0 %1413
      %1415 = vrot.lane.b32.xlu0 %v857, 127
      %v1416 = vpop.permute.xlu0 %1415
      %1417 = vrot.lane.b32.xlu0 %v863, 127
      %v1418 = vpop.permute.xlu0 %1417
      %1419 = vrot.lane.b32.xlu0 %v869, 127
      %v1420 = vpop.permute.xlu0 %1419
      %vm1421 = vcmp.lt.s32.totalorder %v1048, 127
      %v1422 = vsel %vm1421, %v1390, %v1406
      %v1423 = vsel %vm1421, %v1392, %v1408
      %v1424 = vsel %vm1421, %v1394, %v1410
      %v1425 = vsel %vm1421, %v1396, %v1412
      %v1426 = vsel %vm1421, %v1398, %v1414
      %v1427 = vsel %vm1421, %v1400, %v1416
      %v1428 = vsel %vm1421, %v1402, %v1418
      %v1429 = vsel %vm1421, %v1404, %v1420
      %v1430 = vsel %vm1421, %v1406, %v1390
      %v1431 = vsel %vm1421, %v1408, %v1392
      %v1432 = vsel %vm1421, %v1410, %v1394
      %v1433 = vsel %vm1421, %v1412, %v1396
      %v1434 = vsel %vm1421, %v1414, %v1398
      %v1435 = vsel %vm1421, %v1416, %v1400
      %v1436 = vsel %vm1421, %v1418, %v1402
      %v1437 = vsel %vm1421, %v1420, %v1404
      %v1438 = vlaneseq
      %v1439 = vshrl.u32 %v1438, 7
      %v1440 = vsub.s32 5, %v1439
      %v1441 = vrot.slane %v306, %v1440
      %v1442 = vlaneseq
      %v1443 = vshrl.u32 %v1442, 7
      %v1444 = vsub.s32 5, %v1443
      %v1445 = vrot.slane %v307, %v1444
      %v1446 = vmul.f32 %v1422, %v1441
      %v1447 = vmul.f32 %v1430, %v1445
      %v1448 = vmul.f32 %v1423, %v1441
      %v1449 = vmul.f32 %v1431, %v1445
      %v1450 = vmul.f32 %v1424, %v1441
      %v1451 = vmul.f32 %v1432, %v1445
      %v1452 = vmul.f32 %v1425, %v1441
      %v1453 = vmul.f32 %v1433, %v1445
      %v1454 = vmul.f32 %v1426, %v1441
      %v1455 = vmul.f32 %v1434, %v1445
      %v1456 = vmul.f32 %v1427, %v1441
      %v1457 = vmul.f32 %v1435, %v1445
      %v1458 = vmul.f32 %v1428, %v1441
      %v1459 = vmul.f32 %v1436, %v1445
      %v1460 = vmul.f32 %v1429, %v1441
      %v1461 = vmul.f32 %v1437, %v1445
      %v1462 = vadd.f32 %v1373, %v1446
      %v1463 = vadd.f32 %v1374, %v1447
      %v1464 = vadd.f32 %v1375, %v1448
      %v1465 = vadd.f32 %v1376, %v1449
      %v1466 = vadd.f32 %v1377, %v1450
      %v1467 = vadd.f32 %v1378, %v1451
      %v1468 = vadd.f32 %v1379, %v1452
      %v1469 = vadd.f32 %v1380, %v1453
      %v1470 = vadd.f32 %v1381, %v1454
      %v1471 = vadd.f32 %v1382, %v1455
      %v1472 = vadd.f32 %v1383, %v1456
      %v1473 = vadd.f32 %v1384, %v1457
      %v1474 = vadd.f32 %v1385, %v1458
      %v1475 = vadd.f32 %v1386, %v1459
      %v1476 = vadd.f32 %v1387, %v1460
      %v1477 = vadd.f32 %v1388, %v1461
      %1478 = vrot.lane.b32.xlu0 %v873, 113
      %v1479 = vpop.permute.xlu0 %1478
      %1480 = vrot.lane.b32.xlu0 %v879, 113
      %v1481 = vpop.permute.xlu0 %1480
      %1482 = vrot.lane.b32.xlu0 %v885, 113
      %v1483 = vpop.permute.xlu0 %1482
      %1484 = vrot.lane.b32.xlu0 %v891, 113
      %v1485 = vpop.permute.xlu0 %1484
      %1486 = vrot.lane.b32.xlu0 %v897, 113
      %v1487 = vpop.permute.xlu0 %1486
      %1488 = vrot.lane.b32.xlu0 %v903, 113
      %v1489 = vpop.permute.xlu0 %1488
      %1490 = vrot.lane.b32.xlu0 %v909, 113
      %v1491 = vpop.permute.xlu0 %1490
      %1492 = vrot.lane.b32.xlu0 %v915, 113
      %v1493 = vpop.permute.xlu0 %1492
      %1494 = vrot.lane.b32.xlu0 %v875, 113
      %v1495 = vpop.permute.xlu0 %1494
      %1496 = vrot.lane.b32.xlu0 %v881, 113
      %v1497 = vpop.permute.xlu0 %1496
      %1498 = vrot.lane.b32.xlu0 %v887, 113
      %v1499 = vpop.permute.xlu0 %1498
      %1500 = vrot.lane.b32.xlu0 %v893, 113
      %v1501 = vpop.permute.xlu0 %1500
      %1502 = vrot.lane.b32.xlu0 %v899, 113
      %v1503 = vpop.permute.xlu0 %1502
      %1504 = vrot.lane.b32.xlu0 %v905, 113
      %v1505 = vpop.permute.xlu0 %1504
      %1506 = vrot.lane.b32.xlu0 %v911, 113
      %v1507 = vpop.permute.xlu0 %1506
      %1508 = vrot.lane.b32.xlu0 %v917, 113
      %v1509 = vpop.permute.xlu0 %1508
      %vm1510 = vcmp.lt.s32.totalorder %v1048, 113
      %v1511 = vsel %vm1510, %v1479, %v1495
      %v1512 = vsel %vm1510, %v1481, %v1497
      %v1513 = vsel %vm1510, %v1483, %v1499
      %v1514 = vsel %vm1510, %v1485, %v1501
      %v1515 = vsel %vm1510, %v1487, %v1503
      %v1516 = vsel %vm1510, %v1489, %v1505
      %v1517 = vsel %vm1510, %v1491, %v1507
      %v1518 = vsel %vm1510, %v1493, %v1509
      %v1519 = vsel %vm1510, %v1495, %v1479
      %v1520 = vsel %vm1510, %v1497, %v1481
      %v1521 = vsel %vm1510, %v1499, %v1483
      %v1522 = vsel %vm1510, %v1501, %v1485
      %v1523 = vsel %vm1510, %v1503, %v1487
      %v1524 = vsel %vm1510, %v1505, %v1489
      %v1525 = vsel %vm1510, %v1507, %v1491
      %v1526 = vsel %vm1510, %v1509, %v1493
      %v1527 = vlaneseq
      %v1528 = vshrl.u32 %v1527, 7
      %v1529 = vsub.s32 6, %v1528
      %v1530 = vrot.slane %v306, %v1529
      %v1531 = vlaneseq
      %v1532 = vshrl.u32 %v1531, 7
      %v1533 = vsub.s32 6, %v1532
      %v1534 = vrot.slane %v307, %v1533
      %v1535 = vmul.f32 %v1511, %v1530
      %v1536 = vmul.f32 %v1519, %v1534
      %v1537 = vmul.f32 %v1512, %v1530
      %v1538 = vmul.f32 %v1520, %v1534
      %v1539 = vmul.f32 %v1513, %v1530
      %v1540 = vmul.f32 %v1521, %v1534
      %v1541 = vmul.f32 %v1514, %v1530
      %v1542 = vmul.f32 %v1522, %v1534
      %v1543 = vmul.f32 %v1515, %v1530
      %v1544 = vmul.f32 %v1523, %v1534
      %v1545 = vmul.f32 %v1516, %v1530
      %v1546 = vmul.f32 %v1524, %v1534
      %v1547 = vmul.f32 %v1517, %v1530
      %v1548 = vmul.f32 %v1525, %v1534
      %v1549 = vmul.f32 %v1518, %v1530
      %v1550 = vmul.f32 %v1526, %v1534
      %v1551 = vadd.f32 %v1462, %v1535
      %v1552 = vadd.f32 %v1463, %v1536
      %v1553 = vadd.f32 %v1464, %v1537
      %v1554 = vadd.f32 %v1465, %v1538
      %v1555 = vadd.f32 %v1466, %v1539
      %v1556 = vadd.f32 %v1467, %v1540
      %v1557 = vadd.f32 %v1468, %v1541
      %v1558 = vadd.f32 %v1469, %v1542
      %v1559 = vadd.f32 %v1470, %v1543
      %v1560 = vadd.f32 %v1471, %v1544
      %v1561 = vadd.f32 %v1472, %v1545
      %v1562 = vadd.f32 %v1473, %v1546
      %v1563 = vadd.f32 %v1474, %v1547
      %v1564 = vadd.f32 %v1475, %v1548
      %v1565 = vadd.f32 %v1476, %v1549
      %v1566 = vadd.f32 %v1477, %v1550
      %1567 = vrot.lane.b32.xlu0 %v921, 112
      %v1568 = vpop.permute.xlu0 %1567
      %1569 = vrot.lane.b32.xlu0 %v927, 112
      %v1570 = vpop.permute.xlu0 %1569
      %1571 = vrot.lane.b32.xlu0 %v933, 112
      %v1572 = vpop.permute.xlu0 %1571
      %1573 = vrot.lane.b32.xlu0 %v939, 112
      %v1574 = vpop.permute.xlu0 %1573
      %1575 = vrot.lane.b32.xlu0 %v945, 112
      %v1576 = vpop.permute.xlu0 %1575
      %1577 = vrot.lane.b32.xlu0 %v951, 112
      %v1578 = vpop.permute.xlu0 %1577
      %1579 = vrot.lane.b32.xlu0 %v957, 112
      %v1580 = vpop.permute.xlu0 %1579
      %1581 = vrot.lane.b32.xlu0 %v963, 112
      %v1582 = vpop.permute.xlu0 %1581
      %1583 = vrot.lane.b32.xlu0 %v923, 112
      %v1584 = vpop.permute.xlu0 %1583
      %1585 = vrot.lane.b32.xlu0 %v929, 112
      %v1586 = vpop.permute.xlu0 %1585
      %1587 = vrot.lane.b32.xlu0 %v935, 112
      %v1588 = vpop.permute.xlu0 %1587
      %1589 = vrot.lane.b32.xlu0 %v941, 112
      %v1590 = vpop.permute.xlu0 %1589
      %1591 = vrot.lane.b32.xlu0 %v947, 112
      %v1592 = vpop.permute.xlu0 %1591
      %1593 = vrot.lane.b32.xlu0 %v953, 112
      %v1594 = vpop.permute.xlu0 %1593
      %1595 = vrot.lane.b32.xlu0 %v959, 112
      %v1596 = vpop.permute.xlu0 %1595
      %1597 = vrot.lane.b32.xlu0 %v965, 112
      %v1598 = vpop.permute.xlu0 %1597
      %vm1599 = vcmp.lt.s32.totalorder %v1048, 112
      %v1600 = vsel %vm1599, %v1568, %v1584
      %v1601 = vsel %vm1599, %v1570, %v1586
      %v1602 = vsel %vm1599, %v1572, %v1588
      %v1603 = vsel %vm1599, %v1574, %v1590
      %v1604 = vsel %vm1599, %v1576, %v1592
      %v1605 = vsel %vm1599, %v1578, %v1594
      %v1606 = vsel %vm1599, %v1580, %v1596
      %v1607 = vsel %vm1599, %v1582, %v1598
      %v1608 = vsel %vm1599, %v1584, %v1568
      %v1609 = vsel %vm1599, %v1586, %v1570
      %v1610 = vsel %vm1599, %v1588, %v1572
      %v1611 = vsel %vm1599, %v1590, %v1574
      %v1612 = vsel %vm1599, %v1592, %v1576
      %v1613 = vsel %vm1599, %v1594, %v1578
      %v1614 = vsel %vm1599, %v1596, %v1580
      %v1615 = vsel %vm1599, %v1598, %v1582
      %v1616 = vlaneseq
      %v1617 = vshrl.u32 %v1616, 7
      %v1618 = vsub.s32 7, %v1617
      %v1619 = vrot.slane %v306, %v1618
      %v1620 = vlaneseq
      %v1621 = vshrl.u32 %v1620, 7
      %v1622 = vsub.s32 7, %v1621
      %v1623 = vrot.slane %v307, %v1622
      %v1624 = vmul.f32 %v1600, %v1619
      %v1625 = vmul.f32 %v1608, %v1623
      %v1626 = vmul.f32 %v1601, %v1619
      %v1627 = vmul.f32 %v1609, %v1623
      %v1628 = vmul.f32 %v1602, %v1619
      %v1629 = vmul.f32 %v1610, %v1623
      %v1630 = vmul.f32 %v1603, %v1619
      %v1631 = vmul.f32 %v1611, %v1623
      %v1632 = vmul.f32 %v1604, %v1619
      %v1633 = vmul.f32 %v1612, %v1623
      %v1634 = vmul.f32 %v1605, %v1619
      %v1635 = vmul.f32 %v1613, %v1623
      %v1636 = vmul.f32 %v1606, %v1619
      %v1637 = vmul.f32 %v1614, %v1623
      %v1638 = vmul.f32 %v1607, %v1619
      %v1639 = vmul.f32 %v1615, %v1623
      %v1640 = vadd.f32 %v1551, %v1624
      %v1641 = vadd.f32 %v1552, %v1625
      %v1642 = vadd.f32 %v1553, %v1626
      %v1643 = vadd.f32 %v1554, %v1627
      %v1644 = vadd.f32 %v1555, %v1628
      %v1645 = vadd.f32 %v1556, %v1629
      %v1646 = vadd.f32 %v1557, %v1630
      %v1647 = vadd.f32 %v1558, %v1631
      %v1648 = vadd.f32 %v1559, %v1632
      %v1649 = vadd.f32 %v1560, %v1633
      %v1650 = vadd.f32 %v1561, %v1634
      %v1651 = vadd.f32 %v1562, %v1635
      %v1652 = vadd.f32 %v1563, %v1636
      %v1653 = vadd.f32 %v1564, %v1637
      %v1654 = vadd.f32 %v1565, %v1638
      %v1655 = vadd.f32 %v1566, %v1639
      %1656 = vrot.lane.b32.xlu0 %v969, 111
      %v1657 = vpop.permute.xlu0 %1656
      %1658 = vrot.lane.b32.xlu0 %v975, 111
      %v1659 = vpop.permute.xlu0 %1658
      %1660 = vrot.lane.b32.xlu0 %v981, 111
      %v1661 = vpop.permute.xlu0 %1660
      %1662 = vrot.lane.b32.xlu0 %v987, 111
      %v1663 = vpop.permute.xlu0 %1662
      %1664 = vrot.lane.b32.xlu0 %v993, 111
      %v1665 = vpop.permute.xlu0 %1664
      %1666 = vrot.lane.b32.xlu0 %v999, 111
      %v1667 = vpop.permute.xlu0 %1666
      %1668 = vrot.lane.b32.xlu0 %v1005, 111
      %v1669 = vpop.permute.xlu0 %1668
      %1670 = vrot.lane.b32.xlu0 %v1011, 111
      %v1671 = vpop.permute.xlu0 %1670
      %1672 = vrot.lane.b32.xlu0 %v971, 111
      %v1673 = vpop.permute.xlu0 %1672
      %1674 = vrot.lane.b32.xlu0 %v977, 111
      %v1675 = vpop.permute.xlu0 %1674
      %1676 = vrot.lane.b32.xlu0 %v983, 111
      %v1677 = vpop.permute.xlu0 %1676
      %1678 = vrot.lane.b32.xlu0 %v989, 111
      %v1679 = vpop.permute.xlu0 %1678
      %1680 = vrot.lane.b32.xlu0 %v995, 111
      %v1681 = vpop.permute.xlu0 %1680
      %1682 = vrot.lane.b32.xlu0 %v1001, 111
      %v1683 = vpop.permute.xlu0 %1682
      %1684 = vrot.lane.b32.xlu0 %v1007, 111
      %v1685 = vpop.permute.xlu0 %1684
      %1686 = vrot.lane.b32.xlu0 %v1013, 111
      %v1687 = vpop.permute.xlu0 %1686
      %vm1688 = vcmp.lt.s32.totalorder %v1048, 111
      %v1689 = vsel %vm1688, %v1657, %v1673
      %v1690 = vsel %vm1688, %v1659, %v1675
      %v1691 = vsel %vm1688, %v1661, %v1677
      %v1692 = vsel %vm1688, %v1663, %v1679
      %v1693 = vsel %vm1688, %v1665, %v1681
      %v1694 = vsel %vm1688, %v1667, %v1683
      %v1695 = vsel %vm1688, %v1669, %v1685
      %v1696 = vsel %vm1688, %v1671, %v1687
      %v1697 = vsel %vm1688, %v1673, %v1657
      %v1698 = vsel %vm1688, %v1675, %v1659
      %v1699 = vsel %vm1688, %v1677, %v1661
      %v1700 = vsel %vm1688, %v1679, %v1663
      %v1701 = vsel %vm1688, %v1681, %v1665
      %v1702 = vsel %vm1688, %v1683, %v1667
      %v1703 = vsel %vm1688, %v1685, %v1669
      %v1704 = vsel %vm1688, %v1687, %v1671
      %v1705 = vlaneseq
      %v1706 = vshrl.u32 %v1705, 7
      %v1707 = vsub.s32 0, %v1706
      %v1708 = vrot.slane %v308, %v1707
      %v1709 = vlaneseq
      %v1710 = vshrl.u32 %v1709, 7
      %v1711 = vsub.s32 0, %v1710
      %v1712 = vrot.slane %v309, %v1711
      %v1713 = vmul.f32 %v1689, %v1708
      %v1714 = vmul.f32 %v1697, %v1712
      %v1715 = vmul.f32 %v1690, %v1708
      %v1716 = vmul.f32 %v1698, %v1712
      %v1717 = vmul.f32 %v1691, %v1708
      %v1718 = vmul.f32 %v1699, %v1712
      %v1719 = vmul.f32 %v1692, %v1708
      %v1720 = vmul.f32 %v1700, %v1712
      %v1721 = vmul.f32 %v1693, %v1708
      %v1722 = vmul.f32 %v1701, %v1712
      %v1723 = vmul.f32 %v1694, %v1708
      %v1724 = vmul.f32 %v1702, %v1712
      %v1725 = vmul.f32 %v1695, %v1708
      %v1726 = vmul.f32 %v1703, %v1712
      %v1727 = vmul.f32 %v1696, %v1708
      %v1728 = vmul.f32 %v1704, %v1712
      %v1729 = vadd.f32 %v1640, %v1713
      %v1730 = vadd.f32 %v1641, %v1714
      %v1731 = vadd.f32 %v1642, %v1715
      %v1732 = vadd.f32 %v1643, %v1716
      %v1733 = vadd.f32 %v1644, %v1717
      %v1734 = vadd.f32 %v1645, %v1718
      %v1735 = vadd.f32 %v1646, %v1719
      %v1736 = vadd.f32 %v1647, %v1720
      %v1737 = vadd.f32 %v1648, %v1721
      %v1738 = vadd.f32 %v1649, %v1722
      %v1739 = vadd.f32 %v1650, %v1723
      %v1740 = vadd.f32 %v1651, %v1724
      %v1741 = vadd.f32 %v1652, %v1725
      %v1742 = vadd.f32 %v1653, %v1726
      %v1743 = vadd.f32 %v1654, %v1727
      %v1744 = vadd.f32 %v1655, %v1728
      %v1745 = vld [vmem:[%s3] sm:$0xff]
      %v1746 = vld [vmem:[%s3 + $0x8] sm:$0xff]
      %v1747 = vld [vmem:[%s3 + $0x10] sm:$0xff]
      %v1748 = vld [vmem:[%s3 + $0x18] sm:$0xff]
      %v1749 = vld [vmem:[%s3 + $0x20] sm:$0xff]
      %v1750 = vld [vmem:[%s3 + $0x28] sm:$0xff]
      %v1751 = vld [vmem:[%s3 + $0x30] sm:$0xff]
      %v1752 = vld [vmem:[%s3 + $0x38] sm:$0xff]
      %1754 = vset.pattern.permute.xlu0 0
      %1755 = vperm.xlu0 %1754, %v1745
      %v1756 = vpop.permute.xlu0 %1755
      %1759 = vset.pattern.permute.xlu0 0
      %1760 = vperm.xlu0 %1759, %v1746
      %v1761 = vpop.permute.xlu0 %1760
      %1764 = vset.pattern.permute.xlu0 0
      %1765 = vperm.xlu0 %1764, %v1747
      %v1766 = vpop.permute.xlu0 %1765
      %1769 = vset.pattern.permute.xlu0 0
      %1770 = vperm.xlu0 %1769, %v1748
      %v1771 = vpop.permute.xlu0 %1770
      %1774 = vset.pattern.permute.xlu0 0
      %1775 = vperm.xlu0 %1774, %v1749
      %v1776 = vpop.permute.xlu0 %1775
      %1779 = vset.pattern.permute.xlu0 0
      %1780 = vperm.xlu0 %1779, %v1750
      %v1781 = vpop.permute.xlu0 %1780
      %1784 = vset.pattern.permute.xlu0 0
      %1785 = vperm.xlu0 %1784, %v1751
      %v1786 = vpop.permute.xlu0 %1785
      %1789 = vset.pattern.permute.xlu0 0
      %1790 = vperm.xlu0 %1789, %v1752
      %v1791 = vpop.permute.xlu0 %1790
      %v1793 = vadd.f32 %v1729, %v1756
      %v1794 = vadd.f32 %v1730, %v1756
      %v1795 = vadd.f32 %v1731, %v1761
      %v1796 = vadd.f32 %v1732, %v1761
      %v1797 = vadd.f32 %v1733, %v1766
      %v1798 = vadd.f32 %v1734, %v1766
      %v1799 = vadd.f32 %v1735, %v1771
      %v1800 = vadd.f32 %v1736, %v1771
      %v1801 = vadd.f32 %v1737, %v1776
      %v1802 = vadd.f32 %v1738, %v1776
      %v1803 = vadd.f32 %v1739, %v1781
      %v1804 = vadd.f32 %v1740, %v1781
      %v1805 = vadd.f32 %v1741, %v1786
      %v1806 = vadd.f32 %v1742, %v1786
      %v1807 = vadd.f32 %v1743, %v1791
      %v1808 = vadd.f32 %v1744, %v1791
      %v1809 = vmax.f32 %v1793, 0.0
      %v1810 = vmax.f32 %v1794, 0.0
      %v1811 = vmax.f32 %v1795, 0.0
      %v1812 = vmax.f32 %v1796, 0.0
      %v1813 = vmax.f32 %v1797, 0.0
      %v1814 = vmax.f32 %v1798, 0.0
      %v1815 = vmax.f32 %v1799, 0.0
      %v1816 = vmax.f32 %v1800, 0.0
      %v1817 = vmax.f32 %v1801, 0.0
      %v1818 = vmax.f32 %v1802, 0.0
      %v1819 = vmax.f32 %v1803, 0.0
      %v1820 = vmax.f32 %v1804, 0.0
      %v1821 = vmax.f32 %v1805, 0.0
      %v1822 = vmax.f32 %v1806, 0.0
      %v1823 = vmax.f32 %v1807, 0.0
      %v1824 = vmax.f32 %v1808, 0.0
      %v1825 = vld [vmem:[%s4] sm:$0xff]
      %v1826 = vld [vmem:[%s4 + $0x8] sm:$0xff]
      %v1827 = vld [vmem:[%s4 + $0x10] sm:$0xff]
      %v1828 = vld [vmem:[%s4 + $0x18] sm:$0xff]
      %v1829 = vld [vmem:[%s4 + $0x20] sm:$0xff]
      %v1830 = vld [vmem:[%s4 + $0x28] sm:$0xff]
      %v1831 = vld [vmem:[%s4 + $0x30] sm:$0xff]
      %v1832 = vld [vmem:[%s4 + $0x38] sm:$0xff]
      %v1833 = vld [vmem:[%s4 + $0x40] sm:$0xff]
      %v1834 = vld [vmem:[%s4 + $0x48] sm:$0xff]
      %v1835 = vld [vmem:[%s4 + $0x50] sm:$0xff]
      %v1836 = vld [vmem:[%s4 + $0x58] sm:$0xff]
      %v1837 = vld [vmem:[%s4 + $0x60] sm:$0xff]
      %v1838 = vld [vmem:[%s4 + $0x68] sm:$0xff]
      %v1839 = vld [vmem:[%s4 + $0x70] sm:$0xff]
      %v1840 = vld [vmem:[%s4 + $0x78] sm:$0xff]
      %v1841 = vld [vmem:[%s4 + $0x80] sm:$0xff]
      %v1842 = vld [vmem:[%s4 + $0x88] sm:$0xff]
      %v1843 = vld [vmem:[%s4 + $0x90] sm:$0xff]
      %v1844 = vld [vmem:[%s4 + $0x98] sm:$0xff]
      %v1845 = vld [vmem:[%s4 + $0xa0] sm:$0xff]
      %v1846 = vld [vmem:[%s4 + $0xa8] sm:$0xff]
      %v1847 = vld [vmem:[%s4 + $0xb0] sm:$0xff]
      %v1848 = vld [vmem:[%s4 + $0xb8] sm:$0xff]
      %v1849 = vld [vmem:[%s4 + $0xc0] sm:$0xff]
      %v1850 = vld [vmem:[%s4 + $0xc8] sm:$0xff]
      %v1851 = vld [vmem:[%s4 + $0xd0] sm:$0xff]
      %v1852 = vld [vmem:[%s4 + $0xd8] sm:$0xff]
      %v1853 = vld [vmem:[%s4 + $0xe0] sm:$0xff]
      %v1854 = vld [vmem:[%s4 + $0xe8] sm:$0xff]
      %v1855 = vld [vmem:[%s4 + $0xf0] sm:$0xff]
      %v1856 = vld [vmem:[%s4 + $0xf8] sm:$0xff]
      %v1857 = vld [vmem:[%s4 + $0x100] sm:$0xff]
      %v1858 = vld [vmem:[%s4 + $0x108] sm:$0xff]
      %v1859 = vld [vmem:[%s4 + $0x110] sm:$0xff]
      %v1860 = vld [vmem:[%s4 + $0x118] sm:$0xff]
      %vm1861 = vcmask 523264
      %v1863 = vsel %vm1861, %v1825, 0
      %v1866 = vsel %vm1861, %v1826, 0
      %v1869 = vsel %vm1861, %v1827, 0
      %v1872 = vsel %vm1861, %v1828, 0
      %v1875 = vsel %vm1861, %v1829, 0
      %v1878 = vsel %vm1861, %v1830, 0
      %v1881 = vsel %vm1861, %v1831, 0
      %v1884 = vsel %vm1861, %v1832, 0
      %v1887 = vsel %vm1861, %v1833, 0
      %v1890 = vsel %vm1861, %v1834, 0
      %v1893 = vsel %vm1861, %v1835, 0
      %v1896 = vsel %vm1861, %v1836, 0
      %v1899 = vsel %vm1861, %v1837, 0
      %v1902 = vsel %vm1861, %v1838, 0
      %v1905 = vsel %vm1861, %v1839, 0
      %v1908 = vsel %vm1861, %v1840, 0
      %v1911 = vsel %vm1861, %v1841, 0
      %v1914 = vsel %vm1861, %v1842, 0
      %v1917 = vsel %vm1861, %v1843, 0
      %v1920 = vsel %vm1861, %v1844, 0
      %v1923 = vsel %vm1861, %v1845, 0
      %v1926 = vsel %vm1861, %v1846, 0
      %v1929 = vsel %vm1861, %v1847, 0
      %v1932 = vsel %vm1861, %v1848, 0
      %v1935 = vsel %vm1861, %v1849, 0
      %v1938 = vsel %vm1861, %v1850, 0
      %v1941 = vsel %vm1861, %v1851, 0
      %v1944 = vsel %vm1861, %v1852, 0
      %v1947 = vsel %vm1861, %v1853, 0
      %v1950 = vsel %vm1861, %v1854, 0
      %v1953 = vsel %vm1861, %v1855, 0
      %v1956 = vsel %vm1861, %v1856, 0
      %v1959 = vsel %vm1861, %v1857, 0
      %v1962 = vsel %vm1861, %v1858, 0
      %v1965 = vsel %vm1861, %v1859, 0
      %v1968 = vsel %vm1861, %v1860, 0
      %1970 = vmatprep.subr.mxu0 %v1810
      %1971 = vmatpush1.msra.mxu0 %v1809
      %1972 = vmatprep.subr.mxu0 %v1812
      %1973 = vmatpush1.msra.mxu0 %v1811
      %1974 = vmatprep.subr.mxu0 %v1814
      %1975 = vmatpush1.msra.mxu0 %v1813
      %1976 = vmatprep.subr.mxu0 %v1816
      %1977 = vmatpush1.msra.mxu0 %v1815
      %1978 = vmatprep.subr.mxu0 %v1818
      %1979 = vmatpush1.msra.mxu0 %v1817
      %1980 = vmatprep.subr.mxu0 %v1820
      %1981 = vmatpush1.msra.mxu0 %v1819
      %1982 = vmatprep.subr.mxu0 %v1822
      %1983 = vmatpush1.msra.mxu0 %v1821
      %1984 = vmatprep.subr.mxu0 %v1824
      %1985 = vmatpush1.msra.mxu0 %v1823
      %1986 = vmatprep.subr.mxu0 0.0
      %1987 = vmatpush1.msra.mxu0 0.0
      %1988 = vmatprep.subr.mxu0 0.0
      %1989 = vmatpush1.msra.mxu0 0.0
      %1990 = vmatprep.subr.mxu0 0.0
      %1991 = vmatpush1.msra.mxu0 0.0
      %1992 = vmatprep.subr.mxu0 0.0
      %1993 = vmatpush1.msra.mxu0 0.0
      %1994 = vmatprep.subr.mxu0 0.0
      %1995 = vmatpush1.msra.mxu0 0.0
      %1996 = vmatprep.subr.mxu0 0.0
      %1997 = vmatpush1.msra.mxu0 0.0
      %1998 = vmatprep.subr.mxu0 0.0
      %1999 = vmatpush1.msra.mxu0 0.0
      %2000 = vmatprep.subr.mxu0 0.0
      %2001 = vmatpush1.msra.mxu0 0.0
      %2002 = vmatprep.subr.mxu0 0.0
      %2003 = vmatpush1.msra.mxu0 0.0
      %2004 = vmatprep.subr.mxu0 0.0
      %2005 = vmatpush1.msra.mxu0 0.0
      %2006 = vmatprep.subr.mxu0 0.0
      %2007 = vmatpush1.msra.mxu0 0.0
      %2008 = vmatprep.subr.mxu0 0.0
      %2009 = vmatpush1.msra.mxu0 0.0
      %2010 = vmatprep.subr.mxu0 0.0
      %2011 = vmatpush1.msra.mxu0 0.0
      %2012 = vmatprep.subr.mxu0 0.0
      %2013 = vmatpush1.msra.mxu0 0.0
      %2014 = vmatprep.subr.mxu0 0.0
      %2015 = vmatpush1.msra.mxu0 0.0
      %2016 = vmatprep.subr.mxu0 0.0
      %2017 = vmatpush1.msra.mxu0 0.0
      %2018 = vmatprep.subr.mxu0 0.0
      %2019 = vmatpush1.msra.mxu0 0.0
      %2020 = vmatprep.subr.mxu0 0.0
      %2021 = vmatpush1.msra.mxu0 0.0
      %2022 = vmatprep.subr.mxu0 0.0
      %2023 = vmatpush1.msra.mxu0 0.0
      %2024 = vmatprep.subr.mxu0 0.0
      %2025 = vmatpush1.msra.mxu0 0.0
      %2026 = vmatprep.subr.mxu0 0.0
      %2027 = vmatpush1.msra.mxu0 0.0
      %2028 = vmatprep.subr.mxu0 0.0
      %2029 = vmatpush1.msra.mxu0 0.0
      %2030 = vmatprep.subr.mxu0 0.0
      %2031 = vmatpush1.msra.mxu0 0.0
      %2032 = vmatprep.subr.mxu0 0.0
      %2033 = vmatpush1.msra.mxu0 0.0
      %2034 = vmatprep.mubr.f32.mxu0 0.0
      %2035 = vmatmul.mubr.f32.gmra.mrb[0].mxu0 %v1863
      %v2036 = vpop.f32.mrb[0].mxu0
      %v2037 = vadd.f32 0.0, %v2036
      %v2038 = vpop.f32.mrb[0].mxu0
      %v2039 = vadd.f32 0.0, %v2038
      %2040 = vmatprep.mubr.f32.mxu0 0.0
      %2041 = vmatmul.mubr.f32.gmra.mrb[0].mxu0 %v1866
      %v2042 = vpop.f32.mrb[0].mxu0
      %v2043 = vadd.f32 0.0, %v2042
      %v2044 = vpop.f32.mrb[0].mxu0
      %v2045 = vadd.f32 0.0, %v2044
      %2046 = vmatprep.mubr.f32.mxu0 0.0
      %2047 = vmatmul.mubr.f32.gmra.mrb[0].mxu0 %v1869
      %v2048 = vpop.f32.mrb[0].mxu0
      %v2049 = vadd.f32 0.0, %v2048
      %v2050 = vpop.f32.mrb[0].mxu0
      %v2051 = vadd.f32 0.0, %v2050
      %2052 = vmatprep.mubr.f32.mxu0 0.0
      %2053 = vmatmul.mubr.f32.gmra.mrb[0].mxu0 %v1872
      %v2054 = vpop.f32.mrb[0].mxu0
      %v2055 = vadd.f32 0.0, %v2054
      %v2056 = vpop.f32.mrb[0].mxu0
      %v2057 = vadd.f32 0.0, %v2056
      %2058 = vmatprep.mubr.f32.mxu0 0.0
      %2059 = vmatmul.mubr.f32.gmra.mrb[0].mxu0 %v1875
      %v2060 = vpop.f32.mrb[0].mxu0
      %v2061 = vadd.f32 0.0, %v2060
      %v2062 = vpop.f32.mrb[0].mxu0
      %v2063 = vadd.f32 0.0, %v2062
      %2064 = vmatprep.mubr.f32.mxu0 0.0
      %2065 = vmatmul.mubr.f32.gmra.mrb[0].mxu0 %v1878
      %v2066 = vpop.f32.mrb[0].mxu0
      %v2067 = vadd.f32 0.0, %v2066
      %v2068 = vpop.f32.mrb[0].mxu0
      %v2069 = vadd.f32 0.0, %v2068
      %2070 = vmatprep.mubr.f32.mxu0 0.0
      %2071 = vmatmul.mubr.f32.gmra.mrb[0].mxu0 %v1881
      %v2072 = vpop.f32.mrb[0].mxu0
      %v2073 = vadd.f32 0.0, %v2072
      %v2074 = vpop.f32.mrb[0].mxu0
      %v2075 = vadd.f32 0.0, %v2074
      %2076 = vmatprep.mubr.f32.mxu0 0.0
      %2077 = vmatmul.mubr.f32.gmra.mrb[0].mxu0 %v1884
      %v2078 = vpop.f32.mrb[0].mxu0
      %v2079 = vadd.f32 0.0, %v2078
      %v2080 = vpop.f32.mrb[0].mxu0
      %v2081 = vadd.f32 0.0, %v2080
      %2082 = vmatprep.mubr.f32.mxu0 0.0
      %2083 = vmatmul.mubr.f32.gmra.mrb[0].mxu0 %v1887
      %v2084 = vpop.f32.mrb[0].mxu0
      %v2085 = vadd.f32 0.0, %v2084
      %v2086 = vpop.f32.mrb[0].mxu0
      %v2087 = vadd.f32 0.0, %v2086
      %2088 = vmatprep.mubr.f32.mxu0 0.0
      %2089 = vmatmul.mubr.f32.gmra.mrb[0].mxu0 %v1890
      %v2090 = vpop.f32.mrb[0].mxu0
      %v2091 = vadd.f32 0.0, %v2090
      %v2092 = vpop.f32.mrb[0].mxu0
      %v2093 = vadd.f32 0.0, %v2092
      %2094 = vmatprep.mubr.f32.mxu0 0.0
      %2095 = vmatmul.mubr.f32.gmra.mrb[0].mxu0 %v1893
      %v2096 = vpop.f32.mrb[0].mxu0
      %v2097 = vadd.f32 0.0, %v2096
      %v2098 = vpop.f32.mrb[0].mxu0
      %v2099 = vadd.f32 0.0, %v2098
      %2100 = vmatprep.mubr.f32.mxu0 0.0
      %2101 = vmatmul.mubr.f32.gmra.mrb[0].mxu0 %v1896
      %v2102 = vpop.f32.mrb[0].mxu0
      %v2103 = vadd.f32 0.0, %v2102
      %v2104 = vpop.f32.mrb[0].mxu0
      %v2105 = vadd.f32 0.0, %v2104
      %2106 = vmatprep.mubr.f32.mxu0 0.0
      %2107 = vmatmul.mubr.f32.gmra.mrb[0].mxu0 %v1899
      %v2108 = vpop.f32.mrb[0].mxu0
      %v2109 = vadd.f32 0.0, %v2108
      %v2110 = vpop.f32.mrb[0].mxu0
      %v2111 = vadd.f32 0.0, %v2110
      %2112 = vmatprep.mubr.f32.mxu0 0.0
      %2113 = vmatmul.mubr.f32.gmra.mrb[0].mxu0 %v1902
      %v2114 = vpop.f32.mrb[0].mxu0
      %v2115 = vadd.f32 0.0, %v2114
      %v2116 = vpop.f32.mrb[0].mxu0
      %v2117 = vadd.f32 0.0, %v2116
      %2118 = vmatprep.mubr.f32.mxu0 0.0
      %2119 = vmatmul.mubr.f32.gmra.mrb[0].mxu0 %v1905
      %v2120 = vpop.f32.mrb[0].mxu0
      %v2121 = vadd.f32 0.0, %v2120
      %v2122 = vpop.f32.mrb[0].mxu0
      %v2123 = vadd.f32 0.0, %v2122
      %2124 = vmatprep.mubr.f32.mxu0 0.0
      %2125 = vmatmul.mubr.f32.gmra.mrb[0].mxu0 %v1908
      %v2126 = vpop.f32.mrb[0].mxu0
      %v2127 = vadd.f32 0.0, %v2126
      %v2128 = vpop.f32.mrb[0].mxu0
      %v2129 = vadd.f32 0.0, %v2128
      %2130 = vmatprep.mubr.f32.mxu0 0.0
      %2131 = vmatmul.mubr.f32.gmra.mrb[0].mxu0 %v1911
      %v2132 = vpop.f32.mrb[0].mxu0
      %v2133 = vadd.f32 0.0, %v2132
      %v2134 = vpop.f32.mrb[0].mxu0
      %v2135 = vadd.f32 0.0, %v2134
      %2136 = vmatprep.mubr.f32.mxu0 0.0
      %2137 = vmatmul.mubr.f32.gmra.mrb[0].mxu0 %v1914
      %v2138 = vpop.f32.mrb[0].mxu0
      %v2139 = vadd.f32 0.0, %v2138
      %v2140 = vpop.f32.mrb[0].mxu0
      %v2141 = vadd.f32 0.0, %v2140
      %2142 = vmatprep.mubr.f32.mxu0 0.0
      %2143 = vmatmul.mubr.f32.gmra.mrb[0].mxu0 %v1917
      %v2144 = vpop.f32.mrb[0].mxu0
      %v2145 = vadd.f32 0.0, %v2144
      %v2146 = vpop.f32.mrb[0].mxu0
      %v2147 = vadd.f32 0.0, %v2146
      %2148 = vmatprep.mubr.f32.mxu0 0.0
      %2149 = vmatmul.mubr.f32.gmra.mrb[0].mxu0 %v1920
      %v2150 = vpop.f32.mrb[0].mxu0
      %v2151 = vadd.f32 0.0, %v2150
      %v2152 = vpop.f32.mrb[0].mxu0
      %v2153 = vadd.f32 0.0, %v2152
      %2154 = vmatprep.mubr.f32.mxu0 0.0
      %2155 = vmatmul.mubr.f32.gmra.mrb[0].mxu0 %v1923
      %v2156 = vpop.f32.mrb[0].mxu0
      %v2157 = vadd.f32 0.0, %v2156
      %v2158 = vpop.f32.mrb[0].mxu0
      %v2159 = vadd.f32 0.0, %v2158
      %2160 = vmatprep.mubr.f32.mxu0 0.0
      %2161 = vmatmul.mubr.f32.gmra.mrb[0].mxu0 %v1926
      %v2162 = vpop.f32.mrb[0].mxu0
      %v2163 = vadd.f32 0.0, %v2162
      %v2164 = vpop.f32.mrb[0].mxu0
      %v2165 = vadd.f32 0.0, %v2164
      %2166 = vmatprep.mubr.f32.mxu0 0.0
      %2167 = vmatmul.mubr.f32.gmra.mrb[0].mxu0 %v1929
      %v2168 = vpop.f32.mrb[0].mxu0
      %v2169 = vadd.f32 0.0, %v2168
      %v2170 = vpop.f32.mrb[0].mxu0
      %v2171 = vadd.f32 0.0, %v2170
      %2172 = vmatprep.mubr.f32.mxu0 0.0
      %2173 = vmatmul.mubr.f32.gmra.mrb[0].mxu0 %v1932
      %v2174 = vpop.f32.mrb[0].mxu0
      %v2175 = vadd.f32 0.0, %v2174
      %v2176 = vpop.f32.mrb[0].mxu0
      %v2177 = vadd.f32 0.0, %v2176
      %2178 = vmatprep.mubr.f32.mxu0 0.0
      %2179 = vmatmul.mubr.f32.gmra.mrb[0].mxu0 %v1935
      %v2180 = vpop.f32.mrb[0].mxu0
      %v2181 = vadd.f32 0.0, %v2180
      %v2182 = vpop.f32.mrb[0].mxu0
      %v2183 = vadd.f32 0.0, %v2182
      %2184 = vmatprep.mubr.f32.mxu0 0.0
      %2185 = vmatmul.mubr.f32.gmra.mrb[0].mxu0 %v1938
      %v2186 = vpop.f32.mrb[0].mxu0
      %v2187 = vadd.f32 0.0, %v2186
      %v2188 = vpop.f32.mrb[0].mxu0
      %v2189 = vadd.f32 0.0, %v2188
      %2190 = vmatprep.mubr.f32.mxu0 0.0
      %2191 = vmatmul.mubr.f32.gmra.mrb[0].mxu0 %v1941
      %v2192 = vpop.f32.mrb[0].mxu0
      %v2193 = vadd.f32 0.0, %v2192
      %v2194 = vpop.f32.mrb[0].mxu0
      %v2195 = vadd.f32 0.0, %v2194
      %2196 = vmatprep.mubr.f32.mxu0 0.0
      %2197 = vmatmul.mubr.f32.gmra.mrb[0].mxu0 %v1944
      %v2198 = vpop.f32.mrb[0].mxu0
      %v2199 = vadd.f32 0.0, %v2198
      %v2200 = vpop.f32.mrb[0].mxu0
      %v2201 = vadd.f32 0.0, %v2200
      %2202 = vmatprep.mubr.f32.mxu0 0.0
      %2203 = vmatmul.mubr.f32.gmra.mrb[0].mxu0 %v1947
      %v2204 = vpop.f32.mrb[0].mxu0
      %v2205 = vadd.f32 0.0, %v2204
      %v2206 = vpop.f32.mrb[0].mxu0
      %v2207 = vadd.f32 0.0, %v2206
      %2208 = vmatprep.mubr.f32.mxu0 0.0
      %2209 = vmatmul.mubr.f32.gmra.mrb[0].mxu0 %v1950
      %v2210 = vpop.f32.mrb[0].mxu0
      %v2211 = vadd.f32 0.0, %v2210
      %v2212 = vpop.f32.mrb[0].mxu0
      %v2213 = vadd.f32 0.0, %v2212
      %2214 = vmatprep.mubr.f32.mxu0 0.0
      %2215 = vmatmul.mubr.f32.gmra.mrb[0].mxu0 %v1953
      %v2216 = vpop.f32.mrb[0].mxu0
      %v2217 = vadd.f32 0.0, %v2216
      %v2218 = vpop.f32.mrb[0].mxu0
      %v2219 = vadd.f32 0.0, %v2218
      %2220 = vmatprep.mubr.f32.mxu0 0.0
      %2221 = vmatmul.mubr.f32.gmra.mrb[0].mxu0 %v1956
      %v2222 = vpop.f32.mrb[0].mxu0
      %v2223 = vadd.f32 0.0, %v2222
      %v2224 = vpop.f32.mrb[0].mxu0
      %v2225 = vadd.f32 0.0, %v2224
      %2226 = vmatprep.mubr.f32.mxu0 0.0
      %2227 = vmatmul.mubr.f32.gmra.mrb[0].mxu0 %v1959
      %v2228 = vpop.f32.mrb[0].mxu0
      %v2229 = vadd.f32 0.0, %v2228
      %v2230 = vpop.f32.mrb[0].mxu0
      %v2231 = vadd.f32 0.0, %v2230
      %2232 = vmatprep.mubr.f32.mxu0 0.0
      %2233 = vmatmul.mubr.f32.gmra.mrb[0].mxu0 %v1962
      %v2234 = vpop.f32.mrb[0].mxu0
      %v2235 = vadd.f32 0.0, %v2234
      %v2236 = vpop.f32.mrb[0].mxu0
      %v2237 = vadd.f32 0.0, %v2236
      %2238 = vmatprep.mubr.f32.mxu0 0.0
      %2239 = vmatmul.mubr.f32.gmra.mrb[0].mxu0 %v1965
      %v2240 = vpop.f32.mrb[0].mxu0
      %v2241 = vadd.f32 0.0, %v2240
      %v2242 = vpop.f32.mrb[0].mxu0
      %v2243 = vadd.f32 0.0, %v2242
      %2244 = vmatprep.mubr.f32.mxu0 0.0
      %2245 = vmatmul.mubr.f32.gmra.mrb[0].mxu0 %v1968
      %v2246 = vpop.f32.mrb[0].mxu0
      %v2247 = vadd.f32 0.0, %v2246
      %v2248 = vpop.f32.mrb[0].mxu0
      %v2249 = vadd.f32 0.0, %v2248
      %2250 = vdwg.mxu0
      %2251 = vrot.lane.b32.xlu0 %v2037, 17
      %v2252 = vpop.permute.xlu0 %2251
      %2253 = vrot.lane.b32.xlu0 %v2043, 17
      %v2254 = vpop.permute.xlu0 %2253
      %2255 = vrot.lane.b32.xlu0 %v2049, 17
      %v2256 = vpop.permute.xlu0 %2255
      %2257 = vrot.lane.b32.xlu0 %v2055, 17
      %v2258 = vpop.permute.xlu0 %2257
      %2259 = vrot.lane.b32.xlu0 %v2039, 17
      %v2260 = vpop.permute.xlu0 %2259
      %2261 = vrot.lane.b32.xlu0 %v2045, 17
      %v2262 = vpop.permute.xlu0 %2261
      %2263 = vrot.lane.b32.xlu0 %v2051, 17
      %v2264 = vpop.permute.xlu0 %2263
      %2265 = vrot.lane.b32.xlu0 %v2057, 17
      %v2266 = vpop.permute.xlu0 %2265
      %v2267 = vsel %vm1049, %v2252, %v2260
      %v2268 = vsel %vm1049, %v2254, %v2262
      %v2269 = vsel %vm1049, %v2256, %v2264
      %v2270 = vsel %vm1049, %v2258, %v2266
      %v2271 = vsel %vm1049, %v2260, %v2252
      %v2272 = vsel %vm1049, %v2262, %v2254
      %v2273 = vsel %vm1049, %v2264, %v2256
      %v2274 = vsel %vm1049, %v2266, %v2258
      %v2275 = vmul.f32 %v2271, %v1069
      %v2276 = vmul.f32 %v2267, %v1073
      %v2277 = vmul.f32 %v2272, %v1069
      %v2278 = vmul.f32 %v2268, %v1073
      %v2279 = vmul.f32 %v2273, %v1069
      %v2280 = vmul.f32 %v2269, %v1073
      %v2281 = vmul.f32 %v2274, %v1069
      %v2282 = vmul.f32 %v2270, %v1073
      %v2283 = vadd.f32 %v2275, 0.0
      %v2284 = vadd.f32 %v2276, 0.0
      %v2285 = vadd.f32 %v2277, 0.0
      %v2286 = vadd.f32 %v2278, 0.0
      %v2287 = vadd.f32 %v2279, 0.0
      %v2288 = vadd.f32 %v2280, 0.0
      %v2289 = vadd.f32 %v2281, 0.0
      %v2290 = vadd.f32 %v2282, 0.0
      %2291 = vrot.lane.b32.xlu0 %v2061, 16
      %v2292 = vpop.permute.xlu0 %2291
      %2293 = vrot.lane.b32.xlu0 %v2067, 16
      %v2294 = vpop.permute.xlu0 %2293
      %2295 = vrot.lane.b32.xlu0 %v2073, 16
      %v2296 = vpop.permute.xlu0 %2295
      %2297 = vrot.lane.b32.xlu0 %v2079, 16
      %v2298 = vpop.permute.xlu0 %2297
      %2299 = vrot.lane.b32.xlu0 %v2063, 16
      %v2300 = vpop.permute.xlu0 %2299
      %2301 = vrot.lane.b32.xlu0 %v2069, 16
      %v2302 = vpop.permute.xlu0 %2301
      %2303 = vrot.lane.b32.xlu0 %v2075, 16
      %v2304 = vpop.permute.xlu0 %2303
      %2305 = vrot.lane.b32.xlu0 %v2081, 16
      %v2306 = vpop.permute.xlu0 %2305
      %v2307 = vsel %vm1138, %v2292, %v2300
      %v2308 = vsel %vm1138, %v2294, %v2302
      %v2309 = vsel %vm1138, %v2296, %v2304
      %v2310 = vsel %vm1138, %v2298, %v2306
      %v2311 = vsel %vm1138, %v2300, %v2292
      %v2312 = vsel %vm1138, %v2302, %v2294
      %v2313 = vsel %vm1138, %v2304, %v2296
      %v2314 = vsel %vm1138, %v2306, %v2298
      %v2315 = vmul.f32 %v2311, %v1158
      %v2316 = vmul.f32 %v2307, %v1162
      %v2317 = vmul.f32 %v2312, %v1158
      %v2318 = vmul.f32 %v2308, %v1162
      %v2319 = vmul.f32 %v2313, %v1158
      %v2320 = vmul.f32 %v2309, %v1162
      %v2321 = vmul.f32 %v2314, %v1158
      %v2322 = vmul.f32 %v2310, %v1162
      %v2323 = vadd.f32 %v2283, %v2315
      %v2324 = vadd.f32 %v2284, %v2316
      %v2325 = vadd.f32 %v2285, %v2317
      %v2326 = vadd.f32 %v2286, %v2318
      %v2327 = vadd.f32 %v2287, %v2319
      %v2328 = vadd.f32 %v2288, %v2320
      %v2329 = vadd.f32 %v2289, %v2321
      %v2330 = vadd.f32 %v2290, %v2322
      %2331 = vrot.lane.b32.xlu0 %v2085, 15
      %v2332 = vpop.permute.xlu0 %2331
      %2333 = vrot.lane.b32.xlu0 %v2091, 15
      %v2334 = vpop.permute.xlu0 %2333
      %2335 = vrot.lane.b32.xlu0 %v2097, 15
      %v2336 = vpop.permute.xlu0 %2335
      %2337 = vrot.lane.b32.xlu0 %v2103, 15
      %v2338 = vpop.permute.xlu0 %2337
      %2339 = vrot.lane.b32.xlu0 %v2087, 15
      %v2340 = vpop.permute.xlu0 %2339
      %2341 = vrot.lane.b32.xlu0 %v2093, 15
      %v2342 = vpop.permute.xlu0 %2341
      %2343 = vrot.lane.b32.xlu0 %v2099, 15
      %v2344 = vpop.permute.xlu0 %2343
      %2345 = vrot.lane.b32.xlu0 %v2105, 15
      %v2346 = vpop.permute.xlu0 %2345
      %v2347 = vsel %vm1227, %v2332, %v2340
      %v2348 = vsel %vm1227, %v2334, %v2342
      %v2349 = vsel %vm1227, %v2336, %v2344
      %v2350 = vsel %vm1227, %v2338, %v2346
      %v2351 = vsel %vm1227, %v2340, %v2332
      %v2352 = vsel %vm1227, %v2342, %v2334
      %v2353 = vsel %vm1227, %v2344, %v2336
      %v2354 = vsel %vm1227, %v2346, %v2338
      %v2355 = vmul.f32 %v2351, %v1247
      %v2356 = vmul.f32 %v2347, %v1251
      %v2357 = vmul.f32 %v2352, %v1247
      %v2358 = vmul.f32 %v2348, %v1251
      %v2359 = vmul.f32 %v2353, %v1247
      %v2360 = vmul.f32 %v2349, %v1251
      %v2361 = vmul.f32 %v2354, %v1247
      %v2362 = vmul.f32 %v2350, %v1251
      %v2363 = vadd.f32 %v2323, %v2355
      %v2364 = vadd.f32 %v2324, %v2356
      %v2365 = vadd.f32 %v2325, %v2357
      %v2366 = vadd.f32 %v2326, %v2358
      %v2367 = vadd.f32 %v2327, %v2359
      %v2368 = vadd.f32 %v2328, %v2360
      %v2369 = vadd.f32 %v2329, %v2361
      %v2370 = vadd.f32 %v2330, %v2362
      %2371 = vrot.lane.b32.xlu0 %v2109, 1
      %v2372 = vpop.permute.xlu0 %2371
      %2373 = vrot.lane.b32.xlu0 %v2115, 1
      %v2374 = vpop.permute.xlu0 %2373
      %2375 = vrot.lane.b32.xlu0 %v2121, 1
      %v2376 = vpop.permute.xlu0 %2375
      %2377 = vrot.lane.b32.xlu0 %v2127, 1
      %v2378 = vpop.permute.xlu0 %2377
      %2379 = vrot.lane.b32.xlu0 %v2111, 1
      %v2380 = vpop.permute.xlu0 %2379
      %2381 = vrot.lane.b32.xlu0 %v2117, 1
      %v2382 = vpop.permute.xlu0 %2381
      %2383 = vrot.lane.b32.xlu0 %v2123, 1
      %v2384 = vpop.permute.xlu0 %2383
      %2385 = vrot.lane.b32.xlu0 %v2129, 1
      %v2386 = vpop.permute.xlu0 %2385
      %v2387 = vsel %vm1316, %v2372, %v2380
      %v2388 = vsel %vm1316, %v2374, %v2382
      %v2389 = vsel %vm1316, %v2376, %v2384
      %v2390 = vsel %vm1316, %v2378, %v2386
      %v2391 = vsel %vm1316, %v2380, %v2372
      %v2392 = vsel %vm1316, %v2382, %v2374
      %v2393 = vsel %vm1316, %v2384, %v2376
      %v2394 = vsel %vm1316, %v2386, %v2378
      %v2395 = vmul.f32 %v2391, %v1336
      %v2396 = vmul.f32 %v2387, %v1340
      %v2397 = vmul.f32 %v2392, %v1336
      %v2398 = vmul.f32 %v2388, %v1340
      %v2399 = vmul.f32 %v2393, %v1336
      %v2400 = vmul.f32 %v2389, %v1340
      %v2401 = vmul.f32 %v2394, %v1336
      %v2402 = vmul.f32 %v2390, %v1340
      %v2403 = vadd.f32 %v2363, %v2395
      %v2404 = vadd.f32 %v2364, %v2396
      %v2405 = vadd.f32 %v2365, %v2397
      %v2406 = vadd.f32 %v2366, %v2398
      %v2407 = vadd.f32 %v2367, %v2399
      %v2408 = vadd.f32 %v2368, %v2400
      %v2409 = vadd.f32 %v2369, %v2401
      %v2410 = vadd.f32 %v2370, %v2402
      %v2411 = vadd.f32 %v2403, %v2133
      %v2412 = vadd.f32 %v2404, %v2135
      %v2413 = vadd.f32 %v2405, %v2139
      %v2414 = vadd.f32 %v2406, %v2141
      %v2415 = vadd.f32 %v2407, %v2145
      %v2416 = vadd.f32 %v2408, %v2147
      %v2417 = vadd.f32 %v2409, %v2151
      %v2418 = vadd.f32 %v2410, %v2153
      %2419 = vrot.lane.b32.xlu0 %v2157, 127
      %v2420 = vpop.permute.xlu0 %2419
      %2421 = vrot.lane.b32.xlu0 %v2163, 127
      %v2422 = vpop.permute.xlu0 %2421
      %2423 = vrot.lane.b32.xlu0 %v2169, 127
      %v2424 = vpop.permute.xlu0 %2423
      %2425 = vrot.lane.b32.xlu0 %v2175, 127
      %v2426 = vpop.permute.xlu0 %2425
      %2427 = vrot.lane.b32.xlu0 %v2159, 127
      %v2428 = vpop.permute.xlu0 %2427
      %2429 = vrot.lane.b32.xlu0 %v2165, 127
      %v2430 = vpop.permute.xlu0 %2429
      %2431 = vrot.lane.b32.xlu0 %v2171, 127
      %v2432 = vpop.permute.xlu0 %2431
      %2433 = vrot.lane.b32.xlu0 %v2177, 127
      %v2434 = vpop.permute.xlu0 %2433
      %v2435 = vsel %vm1421, %v2420, %v2428
      %v2436 = vsel %vm1421, %v2422, %v2430
      %v2437 = vsel %vm1421, %v2424, %v2432
      %v2438 = vsel %vm1421, %v2426, %v2434
      %v2439 = vsel %vm1421, %v2428, %v2420
      %v2440 = vsel %vm1421, %v2430, %v2422
      %v2441 = vsel %vm1421, %v2432, %v2424
      %v2442 = vsel %vm1421, %v2434, %v2426
      %v2443 = vmul.f32 %v2435, %v1441
      %v2444 = vmul.f32 %v2439, %v1445
      %v2445 = vmul.f32 %v2436, %v1441
      %v2446 = vmul.f32 %v2440, %v1445
      %v2447 = vmul.f32 %v2437, %v1441
      %v2448 = vmul.f32 %v2441, %v1445
      %v2449 = vmul.f32 %v2438, %v1441
      %v2450 = vmul.f32 %v2442, %v1445
      %v2451 = vadd.f32 %v2411, %v2443
      %v2452 = vadd.f32 %v2412, %v2444
      %v2453 = vadd.f32 %v2413, %v2445
      %v2454 = vadd.f32 %v2414, %v2446
      %v2455 = vadd.f32 %v2415, %v2447
      %v2456 = vadd.f32 %v2416, %v2448
      %v2457 = vadd.f32 %v2417, %v2449
      %v2458 = vadd.f32 %v2418, %v2450
      %2459 = vrot.lane.b32.xlu0 %v2181, 113
      %v2460 = vpop.permute.xlu0 %2459
      %2461 = vrot.lane.b32.xlu0 %v2187, 113
      %v2462 = vpop.permute.xlu0 %2461
      %2463 = vrot.lane.b32.xlu0 %v2193, 113
      %v2464 = vpop.permute.xlu0 %2463
      %2465 = vrot.lane.b32.xlu0 %v2199, 113
      %v2466 = vpop.permute.xlu0 %2465
      %2467 = vrot.lane.b32.xlu0 %v2183, 113
      %v2468 = vpop.permute.xlu0 %2467
      %2469 = vrot.lane.b32.xlu0 %v2189, 113
      %v2470 = vpop.permute.xlu0 %2469
      %2471 = vrot.lane.b32.xlu0 %v2195, 113
      %v2472 = vpop.permute.xlu0 %2471
      %2473 = vrot.lane.b32.xlu0 %v2201, 113
      %v2474 = vpop.permute.xlu0 %2473
      %v2475 = vsel %vm1510, %v2460, %v2468
      %v2476 = vsel %vm1510, %v2462, %v2470
      %v2477 = vsel %vm1510, %v2464, %v2472
      %v2478 = vsel %vm1510, %v2466, %v2474
      %v2479 = vsel %vm1510, %v2468, %v2460
      %v2480 = vsel %vm1510, %v2470, %v2462
      %v2481 = vsel %vm1510, %v2472, %v2464
      %v2482 = vsel %vm1510, %v2474, %v2466
      %v2483 = vmul.f32 %v2475, %v1530
      %v2484 = vmul.f32 %v2479, %v1534
      %v2485 = vmul.f32 %v2476, %v1530
      %v2486 = vmul.f32 %v2480, %v1534
      %v2487 = vmul.f32 %v2477, %v1530
      %v2488 = vmul.f32 %v2481, %v1534
      %v2489 = vmul.f32 %v2478, %v1530
      %v2490 = vmul.f32 %v2482, %v1534
      %v2491 = vadd.f32 %v2451, %v2483
      %v2492 = vadd.f32 %v2452, %v2484
      %v2493 = vadd.f32 %v2453, %v2485
      %v2494 = vadd.f32 %v2454, %v2486
      %v2495 = vadd.f32 %v2455, %v2487
      %v2496 = vadd.f32 %v2456, %v2488
      %v2497 = vadd.f32 %v2457, %v2489
      %v2498 = vadd.f32 %v2458, %v2490
      %2499 = vrot.lane.b32.xlu0 %v2205, 112
      %v2500 = vpop.permute.xlu0 %2499
      %2501 = vrot.lane.b32.xlu0 %v2211, 112
      %v2502 = vpop.permute.xlu0 %2501
      %2503 = vrot.lane.b32.xlu0 %v2217, 112
      %v2504 = vpop.permute.xlu0 %2503
      %2505 = vrot.lane.b32.xlu0 %v2223, 112
      %v2506 = vpop.permute.xlu0 %2505
      %2507 = vrot.lane.b32.xlu0 %v2207, 112
      %v2508 = vpop.permute.xlu0 %2507
      %2509 = vrot.lane.b32.xlu0 %v2213, 112
      %v2510 = vpop.permute.xlu0 %2509
      %2511 = vrot.lane.b32.xlu0 %v2219, 112
      %v2512 = vpop.permute.xlu0 %2511
      %2513 = vrot.lane.b32.xlu0 %v2225, 112
      %v2514 = vpop.permute.xlu0 %2513
      %v2515 = vsel %vm1599, %v2500, %v2508
      %v2516 = vsel %vm1599, %v2502, %v2510
      %v2517 = vsel %vm1599, %v2504, %v2512
      %v2518 = vsel %vm1599, %v2506, %v2514
      %v2519 = vsel %vm1599, %v2508, %v2500
      %v2520 = vsel %vm1599, %v2510, %v2502
      %v2521 = vsel %vm1599, %v2512, %v2504
      %v2522 = vsel %vm1599, %v2514, %v2506
      %v2523 = vmul.f32 %v2515, %v1619
      %v2524 = vmul.f32 %v2519, %v1623
      %v2525 = vmul.f32 %v2516, %v1619
      %v2526 = vmul.f32 %v2520, %v1623
      %v2527 = vmul.f32 %v2517, %v1619
      %v2528 = vmul.f32 %v2521, %v1623
      %v2529 = vmul.f32 %v2518, %v1619
      %v2530 = vmul.f32 %v2522, %v1623
      %v2531 = vadd.f32 %v2491, %v2523
      %v2532 = vadd.f32 %v2492, %v2524
      %v2533 = vadd.f32 %v2493, %v2525
      %v2534 = vadd.f32 %v2494, %v2526
      %v2535 = vadd.f32 %v2495, %v2527
      %v2536 = vadd.f32 %v2496, %v2528
      %v2537 = vadd.f32 %v2497, %v2529
      %v2538 = vadd.f32 %v2498, %v2530
      %2539 = vrot.lane.b32.xlu0 %v2229, 111
      %v2540 = vpop.permute.xlu0 %2539
      %2541 = vrot.lane.b32.xlu0 %v2235, 111
      %v2542 = vpop.permute.xlu0 %2541
      %2543 = vrot.lane.b32.xlu0 %v2241, 111
      %v2544 = vpop.permute.xlu0 %2543
      %2545 = vrot.lane.b32.xlu0 %v2247, 111
      %v2546 = vpop.permute.xlu0 %2545
      %2547 = vrot.lane.b32.xlu0 %v2231, 111
      %v2548 = vpop.permute.xlu0 %2547
      %2549 = vrot.lane.b32.xlu0 %v2237, 111
      %v2550 = vpop.permute.xlu0 %2549
      %2551 = vrot.lane.b32.xlu0 %v2243, 111
      %v2552 = vpop.permute.xlu0 %2551
      %2553 = vrot.lane.b32.xlu0 %v2249, 111
      %v2554 = vpop.permute.xlu0 %2553
      %v2555 = vsel %vm1688, %v2540, %v2548
      %v2556 = vsel %vm1688, %v2542, %v2550
      %v2557 = vsel %vm1688, %v2544, %v2552
      %v2558 = vsel %vm1688, %v2546, %v2554
      %v2559 = vsel %vm1688, %v2548, %v2540
      %v2560 = vsel %vm1688, %v2550, %v2542
      %v2561 = vsel %vm1688, %v2552, %v2544
      %v2562 = vsel %vm1688, %v2554, %v2546
      %v2563 = vmul.f32 %v2555, %v1708
      %v2564 = vmul.f32 %v2559, %v1712
      %v2565 = vmul.f32 %v2556, %v1708
      %v2566 = vmul.f32 %v2560, %v1712
      %v2567 = vmul.f32 %v2557, %v1708
      %v2568 = vmul.f32 %v2561, %v1712
      %v2569 = vmul.f32 %v2558, %v1708
      %v2570 = vmul.f32 %v2562, %v1712
      %v2571 = vadd.f32 %v2531, %v2563
      %v2572 = vadd.f32 %v2532, %v2564
      %v2573 = vadd.f32 %v2533, %v2565
      %v2574 = vadd.f32 %v2534, %v2566
      %v2575 = vadd.f32 %v2535, %v2567
      %v2576 = vadd.f32 %v2536, %v2568
      %v2577 = vadd.f32 %v2537, %v2569
      %v2578 = vadd.f32 %v2538, %v2570
      %v2579 = vld [vmem:[%s5] sm:$0xff]
      %v2580 = vld [vmem:[%s5 + $0x8] sm:$0xff]
      %v2581 = vld [vmem:[%s5 + $0x10] sm:$0xff]
      %v2582 = vld [vmem:[%s5 + $0x18] sm:$0xff]
      %2584 = vset.pattern.permute.xlu0 0
      %2585 = vperm.xlu0 %2584, %v2579
      %v2586 = vpop.permute.xlu0 %2585
      %2589 = vset.pattern.permute.xlu0 0
      %2590 = vperm.xlu0 %2589, %v2580
      %v2591 = vpop.permute.xlu0 %2590
      %2594 = vset.pattern.permute.xlu0 0
      %2595 = vperm.xlu0 %2594, %v2581
      %v2596 = vpop.permute.xlu0 %2595
      %2599 = vset.pattern.permute.xlu0 0
      %2600 = vperm.xlu0 %2599, %v2582
      %v2601 = vpop.permute.xlu0 %2600
      %v2603 = vadd.f32 %v2571, %v2586
      %v2604 = vadd.f32 %v2572, %v2586
      %v2605 = vadd.f32 %v2573, %v2591
      %v2606 = vadd.f32 %v2574, %v2591
      %v2607 = vadd.f32 %v2575, %v2596
      %v2608 = vadd.f32 %v2576, %v2596
      %v2609 = vadd.f32 %v2577, %v2601
      %v2610 = vadd.f32 %v2578, %v2601
      %v2611 = vmax.f32 %v2603, 0.0
      %v2612 = vmax.f32 %v2604, 0.0
      %v2613 = vmax.f32 %v2605, 0.0
      %v2614 = vmax.f32 %v2606, 0.0
      %v2615 = vmax.f32 %v2607, 0.0
      %v2616 = vmax.f32 %v2608, 0.0
      %v2617 = vmax.f32 %v2609, 0.0
      %v2618 = vmax.f32 %v2610, 0.0
      %v2619 = vld [vmem:[%s6] sm:$0xff]
      %v2620 = vld [vmem:[%s7] sm:$0xff]
      %2622 = vset.pattern.permute.xlu0 0
      %2623 = vperm.xlu0 %2622, %v2620
      %v2624 = vpop.permute.xlu0 %2623
      %vm2626 = vcmask 261120
      %v2628 = vsel %vm2626, %v2619, 0
      %2630 = vmatprep.subr.mxu0 %v2612
      %2631 = vmatpush1.msra.mxu0 %v2611
      %2632 = vmatprep.subr.mxu0 %v2614
      %2633 = vmatpush1.msra.mxu0 %v2613
      %2634 = vmatprep.subr.mxu0 %v2616
      %2635 = vmatpush1.msra.mxu0 %v2615
      %2636 = vmatprep.subr.mxu0 %v2618
      %2637 = vmatpush1.msra.mxu0 %v2617
      %2638 = vmatprep.subr.mxu0 0.0
      %2639 = vmatpush1.msra.mxu0 0.0
      %2640 = vmatprep.subr.mxu0 0.0
      %2641 = vmatpush1.msra.mxu0 0.0
      %2642 = vmatprep.subr.mxu0 0.0
      %2643 = vmatpush1.msra.mxu0 0.0
      %2644 = vmatprep.subr.mxu0 0.0
      %2645 = vmatpush1.msra.mxu0 0.0
      %2646 = vmatprep.subr.mxu0 0.0
      %2647 = vmatpush1.msra.mxu0 0.0
      %2648 = vmatprep.subr.mxu0 0.0
      %2649 = vmatpush1.msra.mxu0 0.0
      %2650 = vmatprep.subr.mxu0 0.0
      %2651 = vmatpush1.msra.mxu0 0.0
      %2652 = vmatprep.subr.mxu0 0.0
      %2653 = vmatpush1.msra.mxu0 0.0
      %2654 = vmatprep.subr.mxu0 0.0
      %2655 = vmatpush1.msra.mxu0 0.0
      %2656 = vmatprep.subr.mxu0 0.0
      %2657 = vmatpush1.msra.mxu0 0.0
      %2658 = vmatprep.subr.mxu0 0.0
      %2659 = vmatpush1.msra.mxu0 0.0
      %2660 = vmatprep.subr.mxu0 0.0
      %2661 = vmatpush1.msra.mxu0 0.0
      %2662 = vmatprep.subr.mxu0 0.0
      %2663 = vmatpush1.msra.mxu0 0.0
      %2664 = vmatprep.subr.mxu0 0.0
      %2665 = vmatpush1.msra.mxu0 0.0
      %2666 = vmatprep.subr.mxu0 0.0
      %2667 = vmatpush1.msra.mxu0 0.0
      %2668 = vmatprep.subr.mxu0 0.0
      %2669 = vmatpush1.msra.mxu0 0.0
      %2670 = vmatprep.subr.mxu0 0.0
      %2671 = vmatpush1.msra.mxu0 0.0
      %2672 = vmatprep.subr.mxu0 0.0
      %2673 = vmatpush1.msra.mxu0 0.0
      %2674 = vmatprep.subr.mxu0 0.0
      %2675 = vmatpush1.msra.mxu0 0.0
      %2676 = vmatprep.subr.mxu0 0.0
      %2677 = vmatpush1.msra.mxu0 0.0
      %2678 = vmatprep.subr.mxu0 0.0
      %2679 = vmatpush1.msra.mxu0 0.0
      %2680 = vmatprep.subr.mxu0 0.0
      %2681 = vmatpush1.msra.mxu0 0.0
      %2682 = vmatprep.subr.mxu0 0.0
      %2683 = vmatpush1.msra.mxu0 0.0
      %2684 = vmatprep.subr.mxu0 0.0
      %2685 = vmatpush1.msra.mxu0 0.0
      %2686 = vmatprep.subr.mxu0 0.0
      %2687 = vmatpush1.msra.mxu0 0.0
      %2688 = vmatprep.subr.mxu0 0.0
      %2689 = vmatpush1.msra.mxu0 0.0
      %2690 = vmatprep.subr.mxu0 0.0
      %2691 = vmatpush1.msra.mxu0 0.0
      %2692 = vmatprep.subr.mxu0 0.0
      %2693 = vmatpush1.msra.mxu0 0.0
      %2694 = vmatprep.mubr.f32.mxu0 0.0
      %2695 = vmatmul.mubr.f32.gmra.mrb[0].mxu0 %v2628
      %v2696 = vpop.f32.mrb[0].mxu0
      %v2697 = vadd.f32 %v2624, %v2696
      %v2698 = vpop.f32.mrb[0].mxu0
      %v2699 = vadd.f32 %v2624, %v2698
      %2700 = vdwg.mxu0
      %v2701 = vlaneseq
      %v2702 = vshrl.u32 %v2701, 7
      %vm2703 = vcmp.lt.s32.totalorder %v2702, 3
      %v2704 = vsel %vm2703, 1, 0
      %v2705 = vcvt.s32.f32 %v2704
      %v2706 = vxor.u32 %v2697, 2147483648
      %v2707 = vxor.u32 %v2699, 2147483648
      %v2708 = vmul.f32 %v2706, 1.442695
      %v2709 = vpow.pop %v2708
      %v2710 = vmul.f32 %v2707, 1.442695
      %v2711 = vpow.pop %v2710
      %v2712 = vadd.f32 %v2709, 1.0
      %v2713 = vadd.f32 %v2711, 1.0
      %v2714 = vrcp.pop %v2712
      %v2715 = vmul.f32 1.0, %v2714
      %v2716 = vrcp.pop %v2713
      %v2717 = vmul.f32 1.0, %v2716
      %v2718 = vmul.f32 %v2715, %v2705
      %v2719 = vmul.f32 %v2717, %v2705
      %2720 = vst [vmem:[%s305] sm:$0xff] %v2718
      %2721 = vst [vmem:[%s305 + $0x8] sm:$0xff] %v2719
      %p2722 = scmp.lt.s32.totalorder %s19, 1
      %s2723 = scalar_select %p2722, %s19, 1
      %s2724 = smul.addr %s2723, 2
      %s2725 = smul.addr %s2724, 8
      %s2726 = scalar_lea.vmem %s8, %s2725
      // Predicated region
      $region53: #{advanced_communication_forward.2} parent=51 // pred_check
        %p2727 = pneg %p210
      $region54: #{advanced_communication_forward.2} parent=51 // pred_check_branch
        %2729 = sbr.rel (%p2727) target = $region56
      $region55: #{advanced_communication_forward.2} parent=51 // pred_region
        _
      $region56: #{advanced_communication_forward.2} parent=51 // pred_fallthru
        _
    $region52: #{advanced_communication_forward.2} parent=5 // pred_fallthru
      _
    %p2730 = scmp.le.s32.totalorder 2, %s14
    // Predicated region
    $region57: #{advanced_communication_forward.2} parent=5 // pred_check
      %p2731 = pneg %p2730
    $region58: #{advanced_communication_forward.2} parent=5 // pred_check_branch
      %2733 = sbr.rel (%p2731) target = $region60
    $region59: #{advanced_communication_forward.2} parent=5 // pred_region
      %s2734 = ssub.s32 %s14, 2
      // Predicated region
      $region61: #{advanced_communication_forward.2} parent=59 // pred_check
        %p2735 = pneg %p216
      $region62: #{advanced_communication_forward.2} parent=59 // pred_check_branch
        %2737 = sbr.rel (%p2735) target = $region64
      $region63: #{advanced_communication_forward.2} parent=59 // pred_region
        %p2738 = scmp.lt.s32.totalorder %s20, 1
        %s2739 = scalar_select %p2738, %s20, 1
        %s2740 = smul.addr %s2739, 2
        %s2741 = smul.addr %s2740, 8
        %s2742 = scalar_lea.vmem %s8, %s2741
      $region64: #{advanced_communication_forward.2} parent=59 // pred_fallthru
        _
    $region60: #{advanced_communication_forward.2} parent=5 // pred_fallthru
      _
  $region6: #{advanced_communication_forward.2} parent=0 // loop_footer
    %s18 = sadd.s32 1, %s14
  $region7: #{advanced_communication_forward.2} parent=0 // loop_footer_branch
    %13 = sbr.rel target = $region3
  $region8: #{advanced_communication_forward.2} parent=0 // loop_exit
    _

// kernel: advanced_communication_forward.3
$region0: #{advanced_communication_forward.3}
  #allocation0 [shape = 'u32[]', space=smem, size = 0x4, offset = 0x4, fixed_abs, tag = 'smem constant byte address 0x4 - core index']
  #allocation1 [shape = 'u32[144,128]{1,0:T(1,128)}', space=vmem, size = 0x12000, scoped, tag = 'internal scratch']
  %s0 = inlined_call_operand.vmem [shape: f32[2,8,256], index: 0, kind: input, shape index: {}, may-alias: {0,1}]
  %s1 = inlined_call_operand.vmem [shape: f32[2,8,256], index: 1, kind: input, shape index: {}, may-alias: {0,1}]
  %s2 = inlined_call_operand.vmem [shape: f32[2,8,256], index: 2, kind: input, shape index: {}, may-alias: {2,16}]
  %s3 = inlined_call_operand.vmem [shape: f32[2,256,256], index: 3, kind: input, shape index: {}, may-alias: {3,17}]
  %s4 = inlined_call_operand.vmem [shape: f32[2,8,256], index: 4, kind: input, shape index: {}, may-alias: {4,18}]
  %s5 = inlined_call_operand.vmem [shape: f32[9,256], index: 5, kind: input, shape index: {}]
  %s6 = inlined_call_operand.vmem [shape: f32[288,8], index: 6, kind: input, shape index: {}]
  %s7 = inlined_call_operand.vmem [shape: f32[288,8], index: 7, kind: input, shape index: {}]
  %s8 = inlined_call_operand.vmem [shape: f32[288,1], index: 8, kind: input, shape index: {}]
  %s9 = inlined_call_operand.vmem [shape: f32[32,1], index: 9, kind: input, shape index: {}]
  %s10 = inlined_call_operand.vmem [shape: f32[144,32], index: 10, kind: input, shape index: {}]
  %s11 = inlined_call_operand.vmem [shape: f32[16,1], index: 11, kind: input, shape index: {}]
  %s12 = inlined_call_operand.vmem [shape: f32[8,16], index: 12, kind: input, shape index: {}]
  %s13 = inlined_call_operand.vmem [shape: f32[8,1], index: 13, kind: input, shape index: {}]
  %s14 = inlined_call_operand.vmem [shape: f32[8,1], index: 14, kind: input, shape index: {}]
  %s15 = inlined_call_operand.vmem [shape: f32[1,8,256], index: 15, kind: output, shape index: {0}]
  %s16 = inlined_call_operand.vmem [shape: f32[2,8,256], index: 16, kind: output, shape index: {1}, may-alias: {2,16}]
  %s17 = inlined_call_operand.vmem [shape: f32[2,256,256], index: 17, kind: output, shape index: {2}, may-alias: {3,17}]
  %s18 = inlined_call_operand.vmem [shape: f32[2,8,256], index: 18, kind: output, shape index: {3}, may-alias: {4,18}]
  %19 = xla_tuple %s15, %s16, %s17, %s18
  %s20 = sld [smem:[#allocation0]]
  $region94: #{advanced_communication_forward.3} parent=0
    _
  %s22 = ssub.s32 1, %s20
  %s23 = scalar_select 0, %s22, %s20
  // Predicated region
  $region2: #{advanced_communication_forward.3} parent=0 // pred_check
    _
  $region3: #{advanced_communication_forward.3} parent=0 // pred_check_branch
    %25 = sbr.rel (0) target = $region5
  $region4: #{advanced_communication_forward.3} parent=0 // pred_region
    _
  $region5: #{advanced_communication_forward.3} parent=0 // pred_fallthru
    _
  // Predicated region
  $region6: #{advanced_communication_forward.3} parent=0 // pred_check
    _
  $region7: #{advanced_communication_forward.3} parent=0 // pred_check_branch
    %27 = sbr.rel (0) target = $region9
  $region8: #{advanced_communication_forward.3} parent=0 // pred_region
    %s28 = sadd.s32 0, 1
    %p29 = scmp.lt.s32.totalorder %s28, 1
    %s30 = scalar_select %p29, %s28, 1
    %s31 = smul.addr %s30, 2
    %s32 = smul.addr %s31, 8
    %s33 = scalar_lea.vmem %s1, %s32
    %s34 = sadd.s32 0, 1
  $region9: #{advanced_communication_forward.3} parent=0 // pred_fallthru
    _
  // Predicated region
  $region10: #{advanced_communication_forward.3} parent=0 // pred_check
    _
  $region11: #{advanced_communication_forward.3} parent=0 // pred_check_branch
    %36 = sbr.rel (0) target = $region13
  $region12: #{advanced_communication_forward.3} parent=0 // pred_region
    %s37 = sadd.s32 0, 1
    %p38 = scmp.lt.s32.totalorder %s37, 1
    %s39 = scalar_select %p38, %s37, 1
    %s40 = smul.addr %s39, 2
    %s41 = smul.addr %s40, 8
    %s42 = scalar_lea.vmem %s2, %s41
    %s43 = sadd.s32 0, 1
  $region13: #{advanced_communication_forward.3} parent=0 // pred_fallthru
    _
  // Predicated region
  $region14: #{advanced_communication_forward.3} parent=0 // pred_check
    _
  $region15: #{advanced_communication_forward.3} parent=0 // pred_check_branch
    %45 = sbr.rel (0) target = $region17
  $region16: #{advanced_communication_forward.3} parent=0 // pred_region
    %s46 = sadd.s32 0, 1
    %p47 = scmp.lt.s32.totalorder %s46, 1
    %s48 = scalar_select %p47, %s46, 1
    %s49 = smul.addr %s48, 64
    %s50 = smul.addr %s49, 8
    %s51 = scalar_lea.vmem %s3, %s50
    %s52 = sadd.s32 0, 1
  $region17: #{advanced_communication_forward.3} parent=0 // pred_fallthru
    _
  // Predicated region
  $region18: #{advanced_communication_forward.3} parent=0 // pred_check
    _
  $region19: #{advanced_communication_forward.3} parent=0 // pred_check_branch
    %54 = sbr.rel (0) target = $region21
  $region20: #{advanced_communication_forward.3} parent=0 // pred_region
    %s55 = sadd.s32 0, 1
    %p56 = scmp.lt.s32.totalorder %s55, 1
    %s57 = scalar_select %p56, %s55, 1
    %s58 = smul.addr %s57, 2
    %s59 = smul.addr %s58, 8
    %s60 = scalar_lea.vmem %s4, %s59
    %s61 = sadd.s32 0, 1
  $region21: #{advanced_communication_forward.3} parent=0 // pred_fallthru
    _
  // Predicated region
  $region22: #{advanced_communication_forward.3} parent=0 // pred_check
    _
  $region23: #{advanced_communication_forward.3} parent=0 // pred_check_branch
    %63 = sbr.rel (0) target = $region25
  $region24: #{advanced_communication_forward.3} parent=0 // pred_region
    _
  $region25: #{advanced_communication_forward.3} parent=0 // pred_fallthru
    _
  // Predicated region
  $region26: #{advanced_communication_forward.3} parent=0 // pred_check
    _
  $region27: #{advanced_communication_forward.3} parent=0 // pred_check_branch
    %65 = sbr.rel (0) target = $region29
  $region28: #{advanced_communication_forward.3} parent=0 // pred_region
    _
  $region29: #{advanced_communication_forward.3} parent=0 // pred_fallthru
    _
  // Predicated region
  $region30: #{advanced_communication_forward.3} parent=0 // pred_check
    _
  $region31: #{advanced_communication_forward.3} parent=0 // pred_check_branch
    %67 = sbr.rel (0) target = $region33
  $region32: #{advanced_communication_forward.3} parent=0 // pred_region
    _
  $region33: #{advanced_communication_forward.3} parent=0 // pred_fallthru
    _
  // Predicated region
  $region34: #{advanced_communication_forward.3} parent=0 // pred_check
    _
  $region35: #{advanced_communication_forward.3} parent=0 // pred_check_branch
    %69 = sbr.rel (0) target = $region37
  $region36: #{advanced_communication_forward.3} parent=0 // pred_region
    _
  $region37: #{advanced_communication_forward.3} parent=0 // pred_fallthru
    _
  // Predicated region
  $region38: #{advanced_communication_forward.3} parent=0 // pred_check
    _
  $region39: #{advanced_communication_forward.3} parent=0 // pred_check_branch
    %71 = sbr.rel (0) target = $region41
  $region40: #{advanced_communication_forward.3} parent=0 // pred_region
    _
  $region41: #{advanced_communication_forward.3} parent=0 // pred_fallthru
    _
  // Predicated region
  $region42: #{advanced_communication_forward.3} parent=0 // pred_check
    _
  $region43: #{advanced_communication_forward.3} parent=0 // pred_check_branch
    %73 = sbr.rel (0) target = $region45
  $region44: #{advanced_communication_forward.3} parent=0 // pred_region
    _
  $region45: #{advanced_communication_forward.3} parent=0 // pred_fallthru
    _
  // Predicated region
  $region46: #{advanced_communication_forward.3} parent=0 // pred_check
    _
  $region47: #{advanced_communication_forward.3} parent=0 // pred_check_branch
    %75 = sbr.rel (0) target = $region49
  $region48: #{advanced_communication_forward.3} parent=0 // pred_region
    _
  $region49: #{advanced_communication_forward.3} parent=0 // pred_fallthru
    _
  // Predicated region
  $region50: #{advanced_communication_forward.3} parent=0 // pred_check
    _
  $region51: #{advanced_communication_forward.3} parent=0 // pred_check_branch
    %77 = sbr.rel (0) target = $region53
  $region52: #{advanced_communication_forward.3} parent=0 // pred_region
    _
  $region53: #{advanced_communication_forward.3} parent=0 // pred_fallthru
    _
  // Predicated region
  $region54: #{advanced_communication_forward.3} parent=0 // pred_check
    _
  $region55: #{advanced_communication_forward.3} parent=0 // pred_check_branch
    %79 = sbr.rel (0) target = $region57
  $region56: #{advanced_communication_forward.3} parent=0 // pred_region
    _
  $region57: #{advanced_communication_forward.3} parent=0 // pred_fallthru
    _
  // Predicated region
  $region58: #{advanced_communication_forward.3} parent=0 // pred_check
    _
  $region59: #{advanced_communication_forward.3} parent=0 // pred_check_branch
    %81 = sbr.rel (0) target = $region61
  $region60: #{advanced_communication_forward.3} parent=0 // pred_region
    _
  $region61: #{advanced_communication_forward.3} parent=0 // pred_fallthru
    _
  %s82 = sadd.s32 0, 1
  %p83 = scmp.lt.s32.totalorder %s82, 1
  %s84 = scalar_select %p83, %s82, 1
  %s85 = smul.addr %s84, 2
  %s86 = smul.addr %s85, 8
  %s87 = scalar_lea.vmem %s1, %s86
  %s88 = sadd.s32 0, 1
  %p89 = scmp.lt.s32.totalorder %s88, 1
  %s90 = scalar_select %p89, %s88, 1
  %s91 = smul.addr %s90, 2
  %s92 = smul.addr %s91, 8
  %s93 = scalar_lea.vmem %s2, %s92
  %s94 = sadd.s32 0, 1
  %p95 = scmp.lt.s32.totalorder %s94, 1
  %s96 = scalar_select %p95, %s94, 1
  %s97 = smul.addr %s96, 64
  %s98 = smul.addr %s97, 8
  %s99 = scalar_lea.vmem %s3, %s98
  %s100 = sadd.s32 0, 1
  %p101 = scmp.lt.s32.totalorder %s100, 1
  %s102 = scalar_select %p101, %s100, 1
  %s103 = smul.addr %s102, 2
  %s104 = smul.addr %s103, 8
  %s105 = scalar_lea.vmem %s4, %s104
  %s106 = sadd.s32 0, 1
  %p107 = scmp.lt.s32.totalorder %s106, 1
  %s108 = scalar_select %p107, %s106, 1
  %s109 = smul.addr %s108, 2
  %s110 = smul.addr %s109, 8
  %s111 = scalar_lea.vmem %s16, %s110
  %s112 = sadd.s32 0, 1
  %p113 = scmp.lt.s32.totalorder %s112, 1
  %s114 = scalar_select %p113, %s112, 1
  %s115 = smul.addr %s114, 64
  %s116 = smul.addr %s115, 8
  %s117 = scalar_lea.vmem %s17, %s116
  %s118 = sadd.s32 0, 1
  %p119 = scmp.lt.s32.totalorder %s118, 1
  %s120 = scalar_select %p119, %s118, 1
  %s121 = smul.addr %s120, 2
  %s122 = smul.addr %s121, 8
  %s123 = scalar_lea.vmem %s18, %s122
  %s124 = sadd.s32 0, 1
  %p125 = scmp.lt.s32.totalorder %s124, 1
  %s126 = scalar_select %p125, %s124, 1
  %s127 = smul.addr %s126, 2
  %s128 = smul.addr %s127, 8
  %s129 = scalar_lea.vmem %s1, %s128
  %s130 = sadd.s32 0, 1
  %s131 = sadd.s32 0, 1
  %p132 = scmp.lt.s32.totalorder %s131, 1
  %s133 = scalar_select %p132, %s131, 1
  %s134 = smul.addr %s133, 2
  %s135 = smul.addr %s134, 8
  %s136 = scalar_lea.vmem %s2, %s135
  %s137 = sadd.s32 0, 1
  %s138 = sadd.s32 0, 1
  %p139 = scmp.lt.s32.totalorder %s138, 1
  %s140 = scalar_select %p139, %s138, 1
  %s141 = smul.addr %s140, 64
  %s142 = smul.addr %s141, 8
  %s143 = scalar_lea.vmem %s3, %s142
  %s144 = sadd.s32 0, 1
  %s145 = sadd.s32 0, 1
  %p146 = scmp.lt.s32.totalorder %s145, 1
  %s147 = scalar_select %p146, %s145, 1
  %s148 = smul.addr %s147, 2
  %s149 = smul.addr %s148, 8
  %s150 = scalar_lea.vmem %s4, %s149
  %s151 = sadd.s32 0, 1
  %s152 = sadd.s32 0, 1
  %p153 = scmp.lt.s32.totalorder %s152, 1
  %s154 = scalar_select %p153, %s152, 1
  %s155 = smul.addr %s154, 2
  %s156 = smul.addr %s155, 8
  %s157 = scalar_lea.vmem %s16, %s156
  %s158 = sadd.s32 0, 1
  %s159 = sadd.s32 0, 1
  %p160 = scmp.lt.s32.totalorder %s159, 1
  %s161 = scalar_select %p160, %s159, 1
  %s162 = smul.addr %s161, 64
  %s163 = smul.addr %s162, 8
  %s164 = scalar_lea.vmem %s17, %s163
  %s165 = sadd.s32 0, 1
  %s166 = sadd.s32 0, 1
  %p167 = scmp.lt.s32.totalorder %s166, 1
  %s168 = scalar_select %p167, %s166, 1
  %s169 = smul.addr %s168, 2
  %s170 = smul.addr %s169, 8
  %s171 = scalar_lea.vmem %s18, %s170
  %s172 = sadd.s32 0, 1
  %v173 = vld [vmem:[%s5] sm:$0xff]
  %v174 = vld [vmem:[%s5 + $0x8] sm:$0xff]
  %v175 = vld [vmem:[%s5 + $0x10] sm:$0x1]
  %v176 = vld [vmem:[%s5 + $0x18] sm:$0x1]
  %v177 = vld [vmem:[%s0] sm:$0xff]
  %v178 = vld [vmem:[%s0 + $0x8] sm:$0xff]
  %v179 = vld [vmem:[%s129] sm:$0xff]
  %v180 = vld [vmem:[%s129 + $0x8] sm:$0xff]
  %v181 = vld [vmem:[%s8] sm:$0xff]
  %v182 = vld [vmem:[%s8 + $0x8] sm:$0xff]
  %v183 = vld [vmem:[%s8 + $0x10] sm:$0xff]
  %v184 = vld [vmem:[%s8 + $0x18] sm:$0xff]
  %v185 = vld [vmem:[%s8 + $0x20] sm:$0xff]
  %v186 = vld [vmem:[%s8 + $0x28] sm:$0xff]
  %v187 = vld [vmem:[%s8 + $0x30] sm:$0xff]
  %v188 = vld [vmem:[%s8 + $0x38] sm:$0xff]
  %v189 = vld [vmem:[%s8 + $0x40] sm:$0xff]
  %v190 = vld [vmem:[%s8 + $0x48] sm:$0xff]
  %v191 = vld [vmem:[%s8 + $0x50] sm:$0xff]
  %v192 = vld [vmem:[%s8 + $0x58] sm:$0xff]
  %v193 = vld [vmem:[%s8 + $0x60] sm:$0xff]
  %v194 = vld [vmem:[%s8 + $0x68] sm:$0xff]
  %v195 = vld [vmem:[%s8 + $0x70] sm:$0xff]
  %v196 = vld [vmem:[%s8 + $0x78] sm:$0xff]
  %v197 = vld [vmem:[%s8 + $0x80] sm:$0xff]
  %v198 = vld [vmem:[%s8 + $0x88] sm:$0xff]
  %v199 = vld [vmem:[%s8 + $0x90] sm:$0xff]
  %v200 = vld [vmem:[%s8 + $0x98] sm:$0xff]
  %v201 = vld [vmem:[%s8 + $0xa0] sm:$0xff]
  %v202 = vld [vmem:[%s8 + $0xa8] sm:$0xff]
  %v203 = vld [vmem:[%s8 + $0xb0] sm:$0xff]
  %v204 = vld [vmem:[%s8 + $0xb8] sm:$0xff]
  %v205 = vld [vmem:[%s8 + $0xc0] sm:$0xff]
  %v206 = vld [vmem:[%s8 + $0xc8] sm:$0xff]
  %v207 = vld [vmem:[%s8 + $0xd0] sm:$0xff]
  %v208 = vld [vmem:[%s8 + $0xd8] sm:$0xff]
  %v209 = vld [vmem:[%s8 + $0xe0] sm:$0xff]
  %v210 = vld [vmem:[%s8 + $0xe8] sm:$0xff]
  %v211 = vld [vmem:[%s8 + $0xf0] sm:$0xff]
  %v212 = vld [vmem:[%s8 + $0xf8] sm:$0xff]
  %v213 = vld [vmem:[%s8 + $0x100] sm:$0xff]
  %v214 = vld [vmem:[%s8 + $0x108] sm:$0xff]
  %v215 = vld [vmem:[%s8 + $0x110] sm:$0xff]
  %v216 = vld [vmem:[%s8 + $0x118] sm:$0xff]
  %v217 = vld [vmem:[%s6] sm:$0xff]
  %v218 = vld [vmem:[%s6 + $0x8] sm:$0xff]
  %v219 = vld [vmem:[%s6 + $0x10] sm:$0xff]
  %v220 = vld [vmem:[%s6 + $0x18] sm:$0xff]
  %v221 = vld [vmem:[%s6 + $0x20] sm:$0xff]
  %v222 = vld [vmem:[%s6 + $0x28] sm:$0xff]
  %v223 = vld [vmem:[%s6 + $0x30] sm:$0xff]
  %v224 = vld [vmem:[%s6 + $0x38] sm:$0xff]
  %v225 = vld [vmem:[%s6 + $0x40] sm:$0xff]
  %v226 = vld [vmem:[%s6 + $0x48] sm:$0xff]
  %v227 = vld [vmem:[%s6 + $0x50] sm:$0xff]
  %v228 = vld [vmem:[%s6 + $0x58] sm:$0xff]
  %v229 = vld [vmem:[%s6 + $0x60] sm:$0xff]
  %v230 = vld [vmem:[%s6 + $0x68] sm:$0xff]
  %v231 = vld [vmem:[%s6 + $0x70] sm:$0xff]
  %v232 = vld [vmem:[%s6 + $0x78] sm:$0xff]
  %v233 = vld [vmem:[%s6 + $0x80] sm:$0xff]
  %v234 = vld [vmem:[%s6 + $0x88] sm:$0xff]
  %v235 = vld [vmem:[%s6 + $0x90] sm:$0xff]
  %v236 = vld [vmem:[%s6 + $0x98] sm:$0xff]
  %v237 = vld [vmem:[%s6 + $0xa0] sm:$0xff]
  %v238 = vld [vmem:[%s6 + $0xa8] sm:$0xff]
  %v239 = vld [vmem:[%s6 + $0xb0] sm:$0xff]
  %v240 = vld [vmem:[%s6 + $0xb8] sm:$0xff]
  %v241 = vld [vmem:[%s6 + $0xc0] sm:$0xff]
  %v242 = vld [vmem:[%s6 + $0xc8] sm:$0xff]
  %v243 = vld [vmem:[%s6 + $0xd0] sm:$0xff]
  %v244 = vld [vmem:[%s6 + $0xd8] sm:$0xff]
  %v245 = vld [vmem:[%s6 + $0xe0] sm:$0xff]
  %v246 = vld [vmem:[%s6 + $0xe8] sm:$0xff]
  %v247 = vld [vmem:[%s6 + $0xf0] sm:$0xff]
  %v248 = vld [vmem:[%s6 + $0xf8] sm:$0xff]
  %v249 = vld [vmem:[%s6 + $0x100] sm:$0xff]
  %v250 = vld [vmem:[%s6 + $0x108] sm:$0xff]
  %v251 = vld [vmem:[%s6 + $0x110] sm:$0xff]
  %v252 = vld [vmem:[%s6 + $0x118] sm:$0xff]
  %vm253 = vcmask 64512
  %v255 = vsel %vm253, %v217, 0
  %v258 = vsel %vm253, %v218, 0
  %v261 = vsel %vm253, %v219, 0
  %v264 = vsel %vm253, %v220, 0
  %v267 = vsel %vm253, %v221, 0
  %v270 = vsel %vm253, %v222, 0
  %v273 = vsel %vm253, %v223, 0
  %v276 = vsel %vm253, %v224, 0
  %v279 = vsel %vm253, %v225, 0
  %v282 = vsel %vm253, %v226, 0
  %v285 = vsel %vm253, %v227, 0
  %v288 = vsel %vm253, %v228, 0
  %v291 = vsel %vm253, %v229, 0
  %v294 = vsel %vm253, %v230, 0
  %v297 = vsel %vm253, %v231, 0
  %v300 = vsel %vm253, %v232, 0
  %v303 = vsel %vm253, %v233, 0
  %v306 = vsel %vm253, %v234, 0
  %v309 = vsel %vm253, %v235, 0
  %v312 = vsel %vm253, %v236, 0
  %v315 = vsel %vm253, %v237, 0
  %v318 = vsel %vm253, %v238, 0
  %v321 = vsel %vm253, %v239, 0
  %v324 = vsel %vm253, %v240, 0
  %v327 = vsel %vm253, %v241, 0
  %v330 = vsel %vm253, %v242, 0
  %v333 = vsel %vm253, %v243, 0
  %v336 = vsel %vm253, %v244, 0
  %v339 = vsel %vm253, %v245, 0
  %v342 = vsel %vm253, %v246, 0
  %v345 = vsel %vm253, %v247, 0
  %v348 = vsel %vm253, %v248, 0
  %v351 = vsel %vm253, %v249, 0
  %v354 = vsel %vm253, %v250, 0
  %v357 = vsel %vm253, %v251, 0
  %v360 = vsel %vm253, %v252, 0
  %362 = vmatprep.subr.mxu0 %v178
  %363 = vmatpush1.msra.mxu0 %v177
  %364 = vmatprep.subr.mxu0 0.0
  %365 = vmatpush1.msra.mxu0 0.0
  %366 = vmatprep.subr.mxu0 0.0
  %367 = vmatpush1.msra.mxu0 0.0
  %368 = vmatprep.subr.mxu0 0.0
  %369 = vmatpush1.msra.mxu0 0.0
  %370 = vmatprep.subr.mxu0 0.0
  %371 = vmatpush1.msra.mxu0 0.0
  %372 = vmatprep.subr.mxu0 0.0
  %373 = vmatpush1.msra.mxu0 0.0
  %374 = vmatprep.subr.mxu0 0.0
  %375 = vmatpush1.msra.mxu0 0.0
  %376 = vmatprep.subr.mxu0 0.0
  %377 = vmatpush1.msra.mxu0 0.0
  %378 = vmatprep.subr.mxu0 0.0
  %379 = vmatpush1.msra.mxu0 0.0
  %380 = vmatprep.subr.mxu0 0.0
  %381 = vmatpush1.msra.mxu0 0.0
  %382 = vmatprep.subr.mxu0 0.0
  %383 = vmatpush1.msra.mxu0 0.0
  %384 = vmatprep.subr.mxu0 0.0
  %385 = vmatpush1.msra.mxu0 0.0
  %386 = vmatprep.subr.mxu0 0.0
  %387 = vmatpush1.msra.mxu0 0.0
  %388 = vmatprep.subr.mxu0 0.0
  %389 = vmatpush1.msra.mxu0 0.0
  %390 = vmatprep.subr.mxu0 0.0
  %391 = vmatpush1.msra.mxu0 0.0
  %392 = vmatprep.subr.mxu0 0.0
  %393 = vmatpush1.msra.mxu0 0.0
  %394 = vmatprep.subr.mxu0 0.0
  %395 = vmatpush1.msra.mxu0 0.0
  %396 = vmatprep.subr.mxu0 0.0
  %397 = vmatpush1.msra.mxu0 0.0
  %398 = vmatprep.subr.mxu0 0.0
  %399 = vmatpush1.msra.mxu0 0.0
  %400 = vmatprep.subr.mxu0 0.0
  %401 = vmatpush1.msra.mxu0 0.0
  %402 = vmatprep.subr.mxu0 0.0
  %403 = vmatpush1.msra.mxu0 0.0
  %404 = vmatprep.subr.mxu0 0.0
  %405 = vmatpush1.msra.mxu0 0.0
  %406 = vmatprep.subr.mxu0 0.0
  %407 = vmatpush1.msra.mxu0 0.0
  %408 = vmatprep.subr.mxu0 0.0
  %409 = vmatpush1.msra.mxu0 0.0
  %410 = vmatprep.subr.mxu0 0.0
  %411 = vmatpush1.msra.mxu0 0.0
  %412 = vmatprep.subr.mxu0 0.0
  %413 = vmatpush1.msra.mxu0 0.0
  %414 = vmatprep.subr.mxu0 0.0
  %415 = vmatpush1.msra.mxu0 0.0
  %416 = vmatprep.subr.mxu0 0.0
  %417 = vmatpush1.msra.mxu0 0.0
  %418 = vmatprep.subr.mxu0 0.0
  %419 = vmatpush1.msra.mxu0 0.0
  %420 = vmatprep.subr.mxu0 0.0
  %421 = vmatpush1.msra.mxu0 0.0
  %422 = vmatprep.subr.mxu0 0.0
  %423 = vmatpush1.msra.mxu0 0.0
  %424 = vmatprep.subr.mxu0 0.0
  %425 = vmatpush1.msra.mxu0 0.0
  %426 = vmatprep.mubr.f32.mxu0 0.0
  %427 = vmatmul.mubr.f32.gmra.mrb[0].mxu0 %v255
  %v428 = vpop.f32.mrb[0].mxu0
  %v429 = vadd.f32 0.0, %v428
  %v430 = vpop.f32.mrb[0].mxu0
  %v431 = vadd.f32 0.0, %v430
  %432 = vmatprep.mubr.f32.mxu0 0.0
  %433 = vmatmul.mubr.f32.gmra.mrb[0].mxu0 %v258
  %v434 = vpop.f32.mrb[0].mxu0
  %v435 = vadd.f32 0.0, %v434
  %v436 = vpop.f32.mrb[0].mxu0
  %v437 = vadd.f32 0.0, %v436
  %438 = vmatprep.mubr.f32.mxu0 0.0
  %439 = vmatmul.mubr.f32.gmra.mrb[0].mxu0 %v261
  %v440 = vpop.f32.mrb[0].mxu0
  %v441 = vadd.f32 0.0, %v440
  %v442 = vpop.f32.mrb[0].mxu0
  %v443 = vadd.f32 0.0, %v442
  %444 = vmatprep.mubr.f32.mxu0 0.0
  %445 = vmatmul.mubr.f32.gmra.mrb[0].mxu0 %v264
  %v446 = vpop.f32.mrb[0].mxu0
  %v447 = vadd.f32 0.0, %v446
  %v448 = vpop.f32.mrb[0].mxu0
  %v449 = vadd.f32 0.0, %v448
  %450 = vmatprep.mubr.f32.mxu0 0.0
  %451 = vmatmul.mubr.f32.gmra.mrb[0].mxu0 %v267
  %v452 = vpop.f32.mrb[0].mxu0
  %v453 = vadd.f32 0.0, %v452
  %v454 = vpop.f32.mrb[0].mxu0
  %v455 = vadd.f32 0.0, %v454
  %456 = vmatprep.mubr.f32.mxu0 0.0
  %457 = vmatmul.mubr.f32.gmra.mrb[0].mxu0 %v270
  %v458 = vpop.f32.mrb[0].mxu0
  %v459 = vadd.f32 0.0, %v458
  %v460 = vpop.f32.mrb[0].mxu0
  %v461 = vadd.f32 0.0, %v460
  %462 = vmatprep.mubr.f32.mxu0 0.0
  %463 = vmatmul.mubr.f32.gmra.mrb[0].mxu0 %v273
  %v464 = vpop.f32.mrb[0].mxu0
  %v465 = vadd.f32 0.0, %v464
  %v466 = vpop.f32.mrb[0].mxu0
  %v467 = vadd.f32 0.0, %v466
  %468 = vmatprep.mubr.f32.mxu0 0.0
  %469 = vmatmul.mubr.f32.gmra.mrb[0].mxu0 %v276
  %v470 = vpop.f32.mrb[0].mxu0
  %v471 = vadd.f32 0.0, %v470
  %v472 = vpop.f32.mrb[0].mxu0
  %v473 = vadd.f32 0.0, %v472
  %474 = vmatprep.mubr.f32.mxu0 0.0
  %475 = vmatmul.mubr.f32.gmra.mrb[0].mxu0 %v279
  %v476 = vpop.f32.mrb[0].mxu0
  %v477 = vadd.f32 0.0, %v476
  %v478 = vpop.f32.mrb[0].mxu0
  %v479 = vadd.f32 0.0, %v478
  %480 = vmatprep.mubr.f32.mxu0 0.0
  %481 = vmatmul.mubr.f32.gmra.mrb[0].mxu0 %v282
  %v482 = vpop.f32.mrb[0].mxu0
  %v483 = vadd.f32 0.0, %v482
  %v484 = vpop.f32.mrb[0].mxu0
  %v485 = vadd.f32 0.0, %v484
  %486 = vmatprep.mubr.f32.mxu0 0.0
  %487 = vmatmul.mubr.f32.gmra.mrb[0].mxu0 %v285
  %v488 = vpop.f32.mrb[0].mxu0
  %v489 = vadd.f32 0.0, %v488
  %v490 = vpop.f32.mrb[0].mxu0
  %v491 = vadd.f32 0.0, %v490
  %492 = vmatprep.mubr.f32.mxu0 0.0
  %493 = vmatmul.mubr.f32.gmra.mrb[0].mxu0 %v288
  %v494 = vpop.f32.mrb[0].mxu0
  %v495 = vadd.f32 0.0, %v494
  %v496 = vpop.f32.mrb[0].mxu0
  %v497 = vadd.f32 0.0, %v496
  %498 = vmatprep.mubr.f32.mxu0 0.0
  %499 = vmatmul.mubr.f32.gmra.mrb[0].mxu0 %v291
  %v500 = vpop.f32.mrb[0].mxu0
  %v501 = vadd.f32 0.0, %v500
  %v502 = vpop.f32.mrb[0].mxu0
  %v503 = vadd.f32 0.0, %v502
  %504 = vmatprep.mubr.f32.mxu0 0.0
  %505 = vmatmul.mubr.f32.gmra.mrb[0].mxu0 %v294
  %v506 = vpop.f32.mrb[0].mxu0
  %v507 = vadd.f32 0.0, %v506
  %v508 = vpop.f32.mrb[0].mxu0
  %v509 = vadd.f32 0.0, %v508
  %510 = vmatprep.mubr.f32.mxu0 0.0
  %511 = vmatmul.mubr.f32.gmra.mrb[0].mxu0 %v297
  %v512 = vpop.f32.mrb[0].mxu0
  %v513 = vadd.f32 0.0, %v512
  %v514 = vpop.f32.mrb[0].mxu0
  %v515 = vadd.f32 0.0, %v514
  %516 = vmatprep.mubr.f32.mxu0 0.0
  %517 = vmatmul.mubr.f32.gmra.mrb[0].mxu0 %v300
  %v518 = vpop.f32.mrb[0].mxu0
  %v519 = vadd.f32 0.0, %v518
  %v520 = vpop.f32.mrb[0].mxu0
  %v521 = vadd.f32 0.0, %v520
  %522 = vmatprep.mubr.f32.mxu0 0.0
  %523 = vmatmul.mubr.f32.gmra.mrb[0].mxu0 %v303
  %v524 = vpop.f32.mrb[0].mxu0
  %v525 = vadd.f32 0.0, %v524
  %v526 = vpop.f32.mrb[0].mxu0
  %v527 = vadd.f32 0.0, %v526
  %528 = vmatprep.mubr.f32.mxu0 0.0
  %529 = vmatmul.mubr.f32.gmra.mrb[0].mxu0 %v306
  %v530 = vpop.f32.mrb[0].mxu0
  %v531 = vadd.f32 0.0, %v530
  %v532 = vpop.f32.mrb[0].mxu0
  %v533 = vadd.f32 0.0, %v532
  %534 = vmatprep.mubr.f32.mxu0 0.0
  %535 = vmatmul.mubr.f32.gmra.mrb[0].mxu0 %v309
  %v536 = vpop.f32.mrb[0].mxu0
  %v537 = vadd.f32 0.0, %v536
  %v538 = vpop.f32.mrb[0].mxu0
  %v539 = vadd.f32 0.0, %v538
  %540 = vmatprep.mubr.f32.mxu0 0.0
  %541 = vmatmul.mubr.f32.gmra.mrb[0].mxu0 %v312
  %v542 = vpop.f32.mrb[0].mxu0
  %v543 = vadd.f32 0.0, %v542
  %v544 = vpop.f32.mrb[0].mxu0
  %v545 = vadd.f32 0.0, %v544
  %546 = vmatprep.mubr.f32.mxu0 0.0
  %547 = vmatmul.mubr.f32.gmra.mrb[0].mxu0 %v315
  %v548 = vpop.f32.mrb[0].mxu0
  %v549 = vadd.f32 0.0, %v548
  %v550 = vpop.f32.mrb[0].mxu0
  %v551 = vadd.f32 0.0, %v550
  %552 = vmatprep.mubr.f32.mxu0 0.0
  %553 = vmatmul.mubr.f32.gmra.mrb[0].mxu0 %v318
  %v554 = vpop.f32.mrb[0].mxu0
  %v555 = vadd.f32 0.0, %v554
  %v556 = vpop.f32.mrb[0].mxu0
  %v557 = vadd.f32 0.0, %v556
  %558 = vmatprep.mubr.f32.mxu0 0.0
  %559 = vmatmul.mubr.f32.gmra.mrb[0].mxu0 %v321
  %v560 = vpop.f32.mrb[0].mxu0
  %v561 = vadd.f32 0.0, %v560
  %v562 = vpop.f32.mrb[0].mxu0
  %v563 = vadd.f32 0.0, %v562
  %564 = vmatprep.mubr.f32.mxu0 0.0
  %565 = vmatmul.mubr.f32.gmra.mrb[0].mxu0 %v324
  %v566 = vpop.f32.mrb[0].mxu0
  %v567 = vadd.f32 0.0, %v566
  %v568 = vpop.f32.mrb[0].mxu0
  %v569 = vadd.f32 0.0, %v568
  %570 = vmatprep.mubr.f32.mxu0 0.0
  %571 = vmatmul.mubr.f32.gmra.mrb[0].mxu0 %v327
  %v572 = vpop.f32.mrb[0].mxu0
  %v573 = vadd.f32 0.0, %v572
  %v574 = vpop.f32.mrb[0].mxu0
  %v575 = vadd.f32 0.0, %v574
  %576 = vmatprep.mubr.f32.mxu0 0.0
  %577 = vmatmul.mubr.f32.gmra.mrb[0].mxu0 %v330
  %v578 = vpop.f32.mrb[0].mxu0
  %v579 = vadd.f32 0.0, %v578
  %v580 = vpop.f32.mrb[0].mxu0
  %v581 = vadd.f32 0.0, %v580
  %582 = vmatprep.mubr.f32.mxu0 0.0
  %583 = vmatmul.mubr.f32.gmra.mrb[0].mxu0 %v333
  %v584 = vpop.f32.mrb[0].mxu0
  %v585 = vadd.f32 0.0, %v584
  %v586 = vpop.f32.mrb[0].mxu0
  %v587 = vadd.f32 0.0, %v586
  %588 = vmatprep.mubr.f32.mxu0 0.0
  %589 = vmatmul.mubr.f32.gmra.mrb[0].mxu0 %v336
  %v590 = vpop.f32.mrb[0].mxu0
  %v591 = vadd.f32 0.0, %v590
  %v592 = vpop.f32.mrb[0].mxu0
  %v593 = vadd.f32 0.0, %v592
  %594 = vmatprep.mubr.f32.mxu0 0.0
  %595 = vmatmul.mubr.f32.gmra.mrb[0].mxu0 %v339
  %v596 = vpop.f32.mrb[0].mxu0
  %v597 = vadd.f32 0.0, %v596
  %v598 = vpop.f32.mrb[0].mxu0
  %v599 = vadd.f32 0.0, %v598
  %600 = vmatprep.mubr.f32.mxu0 0.0
  %601 = vmatmul.mubr.f32.gmra.mrb[0].mxu0 %v342
  %v602 = vpop.f32.mrb[0].mxu0
  %v603 = vadd.f32 0.0, %v602
  %v604 = vpop.f32.mrb[0].mxu0
  %v605 = vadd.f32 0.0, %v604
  %606 = vmatprep.mubr.f32.mxu0 0.0
  %607 = vmatmul.mubr.f32.gmra.mrb[0].mxu0 %v345
  %v608 = vpop.f32.mrb[0].mxu0
  %v609 = vadd.f32 0.0, %v608
  %v610 = vpop.f32.mrb[0].mxu0
  %v611 = vadd.f32 0.0, %v610
  %612 = vmatprep.mubr.f32.mxu0 0.0
  %613 = vmatmul.mubr.f32.gmra.mrb[0].mxu0 %v348
  %v614 = vpop.f32.mrb[0].mxu0
  %v615 = vadd.f32 0.0, %v614
  %v616 = vpop.f32.mrb[0].mxu0
  %v617 = vadd.f32 0.0, %v616
  %618 = vmatprep.mubr.f32.mxu0 0.0
  %619 = vmatmul.mubr.f32.gmra.mrb[0].mxu0 %v351
  %v620 = vpop.f32.mrb[0].mxu0
  %v621 = vadd.f32 0.0, %v620
  %v622 = vpop.f32.mrb[0].mxu0
  %v623 = vadd.f32 0.0, %v622
  %624 = vmatprep.mubr.f32.mxu0 0.0
  %625 = vmatmul.mubr.f32.gmra.mrb[0].mxu0 %v354
  %v626 = vpop.f32.mrb[0].mxu0
  %v627 = vadd.f32 0.0, %v626
  %v628 = vpop.f32.mrb[0].mxu0
  %v629 = vadd.f32 0.0, %v628
  %630 = vmatprep.mubr.f32.mxu0 0.0
  %631 = vmatmul.mubr.f32.gmra.mrb[0].mxu0 %v357
  %v632 = vpop.f32.mrb[0].mxu0
  %v633 = vadd.f32 0.0, %v632
  %v634 = vpop.f32.mrb[0].mxu0
  %v635 = vadd.f32 0.0, %v634
  %636 = vmatprep.mubr.f32.mxu0 0.0
  %637 = vmatmul.mubr.f32.gmra.mrb[0].mxu0 %v360
  %v638 = vpop.f32.mrb[0].mxu0
  %v639 = vadd.f32 0.0, %v638
  %v640 = vpop.f32.mrb[0].mxu0
  %v641 = vadd.f32 0.0, %v640
  %642 = vdwg.mxu0
  %644 = vset.pattern.permute.xlu0 0
  %645 = vperm.xlu0 %644, %v181
  %v646 = vpop.permute.xlu0 %645
  %649 = vset.pattern.permute.xlu0 0
  %650 = vperm.xlu0 %649, %v182
  %v651 = vpop.permute.xlu0 %650
  %654 = vset.pattern.permute.xlu0 0
  %655 = vperm.xlu0 %654, %v183
  %v656 = vpop.permute.xlu0 %655
  %659 = vset.pattern.permute.xlu0 0
  %660 = vperm.xlu0 %659, %v184
  %v661 = vpop.permute.xlu0 %660
  %664 = vset.pattern.permute.xlu0 0
  %665 = vperm.xlu0 %664, %v185
  %v666 = vpop.permute.xlu0 %665
  %669 = vset.pattern.permute.xlu0 0
  %670 = vperm.xlu0 %669, %v186
  %v671 = vpop.permute.xlu0 %670
  %674 = vset.pattern.permute.xlu0 0
  %675 = vperm.xlu0 %674, %v187
  %v676 = vpop.permute.xlu0 %675
  %679 = vset.pattern.permute.xlu0 0
  %680 = vperm.xlu0 %679, %v188
  %v681 = vpop.permute.xlu0 %680
  %684 = vset.pattern.permute.xlu0 0
  %685 = vperm.xlu0 %684, %v189
  %v686 = vpop.permute.xlu0 %685
  %689 = vset.pattern.permute.xlu0 0
  %690 = vperm.xlu0 %689, %v190
  %v691 = vpop.permute.xlu0 %690
  %694 = vset.pattern.permute.xlu0 0
  %695 = vperm.xlu0 %694, %v191
  %v696 = vpop.permute.xlu0 %695
  %699 = vset.pattern.permute.xlu0 0
  %700 = vperm.xlu0 %699, %v192
  %v701 = vpop.permute.xlu0 %700
  %704 = vset.pattern.permute.xlu0 0
  %705 = vperm.xlu0 %704, %v193
  %v706 = vpop.permute.xlu0 %705
  %709 = vset.pattern.permute.xlu0 0
  %710 = vperm.xlu0 %709, %v194
  %v711 = vpop.permute.xlu0 %710
  %714 = vset.pattern.permute.xlu0 0
  %715 = vperm.xlu0 %714, %v195
  %v716 = vpop.permute.xlu0 %715
  %719 = vset.pattern.permute.xlu0 0
  %720 = vperm.xlu0 %719, %v196
  %v721 = vpop.permute.xlu0 %720
  %724 = vset.pattern.permute.xlu0 0
  %725 = vperm.xlu0 %724, %v197
  %v726 = vpop.permute.xlu0 %725
  %729 = vset.pattern.permute.xlu0 0
  %730 = vperm.xlu0 %729, %v198
  %v731 = vpop.permute.xlu0 %730
  %734 = vset.pattern.permute.xlu0 0
  %735 = vperm.xlu0 %734, %v199
  %v736 = vpop.permute.xlu0 %735
  %739 = vset.pattern.permute.xlu0 0
  %740 = vperm.xlu0 %739, %v200
  %v741 = vpop.permute.xlu0 %740
  %744 = vset.pattern.permute.xlu0 0
  %745 = vperm.xlu0 %744, %v201
  %v746 = vpop.permute.xlu0 %745
  %749 = vset.pattern.permute.xlu0 0
  %750 = vperm.xlu0 %749, %v202
  %v751 = vpop.permute.xlu0 %750
  %754 = vset.pattern.permute.xlu0 0
  %755 = vperm.xlu0 %754, %v203
  %v756 = vpop.permute.xlu0 %755
  %759 = vset.pattern.permute.xlu0 0
  %760 = vperm.xlu0 %759, %v204
  %v761 = vpop.permute.xlu0 %760
  %764 = vset.pattern.permute.xlu0 0
  %765 = vperm.xlu0 %764, %v205
  %v766 = vpop.permute.xlu0 %765
  %769 = vset.pattern.permute.xlu0 0
  %770 = vperm.xlu0 %769, %v206
  %v771 = vpop.permute.xlu0 %770
  %774 = vset.pattern.permute.xlu0 0
  %775 = vperm.xlu0 %774, %v207
  %v776 = vpop.permute.xlu0 %775
  %779 = vset.pattern.permute.xlu0 0
  %780 = vperm.xlu0 %779, %v208
  %v781 = vpop.permute.xlu0 %780
  %784 = vset.pattern.permute.xlu0 0
  %785 = vperm.xlu0 %784, %v209
  %v786 = vpop.permute.xlu0 %785
  %789 = vset.pattern.permute.xlu0 0
  %790 = vperm.xlu0 %789, %v210
  %v791 = vpop.permute.xlu0 %790
  %794 = vset.pattern.permute.xlu0 0
  %795 = vperm.xlu0 %794, %v211
  %v796 = vpop.permute.xlu0 %795
  %799 = vset.pattern.permute.xlu0 0
  %800 = vperm.xlu0 %799, %v212
  %v801 = vpop.permute.xlu0 %800
  %804 = vset.pattern.permute.xlu0 0
  %805 = vperm.xlu0 %804, %v213
  %v806 = vpop.permute.xlu0 %805
  %809 = vset.pattern.permute.xlu0 0
  %810 = vperm.xlu0 %809, %v214
  %v811 = vpop.permute.xlu0 %810
  %814 = vset.pattern.permute.xlu0 0
  %815 = vperm.xlu0 %814, %v215
  %v816 = vpop.permute.xlu0 %815
  %819 = vset.pattern.permute.xlu0 0
  %820 = vperm.xlu0 %819, %v216
  %v821 = vpop.permute.xlu0 %820
  %v823 = vsub.f32 %v646, %v429
  %v824 = vsub.f32 %v646, %v431
  %v825 = vsub.f32 %v651, %v435
  %v826 = vsub.f32 %v651, %v437
  %v827 = vsub.f32 %v656, %v441
  %v828 = vsub.f32 %v656, %v443
  %v829 = vsub.f32 %v661, %v447
  %v830 = vsub.f32 %v661, %v449
  %v831 = vsub.f32 %v666, %v453
  %v832 = vsub.f32 %v666, %v455
  %v833 = vsub.f32 %v671, %v459
  %v834 = vsub.f32 %v671, %v461
  %v835 = vsub.f32 %v676, %v465
  %v836 = vsub.f32 %v676, %v467
  %v837 = vsub.f32 %v681, %v471
  %v838 = vsub.f32 %v681, %v473
  %v839 = vsub.f32 %v686, %v477
  %v840 = vsub.f32 %v686, %v479
  %v841 = vsub.f32 %v691, %v483
  %v842 = vsub.f32 %v691, %v485
  %v843 = vsub.f32 %v696, %v489
  %v844 = vsub.f32 %v696, %v491
  %v845 = vsub.f32 %v701, %v495
  %v846 = vsub.f32 %v701, %v497
  %v847 = vsub.f32 %v706, %v501
  %v848 = vsub.f32 %v706, %v503
  %v849 = vsub.f32 %v711, %v507
  %v850 = vsub.f32 %v711, %v509
  %v851 = vsub.f32 %v716, %v513
  %v852 = vsub.f32 %v716, %v515
  %v853 = vsub.f32 %v721, %v519
  %v854 = vsub.f32 %v721, %v521
  %v855 = vsub.f32 %v726, %v525
  %v856 = vsub.f32 %v726, %v527
  %v857 = vsub.f32 %v731, %v531
  %v858 = vsub.f32 %v731, %v533
  %v859 = vsub.f32 %v736, %v537
  %v860 = vsub.f32 %v736, %v539
  %v861 = vsub.f32 %v741, %v543
  %v862 = vsub.f32 %v741, %v545
  %v863 = vsub.f32 %v746, %v549
  %v864 = vsub.f32 %v746, %v551
  %v865 = vsub.f32 %v751, %v555
  %v866 = vsub.f32 %v751, %v557
  %v867 = vsub.f32 %v756, %v561
  %v868 = vsub.f32 %v756, %v563
  %v869 = vsub.f32 %v761, %v567
  %v870 = vsub.f32 %v761, %v569
  %v871 = vsub.f32 %v766, %v573
  %v872 = vsub.f32 %v766, %v575
  %v873 = vsub.f32 %v771, %v579
  %v874 = vsub.f32 %v771, %v581
  %v875 = vsub.f32 %v776, %v585
  %v876 = vsub.f32 %v776, %v587
  %v877 = vsub.f32 %v781, %v591
  %v878 = vsub.f32 %v781, %v593
  %v879 = vsub.f32 %v786, %v597
  %v880 = vsub.f32 %v786, %v599
  %v881 = vsub.f32 %v791, %v603
  %v882 = vsub.f32 %v791, %v605
  %v883 = vsub.f32 %v796, %v609
  %v884 = vsub.f32 %v796, %v611
  %v885 = vsub.f32 %v801, %v615
  %v886 = vsub.f32 %v801, %v617
  %v887 = vsub.f32 %v806, %v621
  %v888 = vsub.f32 %v806, %v623
  %v889 = vsub.f32 %v811, %v627
  %v890 = vsub.f32 %v811, %v629
  %v891 = vsub.f32 %v816, %v633
  %v892 = vsub.f32 %v816, %v635
  %v893 = vsub.f32 %v821, %v639
  %v894 = vsub.f32 %v821, %v641
  %v895 = vld [vmem:[%s7] sm:$0xff]
  %v896 = vld [vmem:[%s7 + $0x8] sm:$0xff]
  %v897 = vld [vmem:[%s7 + $0x10] sm:$0xff]
  %v898 = vld [vmem:[%s7 + $0x18] sm:$0xff]
  %v899 = vld [vmem:[%s7 + $0x20] sm:$0xff]
  %v900 = vld [vmem:[%s7 + $0x28] sm:$0xff]
  %v901 = vld [vmem:[%s7 + $0x30] sm:$0xff]
  %v902 = vld [vmem:[%s7 + $0x38] sm:$0xff]
  %v903 = vld [vmem:[%s7 + $0x40] sm:$0xff]
  %v904 = vld [vmem:[%s7 + $0x48] sm:$0xff]
  %v905 = vld [vmem:[%s7 + $0x50] sm:$0xff]
  %v906 = vld [vmem:[%s7 + $0x58] sm:$0xff]
  %v907 = vld [vmem:[%s7 + $0x60] sm:$0xff]
  %v908 = vld [vmem:[%s7 + $0x68] sm:$0xff]
  %v909 = vld [vmem:[%s7 + $0x70] sm:$0xff]
  %v910 = vld [vmem:[%s7 + $0x78] sm:$0xff]
  %v911 = vld [vmem:[%s7 + $0x80] sm:$0xff]
  %v912 = vld [vmem:[%s7 + $0x88] sm:$0xff]
  %v913 = vld [vmem:[%s7 + $0x90] sm:$0xff]
  %v914 = vld [vmem:[%s7 + $0x98] sm:$0xff]
  %v915 = vld [vmem:[%s7 + $0xa0] sm:$0xff]
  %v916 = vld [vmem:[%s7 + $0xa8] sm:$0xff]
  %v917 = vld [vmem:[%s7 + $0xb0] sm:$0xff]
  %v918 = vld [vmem:[%s7 + $0xb8] sm:$0xff]
  %v919 = vld [vmem:[%s7 + $0xc0] sm:$0xff]
  %v920 = vld [vmem:[%s7 + $0xc8] sm:$0xff]
  %v921 = vld [vmem:[%s7 + $0xd0] sm:$0xff]
  %v922 = vld [vmem:[%s7 + $0xd8] sm:$0xff]
  %v923 = vld [vmem:[%s7 + $0xe0] sm:$0xff]
  %v924 = vld [vmem:[%s7 + $0xe8] sm:$0xff]
  %v925 = vld [vmem:[%s7 + $0xf0] sm:$0xff]
  %v926 = vld [vmem:[%s7 + $0xf8] sm:$0xff]
  %v927 = vld [vmem:[%s7 + $0x100] sm:$0xff]
  %v928 = vld [vmem:[%s7 + $0x108] sm:$0xff]
  %v929 = vld [vmem:[%s7 + $0x110] sm:$0xff]
  %v930 = vld [vmem:[%s7 + $0x118] sm:$0xff]
  %v932 = vsel %vm253, %v895, 0
  %v935 = vsel %vm253, %v896, 0
  %v938 = vsel %vm253, %v897, 0
  %v941 = vsel %vm253, %v898, 0
  %v944 = vsel %vm253, %v899, 0
  %v947 = vsel %vm253, %v900, 0
  %v950 = vsel %vm253, %v901, 0
  %v953 = vsel %vm253, %v902, 0
  %v956 = vsel %vm253, %v903, 0
  %v959 = vsel %vm253, %v904, 0
  %v962 = vsel %vm253, %v905, 0
  %v965 = vsel %vm253, %v906, 0
  %v968 = vsel %vm253, %v907, 0
  %v971 = vsel %vm253, %v908, 0
  %v974 = vsel %vm253, %v909, 0
  %v977 = vsel %vm253, %v910, 0
  %v980 = vsel %vm253, %v911, 0
  %v983 = vsel %vm253, %v912, 0
  %v986 = vsel %vm253, %v913, 0
  %v989 = vsel %vm253, %v914, 0
  %v992 = vsel %vm253, %v915, 0
  %v995 = vsel %vm253, %v916, 0
  %v998 = vsel %vm253, %v917, 0
  %v1001 = vsel %vm253, %v918, 0
  %v1004 = vsel %vm253, %v919, 0
  %v1007 = vsel %vm253, %v920, 0
  %v1010 = vsel %vm253, %v921, 0
  %v1013 = vsel %vm253, %v922, 0
  %v1016 = vsel %vm253, %v923, 0
  %v1019 = vsel %vm253, %v924, 0
  %v1022 = vsel %vm253, %v925, 0
  %v1025 = vsel %vm253, %v926, 0
  %v1028 = vsel %vm253, %v927, 0
  %v1031 = vsel %vm253, %v928, 0
  %v1034 = vsel %vm253, %v929, 0
  %v1037 = vsel %vm253, %v930, 0
  %1039 = vmatprep.subr.mxu0 %v180
  %1040 = vmatpush1.msra.mxu0 %v179
  %1041 = vmatprep.subr.mxu0 0.0
  %1042 = vmatpush1.msra.mxu0 0.0
  %1043 = vmatprep.subr.mxu0 0.0
  %1044 = vmatpush1.msra.mxu0 0.0
  %1045 = vmatprep.subr.mxu0 0.0
  %1046 = vmatpush1.msra.mxu0 0.0
  %1047 = vmatprep.subr.mxu0 0.0
  %1048 = vmatpush1.msra.mxu0 0.0
  %1049 = vmatprep.subr.mxu0 0.0
  %1050 = vmatpush1.msra.mxu0 0.0
  %1051 = vmatprep.subr.mxu0 0.0
  %1052 = vmatpush1.msra.mxu0 0.0
  %1053 = vmatprep.subr.mxu0 0.0
  %1054 = vmatpush1.msra.mxu0 0.0
  %1055 = vmatprep.subr.mxu0 0.0
  %1056 = vmatpush1.msra.mxu0 0.0
  %1057 = vmatprep.subr.mxu0 0.0
  %1058 = vmatpush1.msra.mxu0 0.0
  %1059 = vmatprep.subr.mxu0 0.0
  %1060 = vmatpush1.msra.mxu0 0.0
  %1061 = vmatprep.subr.mxu0 0.0
  %1062 = vmatpush1.msra.mxu0 0.0
  %1063 = vmatprep.subr.mxu0 0.0
  %1064 = vmatpush1.msra.mxu0 0.0
  %1065 = vmatprep.subr.mxu0 0.0
  %1066 = vmatpush1.msra.mxu0 0.0
  %1067 = vmatprep.subr.mxu0 0.0
  %1068 = vmatpush1.msra.mxu0 0.0
  %1069 = vmatprep.subr.mxu0 0.0
  %1070 = vmatpush1.msra.mxu0 0.0
  %1071 = vmatprep.subr.mxu0 0.0
  %1072 = vmatpush1.msra.mxu0 0.0
  %1073 = vmatprep.subr.mxu0 0.0
  %1074 = vmatpush1.msra.mxu0 0.0
  %1075 = vmatprep.subr.mxu0 0.0
  %1076 = vmatpush1.msra.mxu0 0.0
  %1077 = vmatprep.subr.mxu0 0.0
  %1078 = vmatpush1.msra.mxu0 0.0
  %1079 = vmatprep.subr.mxu0 0.0
  %1080 = vmatpush1.msra.mxu0 0.0
  %1081 = vmatprep.subr.mxu0 0.0
  %1082 = vmatpush1.msra.mxu0 0.0
  %1083 = vmatprep.subr.mxu0 0.0
  %1084 = vmatpush1.msra.mxu0 0.0
  %1085 = vmatprep.subr.mxu0 0.0
  %1086 = vmatpush1.msra.mxu0 0.0
  %1087 = vmatprep.subr.mxu0 0.0
  %1088 = vmatpush1.msra.mxu0 0.0
  %1089 = vmatprep.subr.mxu0 0.0
  %1090 = vmatpush1.msra.mxu0 0.0
  %1091 = vmatprep.subr.mxu0 0.0
  %1092 = vmatpush1.msra.mxu0 0.0
  %1093 = vmatprep.subr.mxu0 0.0
  %1094 = vmatpush1.msra.mxu0 0.0
  %1095 = vmatprep.subr.mxu0 0.0
  %1096 = vmatpush1.msra.mxu0 0.0
  %1097 = vmatprep.subr.mxu0 0.0
  %1098 = vmatpush1.msra.mxu0 0.0
  %1099 = vmatprep.subr.mxu0 0.0
  %1100 = vmatpush1.msra.mxu0 0.0
  %1101 = vmatprep.subr.mxu0 0.0
  %1102 = vmatpush1.msra.mxu0 0.0
  %1103 = vmatprep.mubr.f32.mxu0 0.0
  %1104 = vmatmul.mubr.f32.gmra.mrb[0].mxu0 %v932
  %v1105 = vpop.f32.mrb[0].mxu0
  %v1106 = vadd.f32 0.0, %v1105
  %v1107 = vpop.f32.mrb[0].mxu0
  %v1108 = vadd.f32 0.0, %v1107
  %1109 = vmatprep.mubr.f32.mxu0 0.0
  %1110 = vmatmul.mubr.f32.gmra.mrb[0].mxu0 %v935
  %v1111 = vpop.f32.mrb[0].mxu0
  %v1112 = vadd.f32 0.0, %v1111
  %v1113 = vpop.f32.mrb[0].mxu0
  %v1114 = vadd.f32 0.0, %v1113
  %1115 = vmatprep.mubr.f32.mxu0 0.0
  %1116 = vmatmul.mubr.f32.gmra.mrb[0].mxu0 %v938
  %v1117 = vpop.f32.mrb[0].mxu0
  %v1118 = vadd.f32 0.0, %v1117
  %v1119 = vpop.f32.mrb[0].mxu0
  %v1120 = vadd.f32 0.0, %v1119
  %1121 = vmatprep.mubr.f32.mxu0 0.0
  %1122 = vmatmul.mubr.f32.gmra.mrb[0].mxu0 %v941
  %v1123 = vpop.f32.mrb[0].mxu0
  %v1124 = vadd.f32 0.0, %v1123
  %v1125 = vpop.f32.mrb[0].mxu0
  %v1126 = vadd.f32 0.0, %v1125
  %1127 = vmatprep.mubr.f32.mxu0 0.0
  %1128 = vmatmul.mubr.f32.gmra.mrb[0].mxu0 %v944
  %v1129 = vpop.f32.mrb[0].mxu0
  %v1130 = vadd.f32 0.0, %v1129
  %v1131 = vpop.f32.mrb[0].mxu0
  %v1132 = vadd.f32 0.0, %v1131
  %1133 = vmatprep.mubr.f32.mxu0 0.0
  %1134 = vmatmul.mubr.f32.gmra.mrb[0].mxu0 %v947
  %v1135 = vpop.f32.mrb[0].mxu0
  %v1136 = vadd.f32 0.0, %v1135
  %v1137 = vpop.f32.mrb[0].mxu0
  %v1138 = vadd.f32 0.0, %v1137
  %1139 = vmatprep.mubr.f32.mxu0 0.0
  %1140 = vmatmul.mubr.f32.gmra.mrb[0].mxu0 %v950
  %v1141 = vpop.f32.mrb[0].mxu0
  %v1142 = vadd.f32 0.0, %v1141
  %v1143 = vpop.f32.mrb[0].mxu0
  %v1144 = vadd.f32 0.0, %v1143
  %1145 = vmatprep.mubr.f32.mxu0 0.0
  %1146 = vmatmul.mubr.f32.gmra.mrb[0].mxu0 %v953
  %v1147 = vpop.f32.mrb[0].mxu0
  %v1148 = vadd.f32 0.0, %v1147
  %v1149 = vpop.f32.mrb[0].mxu0
  %v1150 = vadd.f32 0.0, %v1149
  %1151 = vmatprep.mubr.f32.mxu0 0.0
  %1152 = vmatmul.mubr.f32.gmra.mrb[0].mxu0 %v956
  %v1153 = vpop.f32.mrb[0].mxu0
  %v1154 = vadd.f32 0.0, %v1153
  %v1155 = vpop.f32.mrb[0].mxu0
  %v1156 = vadd.f32 0.0, %v1155
  %1157 = vmatprep.mubr.f32.mxu0 0.0
  %1158 = vmatmul.mubr.f32.gmra.mrb[0].mxu0 %v959
  %v1159 = vpop.f32.mrb[0].mxu0
  %v1160 = vadd.f32 0.0, %v1159
  %v1161 = vpop.f32.mrb[0].mxu0
  %v1162 = vadd.f32 0.0, %v1161
  %1163 = vmatprep.mubr.f32.mxu0 0.0
  %1164 = vmatmul.mubr.f32.gmra.mrb[0].mxu0 %v962
  %v1165 = vpop.f32.mrb[0].mxu0
  %v1166 = vadd.f32 0.0, %v1165
  %v1167 = vpop.f32.mrb[0].mxu0
  %v1168 = vadd.f32 0.0, %v1167
  %1169 = vmatprep.mubr.f32.mxu0 0.0
  %1170 = vmatmul.mubr.f32.gmra.mrb[0].mxu0 %v965
  %v1171 = vpop.f32.mrb[0].mxu0
  %v1172 = vadd.f32 0.0, %v1171
  %v1173 = vpop.f32.mrb[0].mxu0
  %v1174 = vadd.f32 0.0, %v1173
  %1175 = vmatprep.mubr.f32.mxu0 0.0
  %1176 = vmatmul.mubr.f32.gmra.mrb[0].mxu0 %v968
  %v1177 = vpop.f32.mrb[0].mxu0
  %v1178 = vadd.f32 0.0, %v1177
  %v1179 = vpop.f32.mrb[0].mxu0
  %v1180 = vadd.f32 0.0, %v1179
  %1181 = vmatprep.mubr.f32.mxu0 0.0
  %1182 = vmatmul.mubr.f32.gmra.mrb[0].mxu0 %v971
  %v1183 = vpop.f32.mrb[0].mxu0
  %v1184 = vadd.f32 0.0, %v1183
  %v1185 = vpop.f32.mrb[0].mxu0
  %v1186 = vadd.f32 0.0, %v1185
  %1187 = vmatprep.mubr.f32.mxu0 0.0
  %1188 = vmatmul.mubr.f32.gmra.mrb[0].mxu0 %v974
  %v1189 = vpop.f32.mrb[0].mxu0
  %v1190 = vadd.f32 0.0, %v1189
  %v1191 = vpop.f32.mrb[0].mxu0
  %v1192 = vadd.f32 0.0, %v1191
  %1193 = vmatprep.mubr.f32.mxu0 0.0
  %1194 = vmatmul.mubr.f32.gmra.mrb[0].mxu0 %v977
  %v1195 = vpop.f32.mrb[0].mxu0
  %v1196 = vadd.f32 0.0, %v1195
  %v1197 = vpop.f32.mrb[0].mxu0
  %v1198 = vadd.f32 0.0, %v1197
  %1199 = vmatprep.mubr.f32.mxu0 0.0
  %1200 = vmatmul.mubr.f32.gmra.mrb[0].mxu0 %v980
  %v1201 = vpop.f32.mrb[0].mxu0
  %v1202 = vadd.f32 0.0, %v1201
  %v1203 = vpop.f32.mrb[0].mxu0
  %v1204 = vadd.f32 0.0, %v1203
  %1205 = vmatprep.mubr.f32.mxu0 0.0
  %1206 = vmatmul.mubr.f32.gmra.mrb[0].mxu0 %v983
  %v1207 = vpop.f32.mrb[0].mxu0
  %v1208 = vadd.f32 0.0, %v1207
  %v1209 = vpop.f32.mrb[0].mxu0
  %v1210 = vadd.f32 0.0, %v1209
  %1211 = vmatprep.mubr.f32.mxu0 0.0
  %1212 = vmatmul.mubr.f32.gmra.mrb[0].mxu0 %v986
  %v1213 = vpop.f32.mrb[0].mxu0
  %v1214 = vadd.f32 0.0, %v1213
  %v1215 = vpop.f32.mrb[0].mxu0
  %v1216 = vadd.f32 0.0, %v1215
  %1217 = vmatprep.mubr.f32.mxu0 0.0
  %1218 = vmatmul.mubr.f32.gmra.mrb[0].mxu0 %v989
  %v1219 = vpop.f32.mrb[0].mxu0
  %v1220 = vadd.f32 0.0, %v1219
  %v1221 = vpop.f32.mrb[0].mxu0
  %v1222 = vadd.f32 0.0, %v1221
  %1223 = vmatprep.mubr.f32.mxu0 0.0
  %1224 = vmatmul.mubr.f32.gmra.mrb[0].mxu0 %v992
  %v1225 = vpop.f32.mrb[0].mxu0
  %v1226 = vadd.f32 0.0, %v1225
  %v1227 = vpop.f32.mrb[0].mxu0
  %v1228 = vadd.f32 0.0, %v1227
  %1229 = vmatprep.mubr.f32.mxu0 0.0
  %1230 = vmatmul.mubr.f32.gmra.mrb[0].mxu0 %v995
  %v1231 = vpop.f32.mrb[0].mxu0
  %v1232 = vadd.f32 0.0, %v1231
  %v1233 = vpop.f32.mrb[0].mxu0
  %v1234 = vadd.f32 0.0, %v1233
  %1235 = vmatprep.mubr.f32.mxu0 0.0
  %1236 = vmatmul.mubr.f32.gmra.mrb[0].mxu0 %v998
  %v1237 = vpop.f32.mrb[0].mxu0
  %v1238 = vadd.f32 0.0, %v1237
  %v1239 = vpop.f32.mrb[0].mxu0
  %v1240 = vadd.f32 0.0, %v1239
  %1241 = vmatprep.mubr.f32.mxu0 0.0
  %1242 = vmatmul.mubr.f32.gmra.mrb[0].mxu0 %v1001
  %v1243 = vpop.f32.mrb[0].mxu0
  %v1244 = vadd.f32 0.0, %v1243
  %v1245 = vpop.f32.mrb[0].mxu0
  %v1246 = vadd.f32 0.0, %v1245
  %1247 = vmatprep.mubr.f32.mxu0 0.0
  %1248 = vmatmul.mubr.f32.gmra.mrb[0].mxu0 %v1004
  %v1249 = vpop.f32.mrb[0].mxu0
  %v1250 = vadd.f32 0.0, %v1249
  %v1251 = vpop.f32.mrb[0].mxu0
  %v1252 = vadd.f32 0.0, %v1251
  %1253 = vmatprep.mubr.f32.mxu0 0.0
  %1254 = vmatmul.mubr.f32.gmra.mrb[0].mxu0 %v1007
  %v1255 = vpop.f32.mrb[0].mxu0
  %v1256 = vadd.f32 0.0, %v1255
  %v1257 = vpop.f32.mrb[0].mxu0
  %v1258 = vadd.f32 0.0, %v1257
  %1259 = vmatprep.mubr.f32.mxu0 0.0
  %1260 = vmatmul.mubr.f32.gmra.mrb[0].mxu0 %v1010
  %v1261 = vpop.f32.mrb[0].mxu0
  %v1262 = vadd.f32 0.0, %v1261
  %v1263 = vpop.f32.mrb[0].mxu0
  %v1264 = vadd.f32 0.0, %v1263
  %1265 = vmatprep.mubr.f32.mxu0 0.0
  %1266 = vmatmul.mubr.f32.gmra.mrb[0].mxu0 %v1013
  %v1267 = vpop.f32.mrb[0].mxu0
  %v1268 = vadd.f32 0.0, %v1267
  %v1269 = vpop.f32.mrb[0].mxu0
  %v1270 = vadd.f32 0.0, %v1269
  %1271 = vmatprep.mubr.f32.mxu0 0.0
  %1272 = vmatmul.mubr.f32.gmra.mrb[0].mxu0 %v1016
  %v1273 = vpop.f32.mrb[0].mxu0
  %v1274 = vadd.f32 0.0, %v1273
  %v1275 = vpop.f32.mrb[0].mxu0
  %v1276 = vadd.f32 0.0, %v1275
  %1277 = vmatprep.mubr.f32.mxu0 0.0
  %1278 = vmatmul.mubr.f32.gmra.mrb[0].mxu0 %v1019
  %v1279 = vpop.f32.mrb[0].mxu0
  %v1280 = vadd.f32 0.0, %v1279
  %v1281 = vpop.f32.mrb[0].mxu0
  %v1282 = vadd.f32 0.0, %v1281
  %1283 = vmatprep.mubr.f32.mxu0 0.0
  %1284 = vmatmul.mubr.f32.gmra.mrb[0].mxu0 %v1022
  %v1285 = vpop.f32.mrb[0].mxu0
  %v1286 = vadd.f32 0.0, %v1285
  %v1287 = vpop.f32.mrb[0].mxu0
  %v1288 = vadd.f32 0.0, %v1287
  %1289 = vmatprep.mubr.f32.mxu0 0.0
  %1290 = vmatmul.mubr.f32.gmra.mrb[0].mxu0 %v1025
  %v1291 = vpop.f32.mrb[0].mxu0
  %v1292 = vadd.f32 0.0, %v1291
  %v1293 = vpop.f32.mrb[0].mxu0
  %v1294 = vadd.f32 0.0, %v1293
  %1295 = vmatprep.mubr.f32.mxu0 0.0
  %1296 = vmatmul.mubr.f32.gmra.mrb[0].mxu0 %v1028
  %v1297 = vpop.f32.mrb[0].mxu0
  %v1298 = vadd.f32 0.0, %v1297
  %v1299 = vpop.f32.mrb[0].mxu0
  %v1300 = vadd.f32 0.0, %v1299
  %1301 = vmatprep.mubr.f32.mxu0 0.0
  %1302 = vmatmul.mubr.f32.gmra.mrb[0].mxu0 %v1031
  %v1303 = vpop.f32.mrb[0].mxu0
  %v1304 = vadd.f32 0.0, %v1303
  %v1305 = vpop.f32.mrb[0].mxu0
  %v1306 = vadd.f32 0.0, %v1305
  %1307 = vmatprep.mubr.f32.mxu0 0.0
  %1308 = vmatmul.mubr.f32.gmra.mrb[0].mxu0 %v1034
  %v1309 = vpop.f32.mrb[0].mxu0
  %v1310 = vadd.f32 0.0, %v1309
  %v1311 = vpop.f32.mrb[0].mxu0
  %v1312 = vadd.f32 0.0, %v1311
  %1313 = vmatprep.mubr.f32.mxu0 0.0
  %1314 = vmatmul.mubr.f32.gmra.mrb[0].mxu0 %v1037
  %v1315 = vpop.f32.mrb[0].mxu0
  %v1316 = vadd.f32 0.0, %v1315
  %v1317 = vpop.f32.mrb[0].mxu0
  %v1318 = vadd.f32 0.0, %v1317
  %1319 = vdwg.mxu0
  %v1320 = vadd.f32 %v823, %v1106
  %v1321 = vadd.f32 %v824, %v1108
  %v1322 = vadd.f32 %v825, %v1112
  %v1323 = vadd.f32 %v826, %v1114
  %v1324 = vadd.f32 %v827, %v1118
  %v1325 = vadd.f32 %v828, %v1120
  %v1326 = vadd.f32 %v829, %v1124
  %v1327 = vadd.f32 %v830, %v1126
  %v1328 = vadd.f32 %v831, %v1130
  %v1329 = vadd.f32 %v832, %v1132
  %v1330 = vadd.f32 %v833, %v1136
  %v1331 = vadd.f32 %v834, %v1138
  %v1332 = vadd.f32 %v835, %v1142
  %v1333 = vadd.f32 %v836, %v1144
  %v1334 = vadd.f32 %v837, %v1148
  %v1335 = vadd.f32 %v838, %v1150
  %v1336 = vadd.f32 %v839, %v1154
  %v1337 = vadd.f32 %v840, %v1156
  %v1338 = vadd.f32 %v841, %v1160
  %v1339 = vadd.f32 %v842, %v1162
  %v1340 = vadd.f32 %v843, %v1166
  %v1341 = vadd.f32 %v844, %v1168
  %v1342 = vadd.f32 %v845, %v1172
  %v1343 = vadd.f32 %v846, %v1174
  %v1344 = vadd.f32 %v847, %v1178
  %v1345 = vadd.f32 %v848, %v1180
  %v1346 = vadd.f32 %v849, %v1184
  %v1347 = vadd.f32 %v850, %v1186
  %v1348 = vadd.f32 %v851, %v1190
  %v1349 = vadd.f32 %v852, %v1192
  %v1350 = vadd.f32 %v853, %v1196
  %v1351 = vadd.f32 %v854, %v1198
  %v1352 = vadd.f32 %v855, %v1202
  %v1353 = vadd.f32 %v856, %v1204
  %v1354 = vadd.f32 %v857, %v1208
  %v1355 = vadd.f32 %v858, %v1210
  %v1356 = vadd.f32 %v859, %v1214
  %v1357 = vadd.f32 %v860, %v1216
  %v1358 = vadd.f32 %v861, %v1220
  %v1359 = vadd.f32 %v862, %v1222
  %v1360 = vadd.f32 %v863, %v1226
  %v1361 = vadd.f32 %v864, %v1228
  %v1362 = vadd.f32 %v865, %v1232
  %v1363 = vadd.f32 %v866, %v1234
  %v1364 = vadd.f32 %v867, %v1238
  %v1365 = vadd.f32 %v868, %v1240
  %v1366 = vadd.f32 %v869, %v1244
  %v1367 = vadd.f32 %v870, %v1246
  %v1368 = vadd.f32 %v871, %v1250
  %v1369 = vadd.f32 %v872, %v1252
  %v1370 = vadd.f32 %v873, %v1256
  %v1371 = vadd.f32 %v874, %v1258
  %v1372 = vadd.f32 %v875, %v1262
  %v1373 = vadd.f32 %v876, %v1264
  %v1374 = vadd.f32 %v877, %v1268
  %v1375 = vadd.f32 %v878, %v1270
  %v1376 = vadd.f32 %v879, %v1274
  %v1377 = vadd.f32 %v880, %v1276
  %v1378 = vadd.f32 %v881, %v1280
  %v1379 = vadd.f32 %v882, %v1282
  %v1380 = vadd.f32 %v883, %v1286
  %v1381 = vadd.f32 %v884, %v1288
  %v1382 = vadd.f32 %v885, %v1292
  %v1383 = vadd.f32 %v886, %v1294
  %v1384 = vadd.f32 %v887, %v1298
  %v1385 = vadd.f32 %v888, %v1300
  %v1386 = vadd.f32 %v889, %v1304
  %v1387 = vadd.f32 %v890, %v1306
  %v1388 = vadd.f32 %v891, %v1310
  %v1389 = vadd.f32 %v892, %v1312
  %v1390 = vadd.f32 %v893, %v1316
  %v1391 = vadd.f32 %v894, %v1318
  %1392 = vrot.lane.b32.xlu0 %v1320, 17
  %v1393 = vpop.permute.xlu0 %1392
  %1394 = vrot.lane.b32.xlu0 %v1322, 17
  %v1395 = vpop.permute.xlu0 %1394
  %1396 = vrot.lane.b32.xlu0 %v1324, 17
  %v1397 = vpop.permute.xlu0 %1396
  %1398 = vrot.lane.b32.xlu0 %v1326, 17
  %v1399 = vpop.permute.xlu0 %1398
  %1400 = vrot.lane.b32.xlu0 %v1321, 17
  %v1401 = vpop.permute.xlu0 %1400
  %1402 = vrot.lane.b32.xlu0 %v1323, 17
  %v1403 = vpop.permute.xlu0 %1402
  %1404 = vrot.lane.b32.xlu0 %v1325, 17
  %v1405 = vpop.permute.xlu0 %1404
  %1406 = vrot.lane.b32.xlu0 %v1327, 17
  %v1407 = vpop.permute.xlu0 %1406
  %v1408 = vlaneseq
  %v1409 = vand.u32 %v1408, 127
  %vm1410 = vcmp.lt.s32.totalorder %v1409, 17
  %v1411 = vsel %vm1410, %v1393, %v1401
  %v1412 = vsel %vm1410, %v1395, %v1403
  %v1413 = vsel %vm1410, %v1397, %v1405
  %v1414 = vsel %vm1410, %v1399, %v1407
  %v1415 = vsel %vm1410, %v1401, %v1393
  %v1416 = vsel %vm1410, %v1403, %v1395
  %v1417 = vsel %vm1410, %v1405, %v1397
  %v1418 = vsel %vm1410, %v1407, %v1399
  %v1419 = vlaneseq
  %v1420 = vshrl.u32 %v1419, 7
  %v1421 = vsub.s32 0, %v1420
  %v1422 = vrot.slane %v173, %v1421
  %v1423 = vlaneseq
  %v1424 = vshrl.u32 %v1423, 7
  %v1425 = vsub.s32 0, %v1424
  %v1426 = vrot.slane %v174, %v1425
  %v1427 = vmul.f32 %v1415, %v1422
  %v1428 = vmul.f32 %v1411, %v1426
  %v1429 = vmul.f32 %v1416, %v1422
  %v1430 = vmul.f32 %v1412, %v1426
  %v1431 = vmul.f32 %v1417, %v1422
  %v1432 = vmul.f32 %v1413, %v1426
  %v1433 = vmul.f32 %v1418, %v1422
  %v1434 = vmul.f32 %v1414, %v1426
  %v1435 = vadd.f32 %v1427, 0.0
  %v1436 = vadd.f32 %v1428, 0.0
  %v1437 = vadd.f32 %v1429, 0.0
  %v1438 = vadd.f32 %v1430, 0.0
  %v1439 = vadd.f32 %v1431, 0.0
  %v1440 = vadd.f32 %v1432, 0.0
  %v1441 = vadd.f32 %v1433, 0.0
  %v1442 = vadd.f32 %v1434, 0.0
  %1443 = vrot.lane.b32.xlu0 %v1328, 16
  %v1444 = vpop.permute.xlu0 %1443
  %1445 = vrot.lane.b32.xlu0 %v1330, 16
  %v1446 = vpop.permute.xlu0 %1445
  %1447 = vrot.lane.b32.xlu0 %v1332, 16
  %v1448 = vpop.permute.xlu0 %1447
  %1449 = vrot.lane.b32.xlu0 %v1334, 16
  %v1450 = vpop.permute.xlu0 %1449
  %1451 = vrot.lane.b32.xlu0 %v1329, 16
  %v1452 = vpop.permute.xlu0 %1451
  %1453 = vrot.lane.b32.xlu0 %v1331, 16
  %v1454 = vpop.permute.xlu0 %1453
  %1455 = vrot.lane.b32.xlu0 %v1333, 16
  %v1456 = vpop.permute.xlu0 %1455
  %1457 = vrot.lane.b32.xlu0 %v1335, 16
  %v1458 = vpop.permute.xlu0 %1457
  %vm1459 = vcmp.lt.s32.totalorder %v1409, 16
  %v1460 = vsel %vm1459, %v1444, %v1452
  %v1461 = vsel %vm1459, %v1446, %v1454
  %v1462 = vsel %vm1459, %v1448, %v1456
  %v1463 = vsel %vm1459, %v1450, %v1458
  %v1464 = vsel %vm1459, %v1452, %v1444
  %v1465 = vsel %vm1459, %v1454, %v1446
  %v1466 = vsel %vm1459, %v1456, %v1448
  %v1467 = vsel %vm1459, %v1458, %v1450
  %v1468 = vlaneseq
  %v1469 = vshrl.u32 %v1468, 7
  %v1470 = vsub.s32 1, %v1469
  %v1471 = vrot.slane %v173, %v1470
  %v1472 = vlaneseq
  %v1473 = vshrl.u32 %v1472, 7
  %v1474 = vsub.s32 1, %v1473
  %v1475 = vrot.slane %v174, %v1474
  %v1476 = vmul.f32 %v1464, %v1471
  %v1477 = vmul.f32 %v1460, %v1475
  %v1478 = vmul.f32 %v1465, %v1471
  %v1479 = vmul.f32 %v1461, %v1475
  %v1480 = vmul.f32 %v1466, %v1471
  %v1481 = vmul.f32 %v1462, %v1475
  %v1482 = vmul.f32 %v1467, %v1471
  %v1483 = vmul.f32 %v1463, %v1475
  %v1484 = vadd.f32 %v1435, %v1476
  %v1485 = vadd.f32 %v1436, %v1477
  %v1486 = vadd.f32 %v1437, %v1478
  %v1487 = vadd.f32 %v1438, %v1479
  %v1488 = vadd.f32 %v1439, %v1480
  %v1489 = vadd.f32 %v1440, %v1481
  %v1490 = vadd.f32 %v1441, %v1482
  %v1491 = vadd.f32 %v1442, %v1483
  %1492 = vrot.lane.b32.xlu0 %v1336, 15
  %v1493 = vpop.permute.xlu0 %1492
  %1494 = vrot.lane.b32.xlu0 %v1338, 15
  %v1495 = vpop.permute.xlu0 %1494
  %1496 = vrot.lane.b32.xlu0 %v1340, 15
  %v1497 = vpop.permute.xlu0 %1496
  %1498 = vrot.lane.b32.xlu0 %v1342, 15
  %v1499 = vpop.permute.xlu0 %1498
  %1500 = vrot.lane.b32.xlu0 %v1337, 15
  %v1501 = vpop.permute.xlu0 %1500
  %1502 = vrot.lane.b32.xlu0 %v1339, 15
  %v1503 = vpop.permute.xlu0 %1502
  %1504 = vrot.lane.b32.xlu0 %v1341, 15
  %v1505 = vpop.permute.xlu0 %1504
  %1506 = vrot.lane.b32.xlu0 %v1343, 15
  %v1507 = vpop.permute.xlu0 %1506
  %vm1508 = vcmp.lt.s32.totalorder %v1409, 15
  %v1509 = vsel %vm1508, %v1493, %v1501
  %v1510 = vsel %vm1508, %v1495, %v1503
  %v1511 = vsel %vm1508, %v1497, %v1505
  %v1512 = vsel %vm1508, %v1499, %v1507
  %v1513 = vsel %vm1508, %v1501, %v1493
  %v1514 = vsel %vm1508, %v1503, %v1495
  %v1515 = vsel %vm1508, %v1505, %v1497
  %v1516 = vsel %vm1508, %v1507, %v1499
  %v1517 = vlaneseq
  %v1518 = vshrl.u32 %v1517, 7
  %v1519 = vsub.s32 2, %v1518
  %v1520 = vrot.slane %v173, %v1519
  %v1521 = vlaneseq
  %v1522 = vshrl.u32 %v1521, 7
  %v1523 = vsub.s32 2, %v1522
  %v1524 = vrot.slane %v174, %v1523
  %v1525 = vmul.f32 %v1513, %v1520
  %v1526 = vmul.f32 %v1509, %v1524
  %v1527 = vmul.f32 %v1514, %v1520
  %v1528 = vmul.f32 %v1510, %v1524
  %v1529 = vmul.f32 %v1515, %v1520
  %v1530 = vmul.f32 %v1511, %v1524
  %v1531 = vmul.f32 %v1516, %v1520
  %v1532 = vmul.f32 %v1512, %v1524
  %v1533 = vadd.f32 %v1484, %v1525
  %v1534 = vadd.f32 %v1485, %v1526
  %v1535 = vadd.f32 %v1486, %v1527
  %v1536 = vadd.f32 %v1487, %v1528
  %v1537 = vadd.f32 %v1488, %v1529
  %v1538 = vadd.f32 %v1489, %v1530
  %v1539 = vadd.f32 %v1490, %v1531
  %v1540 = vadd.f32 %v1491, %v1532
  %1541 = vrot.lane.b32.xlu0 %v1344, 1
  %v1542 = vpop.permute.xlu0 %1541
  %1543 = vrot.lane.b32.xlu0 %v1346, 1
  %v1544 = vpop.permute.xlu0 %1543
  %1545 = vrot.lane.b32.xlu0 %v1348, 1
  %v1546 = vpop.permute.xlu0 %1545
  %1547 = vrot.lane.b32.xlu0 %v1350, 1
  %v1548 = vpop.permute.xlu0 %1547
  %1549 = vrot.lane.b32.xlu0 %v1345, 1
  %v1550 = vpop.permute.xlu0 %1549
  %1551 = vrot.lane.b32.xlu0 %v1347, 1
  %v1552 = vpop.permute.xlu0 %1551
  %1553 = vrot.lane.b32.xlu0 %v1349, 1
  %v1554 = vpop.permute.xlu0 %1553
  %1555 = vrot.lane.b32.xlu0 %v1351, 1
  %v1556 = vpop.permute.xlu0 %1555
  %vm1557 = vcmp.lt.s32.totalorder %v1409, 1
  %v1558 = vsel %vm1557, %v1542, %v1550
  %v1559 = vsel %vm1557, %v1544, %v1552
  %v1560 = vsel %vm1557, %v1546, %v1554
  %v1561 = vsel %vm1557, %v1548, %v1556
  %v1562 = vsel %vm1557, %v1550, %v1542
  %v1563 = vsel %vm1557, %v1552, %v1544
  %v1564 = vsel %vm1557, %v1554, %v1546
  %v1565 = vsel %vm1557, %v1556, %v1548
  %v1566 = vlaneseq
  %v1567 = vshrl.u32 %v1566, 7
  %v1568 = vsub.s32 3, %v1567
  %v1569 = vrot.slane %v173, %v1568
  %v1570 = vlaneseq
  %v1571 = vshrl.u32 %v1570, 7
  %v1572 = vsub.s32 3, %v1571
  %v1573 = vrot.slane %v174, %v1572
  %v1574 = vmul.f32 %v1562, %v1569
  %v1575 = vmul.f32 %v1558, %v1573
  %v1576 = vmul.f32 %v1563, %v1569
  %v1577 = vmul.f32 %v1559, %v1573
  %v1578 = vmul.f32 %v1564, %v1569
  %v1579 = vmul.f32 %v1560, %v1573
  %v1580 = vmul.f32 %v1565, %v1569
  %v1581 = vmul.f32 %v1561, %v1573
  %v1582 = vadd.f32 %v1533, %v1574
  %v1583 = vadd.f32 %v1534, %v1575
  %v1584 = vadd.f32 %v1535, %v1576
  %v1585 = vadd.f32 %v1536, %v1577
  %v1586 = vadd.f32 %v1537, %v1578
  %v1587 = vadd.f32 %v1538, %v1579
  %v1588 = vadd.f32 %v1539, %v1580
  %v1589 = vadd.f32 %v1540, %v1581
  %v1590 = vadd.f32 %v1582, %v1352
  %v1591 = vadd.f32 %v1583, %v1353
  %v1592 = vadd.f32 %v1584, %v1354
  %v1593 = vadd.f32 %v1585, %v1355
  %v1594 = vadd.f32 %v1586, %v1356
  %v1595 = vadd.f32 %v1587, %v1357
  %v1596 = vadd.f32 %v1588, %v1358
  %v1597 = vadd.f32 %v1589, %v1359
  %1598 = vrot.lane.b32.xlu0 %v1360, 127
  %v1599 = vpop.permute.xlu0 %1598
  %1600 = vrot.lane.b32.xlu0 %v1362, 127
  %v1601 = vpop.permute.xlu0 %1600
  %1602 = vrot.lane.b32.xlu0 %v1364, 127
  %v1603 = vpop.permute.xlu0 %1602
  %1604 = vrot.lane.b32.xlu0 %v1366, 127
  %v1605 = vpop.permute.xlu0 %1604
  %1606 = vrot.lane.b32.xlu0 %v1361, 127
  %v1607 = vpop.permute.xlu0 %1606
  %1608 = vrot.lane.b32.xlu0 %v1363, 127
  %v1609 = vpop.permute.xlu0 %1608
  %1610 = vrot.lane.b32.xlu0 %v1365, 127
  %v1611 = vpop.permute.xlu0 %1610
  %1612 = vrot.lane.b32.xlu0 %v1367, 127
  %v1613 = vpop.permute.xlu0 %1612
  %vm1614 = vcmp.lt.s32.totalorder %v1409, 127
  %v1615 = vsel %vm1614, %v1599, %v1607
  %v1616 = vsel %vm1614, %v1601, %v1609
  %v1617 = vsel %vm1614, %v1603, %v1611
  %v1618 = vsel %vm1614, %v1605, %v1613
  %v1619 = vsel %vm1614, %v1607, %v1599
  %v1620 = vsel %vm1614, %v1609, %v1601
  %v1621 = vsel %vm1614, %v1611, %v1603
  %v1622 = vsel %vm1614, %v1613, %v1605
  %v1623 = vlaneseq
  %v1624 = vshrl.u32 %v1623, 7
  %v1625 = vsub.s32 5, %v1624
  %v1626 = vrot.slane %v173, %v1625
  %v1627 = vlaneseq
  %v1628 = vshrl.u32 %v1627, 7
  %v1629 = vsub.s32 5, %v1628
  %v1630 = vrot.slane %v174, %v1629
  %v1631 = vmul.f32 %v1615, %v1626
  %v1632 = vmul.f32 %v1619, %v1630
  %v1633 = vmul.f32 %v1616, %v1626
  %v1634 = vmul.f32 %v1620, %v1630
  %v1635 = vmul.f32 %v1617, %v1626
  %v1636 = vmul.f32 %v1621, %v1630
  %v1637 = vmul.f32 %v1618, %v1626
  %v1638 = vmul.f32 %v1622, %v1630
  %v1639 = vadd.f32 %v1590, %v1631
  %v1640 = vadd.f32 %v1591, %v1632
  %v1641 = vadd.f32 %v1592, %v1633
  %v1642 = vadd.f32 %v1593, %v1634
  %v1643 = vadd.f32 %v1594, %v1635
  %v1644 = vadd.f32 %v1595, %v1636
  %v1645 = vadd.f32 %v1596, %v1637
  %v1646 = vadd.f32 %v1597, %v1638
  %1647 = vrot.lane.b32.xlu0 %v1368, 113
  %v1648 = vpop.permute.xlu0 %1647
  %1649 = vrot.lane.b32.xlu0 %v1370, 113
  %v1650 = vpop.permute.xlu0 %1649
  %1651 = vrot.lane.b32.xlu0 %v1372, 113
  %v1652 = vpop.permute.xlu0 %1651
  %1653 = vrot.lane.b32.xlu0 %v1374, 113
  %v1654 = vpop.permute.xlu0 %1653
  %1655 = vrot.lane.b32.xlu0 %v1369, 113
  %v1656 = vpop.permute.xlu0 %1655
  %1657 = vrot.lane.b32.xlu0 %v1371, 113
  %v1658 = vpop.permute.xlu0 %1657
  %1659 = vrot.lane.b32.xlu0 %v1373, 113
  %v1660 = vpop.permute.xlu0 %1659
  %1661 = vrot.lane.b32.xlu0 %v1375, 113
  %v1662 = vpop.permute.xlu0 %1661
  %vm1663 = vcmp.lt.s32.totalorder %v1409, 113
  %v1664 = vsel %vm1663, %v1648, %v1656
  %v1665 = vsel %vm1663, %v1650, %v1658
  %v1666 = vsel %vm1663, %v1652, %v1660
  %v1667 = vsel %vm1663, %v1654, %v1662
  %v1668 = vsel %vm1663, %v1656, %v1648
  %v1669 = vsel %vm1663, %v1658, %v1650
  %v1670 = vsel %vm1663, %v1660, %v1652
  %v1671 = vsel %vm1663, %v1662, %v1654
  %v1672 = vlaneseq
  %v1673 = vshrl.u32 %v1672, 7
  %v1674 = vsub.s32 6, %v1673
  %v1675 = vrot.slane %v173, %v1674
  %v1676 = vlaneseq
  %v1677 = vshrl.u32 %v1676, 7
  %v1678 = vsub.s32 6, %v1677
  %v1679 = vrot.slane %v174, %v1678
  %v1680 = vmul.f32 %v1664, %v1675
  %v1681 = vmul.f32 %v1668, %v1679
  %v1682 = vmul.f32 %v1665, %v1675
  %v1683 = vmul.f32 %v1669, %v1679
  %v1684 = vmul.f32 %v1666, %v1675
  %v1685 = vmul.f32 %v1670, %v1679
  %v1686 = vmul.f32 %v1667, %v1675
  %v1687 = vmul.f32 %v1671, %v1679
  %v1688 = vadd.f32 %v1639, %v1680
  %v1689 = vadd.f32 %v1640, %v1681
  %v1690 = vadd.f32 %v1641, %v1682
  %v1691 = vadd.f32 %v1642, %v1683
  %v1692 = vadd.f32 %v1643, %v1684
  %v1693 = vadd.f32 %v1644, %v1685
  %v1694 = vadd.f32 %v1645, %v1686
  %v1695 = vadd.f32 %v1646, %v1687
  %1696 = vrot.lane.b32.xlu0 %v1376, 112
  %v1697 = vpop.permute.xlu0 %1696
  %1698 = vrot.lane.b32.xlu0 %v1378, 112
  %v1699 = vpop.permute.xlu0 %1698
  %1700 = vrot.lane.b32.xlu0 %v1380, 112
  %v1701 = vpop.permute.xlu0 %1700
  %1702 = vrot.lane.b32.xlu0 %v1382, 112
  %v1703 = vpop.permute.xlu0 %1702
  %1704 = vrot.lane.b32.xlu0 %v1377, 112
  %v1705 = vpop.permute.xlu0 %1704
  %1706 = vrot.lane.b32.xlu0 %v1379, 112
  %v1707 = vpop.permute.xlu0 %1706
  %1708 = vrot.lane.b32.xlu0 %v1381, 112
  %v1709 = vpop.permute.xlu0 %1708
  %1710 = vrot.lane.b32.xlu0 %v1383, 112
  %v1711 = vpop.permute.xlu0 %1710
  %vm1712 = vcmp.lt.s32.totalorder %v1409, 112
  %v1713 = vsel %vm1712, %v1697, %v1705
  %v1714 = vsel %vm1712, %v1699, %v1707
  %v1715 = vsel %vm1712, %v1701, %v1709
  %v1716 = vsel %vm1712, %v1703, %v1711
  %v1717 = vsel %vm1712, %v1705, %v1697
  %v1718 = vsel %vm1712, %v1707, %v1699
  %v1719 = vsel %vm1712, %v1709, %v1701
  %v1720 = vsel %vm1712, %v1711, %v1703
  %v1721 = vlaneseq
  %v1722 = vshrl.u32 %v1721, 7
  %v1723 = vsub.s32 7, %v1722
  %v1724 = vrot.slane %v173, %v1723
  %v1725 = vlaneseq
  %v1726 = vshrl.u32 %v1725, 7
  %v1727 = vsub.s32 7, %v1726
  %v1728 = vrot.slane %v174, %v1727
  %v1729 = vmul.f32 %v1713, %v1724
  %v1730 = vmul.f32 %v1717, %v1728
  %v1731 = vmul.f32 %v1714, %v1724
  %v1732 = vmul.f32 %v1718, %v1728
  %v1733 = vmul.f32 %v1715, %v1724
  %v1734 = vmul.f32 %v1719, %v1728
  %v1735 = vmul.f32 %v1716, %v1724
  %v1736 = vmul.f32 %v1720, %v1728
  %v1737 = vadd.f32 %v1688, %v1729
  %v1738 = vadd.f32 %v1689, %v1730
  %v1739 = vadd.f32 %v1690, %v1731
  %v1740 = vadd.f32 %v1691, %v1732
  %v1741 = vadd.f32 %v1692, %v1733
  %v1742 = vadd.f32 %v1693, %v1734
  %v1743 = vadd.f32 %v1694, %v1735
  %v1744 = vadd.f32 %v1695, %v1736
  %1745 = vrot.lane.b32.xlu0 %v1384, 111
  %v1746 = vpop.permute.xlu0 %1745
  %1747 = vrot.lane.b32.xlu0 %v1386, 111
  %v1748 = vpop.permute.xlu0 %1747
  %1749 = vrot.lane.b32.xlu0 %v1388, 111
  %v1750 = vpop.permute.xlu0 %1749
  %1751 = vrot.lane.b32.xlu0 %v1390, 111
  %v1752 = vpop.permute.xlu0 %1751
  %1753 = vrot.lane.b32.xlu0 %v1385, 111
  %v1754 = vpop.permute.xlu0 %1753
  %1755 = vrot.lane.b32.xlu0 %v1387, 111
  %v1756 = vpop.permute.xlu0 %1755
  %1757 = vrot.lane.b32.xlu0 %v1389, 111
  %v1758 = vpop.permute.xlu0 %1757
  %1759 = vrot.lane.b32.xlu0 %v1391, 111
  %v1760 = vpop.permute.xlu0 %1759
  %vm1761 = vcmp.lt.s32.totalorder %v1409, 111
  %v1762 = vsel %vm1761, %v1746, %v1754
  %v1763 = vsel %vm1761, %v1748, %v1756
  %v1764 = vsel %vm1761, %v1750, %v1758
  %v1765 = vsel %vm1761, %v1752, %v1760
  %v1766 = vsel %vm1761, %v1754, %v1746
  %v1767 = vsel %vm1761, %v1756, %v1748
  %v1768 = vsel %vm1761, %v1758, %v1750
  %v1769 = vsel %vm1761, %v1760, %v1752
  %v1770 = vlaneseq
  %v1771 = vshrl.u32 %v1770, 7
  %v1772 = vsub.s32 0, %v1771
  %v1773 = vrot.slane %v175, %v1772
  %v1774 = vlaneseq
  %v1775 = vshrl.u32 %v1774, 7
  %v1776 = vsub.s32 0, %v1775
  %v1777 = vrot.slane %v176, %v1776
  %v1778 = vmul.f32 %v1762, %v1773
  %v1779 = vmul.f32 %v1766, %v1777
  %v1780 = vmul.f32 %v1763, %v1773
  %v1781 = vmul.f32 %v1767, %v1777
  %v1782 = vmul.f32 %v1764, %v1773
  %v1783 = vmul.f32 %v1768, %v1777
  %v1784 = vmul.f32 %v1765, %v1773
  %v1785 = vmul.f32 %v1769, %v1777
  %v1786 = vadd.f32 %v1737, %v1778
  %v1787 = vadd.f32 %v1738, %v1779
  %v1788 = vadd.f32 %v1739, %v1780
  %v1789 = vadd.f32 %v1740, %v1781
  %v1790 = vadd.f32 %v1741, %v1782
  %v1791 = vadd.f32 %v1742, %v1783
  %v1792 = vadd.f32 %v1743, %v1784
  %v1793 = vadd.f32 %v1744, %v1785
  %v1794 = vld [vmem:[%s9] sm:$0xff]
  %v1795 = vld [vmem:[%s9 + $0x8] sm:$0xff]
  %v1796 = vld [vmem:[%s9 + $0x10] sm:$0xff]
  %v1797 = vld [vmem:[%s9 + $0x18] sm:$0xff]
  %1799 = vset.pattern.permute.xlu0 0
  %1800 = vperm.xlu0 %1799, %v1794
  %v1801 = vpop.permute.xlu0 %1800
  %1804 = vset.pattern.permute.xlu0 0
  %1805 = vperm.xlu0 %1804, %v1795
  %v1806 = vpop.permute.xlu0 %1805
  %1809 = vset.pattern.permute.xlu0 0
  %1810 = vperm.xlu0 %1809, %v1796
  %v1811 = vpop.permute.xlu0 %1810
  %1814 = vset.pattern.permute.xlu0 0
  %1815 = vperm.xlu0 %1814, %v1797
  %v1816 = vpop.permute.xlu0 %1815
  %v1818 = vadd.f32 %v1786, %v1801
  %v1819 = vadd.f32 %v1787, %v1801
  %v1820 = vadd.f32 %v1788, %v1806
  %v1821 = vadd.f32 %v1789, %v1806
  %v1822 = vadd.f32 %v1790, %v1811
  %v1823 = vadd.f32 %v1791, %v1811
  %v1824 = vadd.f32 %v1792, %v1816
  %v1825 = vadd.f32 %v1793, %v1816
  %v1826 = vmax.f32 %v1818, 0.0
  %v1827 = vmax.f32 %v1819, 0.0
  %v1828 = vmax.f32 %v1820, 0.0
  %v1829 = vmax.f32 %v1821, 0.0
  %v1830 = vmax.f32 %v1822, 0.0
  %v1831 = vmax.f32 %v1823, 0.0
  %v1832 = vmax.f32 %v1824, 0.0
  %v1833 = vmax.f32 %v1825, 0.0
  %v1834 = vld [vmem:[%s10] sm:$0xff]
  %v1835 = vld [vmem:[%s10 + $0x8] sm:$0xff]
  %v1836 = vld [vmem:[%s10 + $0x10] sm:$0xff]
  %v1837 = vld [vmem:[%s10 + $0x18] sm:$0xff]
  %v1838 = vld [vmem:[%s10 + $0x20] sm:$0xff]
  %v1839 = vld [vmem:[%s10 + $0x28] sm:$0xff]
  %v1840 = vld [vmem:[%s10 + $0x30] sm:$0xff]
  %v1841 = vld [vmem:[%s10 + $0x38] sm:$0xff]
  %v1842 = vld [vmem:[%s10 + $0x40] sm:$0xff]
  %v1843 = vld [vmem:[%s10 + $0x48] sm:$0xff]
  %v1844 = vld [vmem:[%s10 + $0x50] sm:$0xff]
  %v1845 = vld [vmem:[%s10 + $0x58] sm:$0xff]
  %v1846 = vld [vmem:[%s10 + $0x60] sm:$0xff]
  %v1847 = vld [vmem:[%s10 + $0x68] sm:$0xff]
  %v1848 = vld [vmem:[%s10 + $0x70] sm:$0xff]
  %v1849 = vld [vmem:[%s10 + $0x78] sm:$0xff]
  %v1850 = vld [vmem:[%s10 + $0x80] sm:$0xff]
  %v1851 = vld [vmem:[%s10 + $0x88] sm:$0xff]
  %vm1852 = vcmask 261120
  %v1854 = vsel %vm1852, %v1834, 0
  %v1857 = vsel %vm1852, %v1835, 0
  %v1860 = vsel %vm1852, %v1836, 0
  %v1863 = vsel %vm1852, %v1837, 0
  %v1866 = vsel %vm1852, %v1838, 0
  %v1869 = vsel %vm1852, %v1839, 0
  %v1872 = vsel %vm1852, %v1840, 0
  %v1875 = vsel %vm1852, %v1841, 0
  %v1878 = vsel %vm1852, %v1842, 0
  %v1881 = vsel %vm1852, %v1843, 0
  %v1884 = vsel %vm1852, %v1844, 0
  %v1887 = vsel %vm1852, %v1845, 0
  %v1890 = vsel %vm1852, %v1846, 0
  %v1893 = vsel %vm1852, %v1847, 0
  %v1896 = vsel %vm1852, %v1848, 0
  %v1899 = vsel %vm1852, %v1849, 0
  %v1902 = vsel %vm1852, %v1850, 0
  %v1905 = vsel %vm1852, %v1851, 0
  %1907 = vmatprep.subr.mxu0 %v1827
  %1908 = vmatpush1.msra.mxu0 %v1826
  %1909 = vmatprep.subr.mxu0 %v1829
  %1910 = vmatpush1.msra.mxu0 %v1828
  %1911 = vmatprep.subr.mxu0 %v1831
  %1912 = vmatpush1.msra.mxu0 %v1830
  %1913 = vmatprep.subr.mxu0 %v1833
  %1914 = vmatpush1.msra.mxu0 %v1832
  %1915 = vmatprep.subr.mxu0 0.0
  %1916 = vmatpush1.msra.mxu0 0.0
  %1917 = vmatprep.subr.mxu0 0.0
  %1918 = vmatpush1.msra.mxu0 0.0
  %1919 = vmatprep.subr.mxu0 0.0
  %1920 = vmatpush1.msra.mxu0 0.0
  %1921 = vmatprep.subr.mxu0 0.0
  %1922 = vmatpush1.msra.mxu0 0.0
  %1923 = vmatprep.subr.mxu0 0.0
  %1924 = vmatpush1.msra.mxu0 0.0
  %1925 = vmatprep.subr.mxu0 0.0
  %1926 = vmatpush1.msra.mxu0 0.0
  %1927 = vmatprep.subr.mxu0 0.0
  %1928 = vmatpush1.msra.mxu0 0.0
  %1929 = vmatprep.subr.mxu0 0.0
  %1930 = vmatpush1.msra.mxu0 0.0
  %1931 = vmatprep.subr.mxu0 0.0
  %1932 = vmatpush1.msra.mxu0 0.0
  %1933 = vmatprep.subr.mxu0 0.0
  %1934 = vmatpush1.msra.mxu0 0.0
  %1935 = vmatprep.subr.mxu0 0.0
  %1936 = vmatpush1.msra.mxu0 0.0
  %1937 = vmatprep.subr.mxu0 0.0
  %1938 = vmatpush1.msra.mxu0 0.0
  %1939 = vmatprep.subr.mxu0 0.0
  %1940 = vmatpush1.msra.mxu0 0.0
  %1941 = vmatprep.subr.mxu0 0.0
  %1942 = vmatpush1.msra.mxu0 0.0
  %1943 = vmatprep.subr.mxu0 0.0
  %1944 = vmatpush1.msra.mxu0 0.0
  %1945 = vmatprep.subr.mxu0 0.0
  %1946 = vmatpush1.msra.mxu0 0.0
  %1947 = vmatprep.subr.mxu0 0.0
  %1948 = vmatpush1.msra.mxu0 0.0
  %1949 = vmatprep.subr.mxu0 0.0
  %1950 = vmatpush1.msra.mxu0 0.0
  %1951 = vmatprep.subr.mxu0 0.0
  %1952 = vmatpush1.msra.mxu0 0.0
  %1953 = vmatprep.subr.mxu0 0.0
  %1954 = vmatpush1.msra.mxu0 0.0
  %1955 = vmatprep.subr.mxu0 0.0
  %1956 = vmatpush1.msra.mxu0 0.0
  %1957 = vmatprep.subr.mxu0 0.0
  %1958 = vmatpush1.msra.mxu0 0.0
  %1959 = vmatprep.subr.mxu0 0.0
  %1960 = vmatpush1.msra.mxu0 0.0
  %1961 = vmatprep.subr.mxu0 0.0
  %1962 = vmatpush1.msra.mxu0 0.0
  %1963 = vmatprep.subr.mxu0 0.0
  %1964 = vmatpush1.msra.mxu0 0.0
  %1965 = vmatprep.subr.mxu0 0.0
  %1966 = vmatpush1.msra.mxu0 0.0
  %1967 = vmatprep.subr.mxu0 0.0
  %1968 = vmatpush1.msra.mxu0 0.0
  %1969 = vmatprep.subr.mxu0 0.0
  %1970 = vmatpush1.msra.mxu0 0.0
  %1971 = vmatprep.mubr.f32.mxu0 0.0
  %1972 = vmatmul.mubr.f32.gmra.mrb[0].mxu0 %v1854
  %v1973 = vpop.f32.mrb[0].mxu0
  %v1974 = vadd.f32 0.0, %v1973
  %v1975 = vpop.f32.mrb[0].mxu0
  %v1976 = vadd.f32 0.0, %v1975
  %1977 = vmatprep.mubr.f32.mxu0 0.0
  %1978 = vmatmul.mubr.f32.gmra.mrb[0].mxu0 %v1857
  %v1979 = vpop.f32.mrb[0].mxu0
  %v1980 = vadd.f32 0.0, %v1979
  %v1981 = vpop.f32.mrb[0].mxu0
  %v1982 = vadd.f32 0.0, %v1981
  %1983 = vmatprep.mubr.f32.mxu0 0.0
  %1984 = vmatmul.mubr.f32.gmra.mrb[0].mxu0 %v1860
  %v1985 = vpop.f32.mrb[0].mxu0
  %v1986 = vadd.f32 0.0, %v1985
  %v1987 = vpop.f32.mrb[0].mxu0
  %v1988 = vadd.f32 0.0, %v1987
  %1989 = vmatprep.mubr.f32.mxu0 0.0
  %1990 = vmatmul.mubr.f32.gmra.mrb[0].mxu0 %v1863
  %v1991 = vpop.f32.mrb[0].mxu0
  %v1992 = vadd.f32 0.0, %v1991
  %v1993 = vpop.f32.mrb[0].mxu0
  %v1994 = vadd.f32 0.0, %v1993
  %1995 = vmatprep.mubr.f32.mxu0 0.0
  %1996 = vmatmul.mubr.f32.gmra.mrb[0].mxu0 %v1866
  %v1997 = vpop.f32.mrb[0].mxu0
  %v1998 = vadd.f32 0.0, %v1997
  %v1999 = vpop.f32.mrb[0].mxu0
  %v2000 = vadd.f32 0.0, %v1999
  %2001 = vmatprep.mubr.f32.mxu0 0.0
  %2002 = vmatmul.mubr.f32.gmra.mrb[0].mxu0 %v1869
  %v2003 = vpop.f32.mrb[0].mxu0
  %v2004 = vadd.f32 0.0, %v2003
  %v2005 = vpop.f32.mrb[0].mxu0
  %v2006 = vadd.f32 0.0, %v2005
  %2007 = vmatprep.mubr.f32.mxu0 0.0
  %2008 = vmatmul.mubr.f32.gmra.mrb[0].mxu0 %v1872
  %v2009 = vpop.f32.mrb[0].mxu0
  %v2010 = vadd.f32 0.0, %v2009
  %v2011 = vpop.f32.mrb[0].mxu0
  %v2012 = vadd.f32 0.0, %v2011
  %2013 = vmatprep.mubr.f32.mxu0 0.0
  %2014 = vmatmul.mubr.f32.gmra.mrb[0].mxu0 %v1875
  %v2015 = vpop.f32.mrb[0].mxu0
  %v2016 = vadd.f32 0.0, %v2015
  %v2017 = vpop.f32.mrb[0].mxu0
  %v2018 = vadd.f32 0.0, %v2017
  %2019 = vmatprep.mubr.f32.mxu0 0.0
  %2020 = vmatmul.mubr.f32.gmra.mrb[0].mxu0 %v1878
  %v2021 = vpop.f32.mrb[0].mxu0
  %v2022 = vadd.f32 0.0, %v2021
  %v2023 = vpop.f32.mrb[0].mxu0
  %v2024 = vadd.f32 0.0, %v2023
  %2025 = vmatprep.mubr.f32.mxu0 0.0
  %2026 = vmatmul.mubr.f32.gmra.mrb[0].mxu0 %v1881
  %v2027 = vpop.f32.mrb[0].mxu0
  %v2028 = vadd.f32 0.0, %v2027
  %v2029 = vpop.f32.mrb[0].mxu0
  %v2030 = vadd.f32 0.0, %v2029
  %2031 = vmatprep.mubr.f32.mxu0 0.0
  %2032 = vmatmul.mubr.f32.gmra.mrb[0].mxu0 %v1884
  %v2033 = vpop.f32.mrb[0].mxu0
  %v2034 = vadd.f32 0.0, %v2033
  %v2035 = vpop.f32.mrb[0].mxu0
  %v2036 = vadd.f32 0.0, %v2035
  %2037 = vmatprep.mubr.f32.mxu0 0.0
  %2038 = vmatmul.mubr.f32.gmra.mrb[0].mxu0 %v1887
  %v2039 = vpop.f32.mrb[0].mxu0
  %v2040 = vadd.f32 0.0, %v2039
  %v2041 = vpop.f32.mrb[0].mxu0
  %v2042 = vadd.f32 0.0, %v2041
  %2043 = vmatprep.mubr.f32.mxu0 0.0
  %2044 = vmatmul.mubr.f32.gmra.mrb[0].mxu0 %v1890
  %v2045 = vpop.f32.mrb[0].mxu0
  %v2046 = vadd.f32 0.0, %v2045
  %v2047 = vpop.f32.mrb[0].mxu0
  %v2048 = vadd.f32 0.0, %v2047
  %2049 = vmatprep.mubr.f32.mxu0 0.0
  %2050 = vmatmul.mubr.f32.gmra.mrb[0].mxu0 %v1893
  %v2051 = vpop.f32.mrb[0].mxu0
  %v2052 = vadd.f32 0.0, %v2051
  %v2053 = vpop.f32.mrb[0].mxu0
  %v2054 = vadd.f32 0.0, %v2053
  %2055 = vmatprep.mubr.f32.mxu0 0.0
  %2056 = vmatmul.mubr.f32.gmra.mrb[0].mxu0 %v1896
  %v2057 = vpop.f32.mrb[0].mxu0
  %v2058 = vadd.f32 0.0, %v2057
  %v2059 = vpop.f32.mrb[0].mxu0
  %v2060 = vadd.f32 0.0, %v2059
  %2061 = vmatprep.mubr.f32.mxu0 0.0
  %2062 = vmatmul.mubr.f32.gmra.mrb[0].mxu0 %v1899
  %v2063 = vpop.f32.mrb[0].mxu0
  %v2064 = vadd.f32 0.0, %v2063
  %v2065 = vpop.f32.mrb[0].mxu0
  %v2066 = vadd.f32 0.0, %v2065
  %2067 = vmatprep.mubr.f32.mxu0 0.0
  %2068 = vmatmul.mubr.f32.gmra.mrb[0].mxu0 %v1902
  %v2069 = vpop.f32.mrb[0].mxu0
  %v2070 = vadd.f32 0.0, %v2069
  %v2071 = vpop.f32.mrb[0].mxu0
  %v2072 = vadd.f32 0.0, %v2071
  %2073 = vmatprep.mubr.f32.mxu0 0.0
  %2074 = vmatmul.mubr.f32.gmra.mrb[0].mxu0 %v1905
  %v2075 = vpop.f32.mrb[0].mxu0
  %v2076 = vadd.f32 0.0, %v2075
  %v2077 = vpop.f32.mrb[0].mxu0
  %v2078 = vadd.f32 0.0, %v2077
  %2079 = vdwg.mxu0
  %2080 = vrot.lane.b32.xlu0 %v1974, 17
  %v2081 = vpop.permute.xlu0 %2080
  %2082 = vrot.lane.b32.xlu0 %v1980, 17
  %v2083 = vpop.permute.xlu0 %2082
  %2084 = vrot.lane.b32.xlu0 %v1976, 17
  %v2085 = vpop.permute.xlu0 %2084
  %2086 = vrot.lane.b32.xlu0 %v1982, 17
  %v2087 = vpop.permute.xlu0 %2086
  %v2088 = vsel %vm1410, %v2081, %v2085
  %v2089 = vsel %vm1410, %v2083, %v2087
  %v2090 = vsel %vm1410, %v2085, %v2081
  %v2091 = vsel %vm1410, %v2087, %v2083
  %v2092 = vmul.f32 %v2090, %v1422
  %v2093 = vmul.f32 %v2088, %v1426
  %v2094 = vmul.f32 %v2091, %v1422
  %v2095 = vmul.f32 %v2089, %v1426
  %v2096 = vadd.f32 %v2092, 0.0
  %v2097 = vadd.f32 %v2093, 0.0
  %v2098 = vadd.f32 %v2094, 0.0
  %v2099 = vadd.f32 %v2095, 0.0
  %2100 = vrot.lane.b32.xlu0 %v1986, 16
  %v2101 = vpop.permute.xlu0 %2100
  %2102 = vrot.lane.b32.xlu0 %v1992, 16
  %v2103 = vpop.permute.xlu0 %2102
  %2104 = vrot.lane.b32.xlu0 %v1988, 16
  %v2105 = vpop.permute.xlu0 %2104
  %2106 = vrot.lane.b32.xlu0 %v1994, 16
  %v2107 = vpop.permute.xlu0 %2106
  %v2108 = vsel %vm1459, %v2101, %v2105
  %v2109 = vsel %vm1459, %v2103, %v2107
  %v2110 = vsel %vm1459, %v2105, %v2101
  %v2111 = vsel %vm1459, %v2107, %v2103
  %v2112 = vmul.f32 %v2110, %v1471
  %v2113 = vmul.f32 %v2108, %v1475
  %v2114 = vmul.f32 %v2111, %v1471
  %v2115 = vmul.f32 %v2109, %v1475
  %v2116 = vadd.f32 %v2096, %v2112
  %v2117 = vadd.f32 %v2097, %v2113
  %v2118 = vadd.f32 %v2098, %v2114
  %v2119 = vadd.f32 %v2099, %v2115
  %2120 = vrot.lane.b32.xlu0 %v1998, 15
  %v2121 = vpop.permute.xlu0 %2120
  %2122 = vrot.lane.b32.xlu0 %v2004, 15
  %v2123 = vpop.permute.xlu0 %2122
  %2124 = vrot.lane.b32.xlu0 %v2000, 15
  %v2125 = vpop.permute.xlu0 %2124
  %2126 = vrot.lane.b32.xlu0 %v2006, 15
  %v2127 = vpop.permute.xlu0 %2126
  %v2128 = vsel %vm1508, %v2121, %v2125
  %v2129 = vsel %vm1508, %v2123, %v2127
  %v2130 = vsel %vm1508, %v2125, %v2121
  %v2131 = vsel %vm1508, %v2127, %v2123
  %v2132 = vmul.f32 %v2130, %v1520
  %v2133 = vmul.f32 %v2128, %v1524
  %v2134 = vmul.f32 %v2131, %v1520
  %v2135 = vmul.f32 %v2129, %v1524
  %v2136 = vadd.f32 %v2116, %v2132
  %v2137 = vadd.f32 %v2117, %v2133
  %v2138 = vadd.f32 %v2118, %v2134
  %v2139 = vadd.f32 %v2119, %v2135
  %2140 = vrot.lane.b32.xlu0 %v2010, 1
  %v2141 = vpop.permute.xlu0 %2140
  %2142 = vrot.lane.b32.xlu0 %v2016, 1
  %v2143 = vpop.permute.xlu0 %2142
  %2144 = vrot.lane.b32.xlu0 %v2012, 1
  %v2145 = vpop.permute.xlu0 %2144
  %2146 = vrot.lane.b32.xlu0 %v2018, 1
  %v2147 = vpop.permute.xlu0 %2146
  %v2148 = vsel %vm1557, %v2141, %v2145
  %v2149 = vsel %vm1557, %v2143, %v2147
  %v2150 = vsel %vm1557, %v2145, %v2141
  %v2151 = vsel %vm1557, %v2147, %v2143
  %v2152 = vmul.f32 %v2150, %v1569
  %v2153 = vmul.f32 %v2148, %v1573
  %v2154 = vmul.f32 %v2151, %v1569
  %v2155 = vmul.f32 %v2149, %v1573
  %v2156 = vadd.f32 %v2136, %v2152
  %v2157 = vadd.f32 %v2137, %v2153
  %v2158 = vadd.f32 %v2138, %v2154
  %v2159 = vadd.f32 %v2139, %v2155
  %v2160 = vadd.f32 %v2156, %v2022
  %v2161 = vadd.f32 %v2157, %v2024
  %v2162 = vadd.f32 %v2158, %v2028
  %v2163 = vadd.f32 %v2159, %v2030
  %2164 = vrot.lane.b32.xlu0 %v2034, 127
  %v2165 = vpop.permute.xlu0 %2164
  %2166 = vrot.lane.b32.xlu0 %v2040, 127
  %v2167 = vpop.permute.xlu0 %2166
  %2168 = vrot.lane.b32.xlu0 %v2036, 127
  %v2169 = vpop.permute.xlu0 %2168
  %2170 = vrot.lane.b32.xlu0 %v2042, 127
  %v2171 = vpop.permute.xlu0 %2170
  %v2172 = vsel %vm1614, %v2165, %v2169
  %v2173 = vsel %vm1614, %v2167, %v2171
  %v2174 = vsel %vm1614, %v2169, %v2165
  %v2175 = vsel %vm1614, %v2171, %v2167
  %v2176 = vmul.f32 %v2172, %v1626
  %v2177 = vmul.f32 %v2174, %v1630
  %v2178 = vmul.f32 %v2173, %v1626
  %v2179 = vmul.f32 %v2175, %v1630
  %v2180 = vadd.f32 %v2160, %v2176
  %v2181 = vadd.f32 %v2161, %v2177
  %v2182 = vadd.f32 %v2162, %v2178
  %v2183 = vadd.f32 %v2163, %v2179
  %2184 = vrot.lane.b32.xlu0 %v2046, 113
  %v2185 = vpop.permute.xlu0 %2184
  %2186 = vrot.lane.b32.xlu0 %v2052, 113
  %v2187 = vpop.permute.xlu0 %2186
  %2188 = vrot.lane.b32.xlu0 %v2048, 113
  %v2189 = vpop.permute.xlu0 %2188
  %2190 = vrot.lane.b32.xlu0 %v2054, 113
  %v2191 = vpop.permute.xlu0 %2190
  %v2192 = vsel %vm1663, %v2185, %v2189
  %v2193 = vsel %vm1663, %v2187, %v2191
  %v2194 = vsel %vm1663, %v2189, %v2185
  %v2195 = vsel %vm1663, %v2191, %v2187
  %v2196 = vmul.f32 %v2192, %v1675
  %v2197 = vmul.f32 %v2194, %v1679
  %v2198 = vmul.f32 %v2193, %v1675
  %v2199 = vmul.f32 %v2195, %v1679
  %v2200 = vadd.f32 %v2180, %v2196
  %v2201 = vadd.f32 %v2181, %v2197
  %v2202 = vadd.f32 %v2182, %v2198
  %v2203 = vadd.f32 %v2183, %v2199
  %2204 = vrot.lane.b32.xlu0 %v2058, 112
  %v2205 = vpop.permute.xlu0 %2204
  %2206 = vrot.lane.b32.xlu0 %v2064, 112
  %v2207 = vpop.permute.xlu0 %2206
  %2208 = vrot.lane.b32.xlu0 %v2060, 112
  %v2209 = vpop.permute.xlu0 %2208
  %2210 = vrot.lane.b32.xlu0 %v2066, 112
  %v2211 = vpop.permute.xlu0 %2210
  %v2212 = vsel %vm1712, %v2205, %v2209
  %v2213 = vsel %vm1712, %v2207, %v2211
  %v2214 = vsel %vm1712, %v2209, %v2205
  %v2215 = vsel %vm1712, %v2211, %v2207
  %v2216 = vmul.f32 %v2212, %v1724
  %v2217 = vmul.f32 %v2214, %v1728
  %v2218 = vmul.f32 %v2213, %v1724
  %v2219 = vmul.f32 %v2215, %v1728
  %v2220 = vadd.f32 %v2200, %v2216
  %v2221 = vadd.f32 %v2201, %v2217
  %v2222 = vadd.f32 %v2202, %v2218
  %v2223 = vadd.f32 %v2203, %v2219
  %2224 = vrot.lane.b32.xlu0 %v2070, 111
  %v2225 = vpop.permute.xlu0 %2224
  %2226 = vrot.lane.b32.xlu0 %v2076, 111
  %v2227 = vpop.permute.xlu0 %2226
  %2228 = vrot.lane.b32.xlu0 %v2072, 111
  %v2229 = vpop.permute.xlu0 %2228
  %2230 = vrot.lane.b32.xlu0 %v2078, 111
  %v2231 = vpop.permute.xlu0 %2230
  %v2232 = vsel %vm1761, %v2225, %v2229
  %v2233 = vsel %vm1761, %v2227, %v2231
  %v2234 = vsel %vm1761, %v2229, %v2225
  %v2235 = vsel %vm1761, %v2231, %v2227
  %v2236 = vmul.f32 %v2232, %v1773
  %v2237 = vmul.f32 %v2234, %v1777
  %v2238 = vmul.f32 %v2233, %v1773
  %v2239 = vmul.f32 %v2235, %v1777
  %v2240 = vadd.f32 %v2220, %v2236
  %v2241 = vadd.f32 %v2221, %v2237
  %v2242 = vadd.f32 %v2222, %v2238
  %v2243 = vadd.f32 %v2223, %v2239
  %v2244 = vld [vmem:[%s11] sm:$0xff]
  %v2245 = vld [vmem:[%s11 + $0x8] sm:$0xff]
  %2247 = vset.pattern.permute.xlu0 0
  %2248 = vperm.xlu0 %2247, %v2244
  %v2249 = vpop.permute.xlu0 %2248
  %2252 = vset.pattern.permute.xlu0 0
  %2253 = vperm.xlu0 %2252, %v2245
  %v2254 = vpop.permute.xlu0 %2253
  %v2256 = vadd.f32 %v2240, %v2249
  %v2257 = vadd.f32 %v2241, %v2249
  %v2258 = vadd.f32 %v2242, %v2254
  %v2259 = vadd.f32 %v2243, %v2254
  %v2260 = vmax.f32 %v2256, 0.0
  %v2261 = vmax.f32 %v2257, 0.0
  %v2262 = vmax.f32 %v2258, 0.0
  %v2263 = vmax.f32 %v2259, 0.0
  %v2264 = vld [vmem:[%s12] sm:$0xff]
  %v2265 = vld [vmem:[%s13] sm:$0xff]
  %2267 = vset.pattern.permute.xlu0 0
  %2268 = vperm.xlu0 %2267, %v2265
  %v2269 = vpop.permute.xlu0 %2268
  %vm2271 = vcmask 130048
  %v2273 = vsel %vm2271, %v2264, 0
  %2275 = vmatprep.subr.mxu0 %v2261
  %2276 = vmatpush1.msra.mxu0 %v2260
  %2277 = vmatprep.subr.mxu0 %v2263
  %2278 = vmatpush1.msra.mxu0 %v2262
  %2279 = vmatprep.subr.mxu0 0.0
  %2280 = vmatpush1.msra.mxu0 0.0
  %2281 = vmatprep.subr.mxu0 0.0
  %2282 = vmatpush1.msra.mxu0 0.0
  %2283 = vmatprep.subr.mxu0 0.0
  %2284 = vmatpush1.msra.mxu0 0.0
  %2285 = vmatprep.subr.mxu0 0.0
  %2286 = vmatpush1.msra.mxu0 0.0
  %2287 = vmatprep.subr.mxu0 0.0
  %2288 = vmatpush1.msra.mxu0 0.0
  %2289 = vmatprep.subr.mxu0 0.0
  %2290 = vmatpush1.msra.mxu0 0.0
  %2291 = vmatprep.subr.mxu0 0.0
  %2292 = vmatpush1.msra.mxu0 0.0
  %2293 = vmatprep.subr.mxu0 0.0
  %2294 = vmatpush1.msra.mxu0 0.0
  %2295 = vmatprep.subr.mxu0 0.0
  %2296 = vmatpush1.msra.mxu0 0.0
  %2297 = vmatprep.subr.mxu0 0.0
  %2298 = vmatpush1.msra.mxu0 0.0
  %2299 = vmatprep.subr.mxu0 0.0
  %2300 = vmatpush1.msra.mxu0 0.0
  %2301 = vmatprep.subr.mxu0 0.0
  %2302 = vmatpush1.msra.mxu0 0.0
  %2303 = vmatprep.subr.mxu0 0.0
  %2304 = vmatpush1.msra.mxu0 0.0
  %2305 = vmatprep.subr.mxu0 0.0
  %2306 = vmatpush1.msra.mxu0 0.0
  %2307 = vmatprep.subr.mxu0 0.0
  %2308 = vmatpush1.msra.mxu0 0.0
  %2309 = vmatprep.subr.mxu0 0.0
  %2310 = vmatpush1.msra.mxu0 0.0
  %2311 = vmatprep.subr.mxu0 0.0
  %2312 = vmatpush1.msra.mxu0 0.0
  %2313 = vmatprep.subr.mxu0 0.0
  %2314 = vmatpush1.msra.mxu0 0.0
  %2315 = vmatprep.subr.mxu0 0.0
  %2316 = vmatpush1.msra.mxu0 0.0
  %2317 = vmatprep.subr.mxu0 0.0
  %2318 = vmatpush1.msra.mxu0 0.0
  %2319 = vmatprep.subr.mxu0 0.0
  %2320 = vmatpush1.msra.mxu0 0.0
  %2321 = vmatprep.subr.mxu0 0.0
  %2322 = vmatpush1.msra.mxu0 0.0
  %2323 = vmatprep.subr.mxu0 0.0
  %2324 = vmatpush1.msra.mxu0 0.0
  %2325 = vmatprep.subr.mxu0 0.0
  %2326 = vmatpush1.msra.mxu0 0.0
  %2327 = vmatprep.subr.mxu0 0.0
  %2328 = vmatpush1.msra.mxu0 0.0
  %2329 = vmatprep.subr.mxu0 0.0
  %2330 = vmatpush1.msra.mxu0 0.0
  %2331 = vmatprep.subr.mxu0 0.0
  %2332 = vmatpush1.msra.mxu0 0.0
  %2333 = vmatprep.subr.mxu0 0.0
  %2334 = vmatpush1.msra.mxu0 0.0
  %2335 = vmatprep.subr.mxu0 0.0
  %2336 = vmatpush1.msra.mxu0 0.0
  %2337 = vmatprep.subr.mxu0 0.0
  %2338 = vmatpush1.msra.mxu0 0.0
  %2339 = vmatprep.mubr.f32.mxu0 0.0
  %2340 = vmatmul.mubr.f32.gmra.mrb[0].mxu0 %v2273
  %v2341 = vpop.f32.mrb[0].mxu0
  %v2342 = vadd.f32 %v2269, %v2341
  %v2343 = vpop.f32.mrb[0].mxu0
  %v2344 = vadd.f32 %v2269, %v2343
  %2345 = vdwg.mxu0
  %v2346 = vld [vmem:[%s14] sm:$0xff]
  %2348 = vset.pattern.permute.xlu0 0
  %2349 = vperm.xlu0 %2348, %v2346
  %v2350 = vpop.permute.xlu0 %2349
  %v2352 = vsub.f32 %v2342, %v2350
  %v2353 = vsub.f32 %v2344, %v2350
  %v2354 = vrot.slane %v2352, 4
  %v2355 = vmax.f32 %v2352, %v2354
  %v2356 = vrot.slane %v2355, 2
  %v2357 = vmax.f32 %v2355, %v2356
  %v2358 = vrot.slane %v2357, 1
  %v2359 = vmax.f32 %v2357, %v2358
  %v2360 = vrot.slane %v2353, 4
  %v2361 = vmax.f32 %v2353, %v2360
  %v2362 = vrot.slane %v2361, 2
  %v2363 = vmax.f32 %v2361, %v2362
  %v2364 = vrot.slane %v2363, 1
  %v2365 = vmax.f32 %v2363, %v2364
  %v2366 = vlaneseq
  %v2367 = vshrl.u32 %v2366, 7
  %v2368 = vcvt.s32.f32 %v2367
  %vm2369 = vcmp.eq.f32.partialorder %v2352, %v2359
  %vm2370 = vcmp.eq.f32.partialorder %v2353, %v2365
  %v2371 = vsel %vm2369, %v2368, 8.0
  %v2372 = vsel %vm2370, %v2368, 8.0
  %v2373 = vrot.slane %v2371, 4
  %v2374 = vmin.f32 %v2371, %v2373
  %v2375 = vrot.slane %v2374, 2
  %v2376 = vmin.f32 %v2374, %v2375
  %v2377 = vrot.slane %v2376, 1
  %v2378 = vmin.f32 %v2376, %v2377
  %v2379 = vrot.slane %v2372, 4
  %v2380 = vmin.f32 %v2372, %v2379
  %v2381 = vrot.slane %v2380, 2
  %v2382 = vmin.f32 %v2380, %v2381
  %v2383 = vrot.slane %v2382, 1
  %v2384 = vmin.f32 %v2382, %v2383
  %vm2385 = vcmp.eq.f32.partialorder %v2368, %v2378
  %vm2386 = vcmp.eq.f32.partialorder %v2368, %v2384
  %v2387 = vsel %vm2385, 1, 0
  %v2388 = vsel %vm2386, 1, 0
  %v2389 = vcvt.s32.f32 %v2387
  %v2390 = vcvt.s32.f32 %v2388
  %vm2391 = vcmp.gt.f32.partialorder %v2359, 0.1
  %vm2392 = vcmp.gt.f32.partialorder %v2365, 0.1
  %v2393 = vsel %vm2391, 1, 0
  %v2394 = vsel %vm2392, 1, 0
  %v2395 = vcvt.s32.f32 %v2393
  %v2396 = vcvt.s32.f32 %v2394
  %v2397 = vmul.f32 %v2389, %v2395
  %v2398 = vmul.f32 %v2390, %v2396
  %2399 = vst [vmem:[%s15] sm:$0xff] %v2397
  %2400 = vst [vmem:[%s15 + $0x8] sm:$0xff] %v2398
  %v2401 = vld [vmem:[%s136] sm:$0xff]
  %v2402 = vld [vmem:[%s136 + $0x8] sm:$0xff]
  %v2403 = vlaneseq
  %v2404 = vshrl.u32 %v2403, 7
  %v2405 = vsub.s32 0, %v2404
  %v2406 = vrot.slane %v2397, %v2405
  %v2407 = vlaneseq
  %v2408 = vshrl.u32 %v2407, 7
  %v2409 = vsub.s32 0, %v2408
  %v2410 = vrot.slane %v2398, %v2409
  %v2411 = vmul.f32 %v2401, %v2406
  %v2412 = vmul.f32 %v2402, %v2410
  %2413 = vst [vmem:[%s157] sm:$0xff] %v2411
  %2414 = vst [vmem:[%s157 + $0x8] sm:$0xff] %v2412
  %v2415 = vld [vmem:[%s143] sm:$0xff]
  %v2416 = vld [vmem:[%s143 + $0x8] sm:$0xff]
  %v2417 = vld [vmem:[%s143 + $0x10] sm:$0xff]
  %v2418 = vld [vmem:[%s143 + $0x18] sm:$0xff]
  %v2419 = vld [vmem:[%s143 + $0x20] sm:$0xff]
  %v2420 = vld [vmem:[%s143 + $0x28] sm:$0xff]
  %v2421 = vld [vmem:[%s143 + $0x30] sm:$0xff]
  %v2422 = vld [vmem:[%s143 + $0x38] sm:$0xff]
  %v2423 = vld [vmem:[%s143 + $0x40] sm:$0xff]
  %v2424 = vld [vmem:[%s143 + $0x48] sm:$0xff]
  %v2425 = vld [vmem:[%s143 + $0x50] sm:$0xff]
  %v2426 = vld [vmem:[%s143 + $0x58] sm:$0xff]
  %v2427 = vld [vmem:[%s143 + $0x60] sm:$0xff]
  %v2428 = vld [vmem:[%s143 + $0x68] sm:$0xff]
  %v2429 = vld [vmem:[%s143 + $0x70] sm:$0xff]
  %v2430 = vld [vmem:[%s143 + $0x78] sm:$0xff]
  %v2431 = vld [vmem:[%s143 + $0x80] sm:$0xff]
  %v2432 = vld [vmem:[%s143 + $0x88] sm:$0xff]
  %v2433 = vld [vmem:[%s143 + $0x90] sm:$0xff]
  %v2434 = vld [vmem:[%s143 + $0x98] sm:$0xff]
  %v2435 = vld [vmem:[%s143 + $0xa0] sm:$0xff]
  %v2436 = vld [vmem:[%s143 + $0xa8] sm:$0xff]
  %v2437 = vld [vmem:[%s143 + $0xb0] sm:$0xff]
  %v2438 = vld [vmem:[%s143 + $0xb8] sm:$0xff]
  %v2439 = vld [vmem:[%s143 + $0xc0] sm:$0xff]
  %v2440 = vld [vmem:[%s143 + $0xc8] sm:$0xff]
  %v2441 = vld [vmem:[%s143 + $0xd0] sm:$0xff]
  %v2442 = vld [vmem:[%s143 + $0xd8] sm:$0xff]
  %v2443 = vld [vmem:[%s143 + $0xe0] sm:$0xff]
  %v2444 = vld [vmem:[%s143 + $0xe8] sm:$0xff]
  %v2445 = vld [vmem:[%s143 + $0xf0] sm:$0xff]
  %v2446 = vld [vmem:[%s143 + $0xf8] sm:$0xff]
  %v2447 = vld [vmem:[%s143 + $0x100] sm:$0xff]
  %v2448 = vld [vmem:[%s143 + $0x108] sm:$0xff]
  %v2449 = vld [vmem:[%s143 + $0x110] sm:$0xff]
  %v2450 = vld [vmem:[%s143 + $0x118] sm:$0xff]
  %v2451 = vld [vmem:[%s143 + $0x120] sm:$0xff]
  %v2452 = vld [vmem:[%s143 + $0x128] sm:$0xff]
  %v2453 = vld [vmem:[%s143 + $0x130] sm:$0xff]
  %v2454 = vld [vmem:[%s143 + $0x138] sm:$0xff]
  %v2455 = vld [vmem:[%s143 + $0x140] sm:$0xff]
  %v2456 = vld [vmem:[%s143 + $0x148] sm:$0xff]
  %v2457 = vld [vmem:[%s143 + $0x150] sm:$0xff]
  %v2458 = vld [vmem:[%s143 + $0x158] sm:$0xff]
  %v2459 = vld [vmem:[%s143 + $0x160] sm:$0xff]
  %v2460 = vld [vmem:[%s143 + $0x168] sm:$0xff]
  %v2461 = vld [vmem:[%s143 + $0x170] sm:$0xff]
  %v2462 = vld [vmem:[%s143 + $0x178] sm:$0xff]
  %v2463 = vld [vmem:[%s143 + $0x180] sm:$0xff]
  %v2464 = vld [vmem:[%s143 + $0x188] sm:$0xff]
  %v2465 = vld [vmem:[%s143 + $0x190] sm:$0xff]
  %v2466 = vld [vmem:[%s143 + $0x198] sm:$0xff]
  %v2467 = vld [vmem:[%s143 + $0x1a0] sm:$0xff]
  %v2468 = vld [vmem:[%s143 + $0x1a8] sm:$0xff]
  %v2469 = vld [vmem:[%s143 + $0x1b0] sm:$0xff]
  %v2470 = vld [vmem:[%s143 + $0x1b8] sm:$0xff]
  %v2471 = vld [vmem:[%s143 + $0x1c0] sm:$0xff]
  %v2472 = vld [vmem:[%s143 + $0x1c8] sm:$0xff]
  %v2473 = vld [vmem:[%s143 + $0x1d0] sm:$0xff]
  %v2474 = vld [vmem:[%s143 + $0x1d8] sm:$0xff]
  %v2475 = vld [vmem:[%s143 + $0x1e0] sm:$0xff]
  %v2476 = vld [vmem:[%s143 + $0x1e8] sm:$0xff]
  %v2477 = vld [vmem:[%s143 + $0x1f0] sm:$0xff]
  %v2478 = vld [vmem:[%s143 + $0x1f8] sm:$0xff]
  %v2479 = vlaneseq
  %v2480 = vshrl.u32 %v2479, 7
  %v2481 = vsub.s32 1, %v2480
  %v2482 = vrot.slane %v2397, %v2481
  %v2483 = vlaneseq
  %v2484 = vshrl.u32 %v2483, 7
  %v2485 = vsub.s32 1, %v2484
  %v2486 = vrot.slane %v2398, %v2485
  %v2487 = vmul.f32 %v2415, %v2482
  %v2488 = vmul.f32 %v2416, %v2486
  %v2489 = vmul.f32 %v2417, %v2482
  %v2490 = vmul.f32 %v2418, %v2486
  %v2491 = vmul.f32 %v2419, %v2482
  %v2492 = vmul.f32 %v2420, %v2486
  %v2493 = vmul.f32 %v2421, %v2482
  %v2494 = vmul.f32 %v2422, %v2486
  %v2495 = vmul.f32 %v2423, %v2482
  %v2496 = vmul.f32 %v2424, %v2486
  %v2497 = vmul.f32 %v2425, %v2482
  %v2498 = vmul.f32 %v2426, %v2486
  %v2499 = vmul.f32 %v2427, %v2482
  %v2500 = vmul.f32 %v2428, %v2486
  %v2501 = vmul.f32 %v2429, %v2482
  %v2502 = vmul.f32 %v2430, %v2486
  %v2503 = vmul.f32 %v2431, %v2482
  %v2504 = vmul.f32 %v2432, %v2486
  %v2505 = vmul.f32 %v2433, %v2482
  %v2506 = vmul.f32 %v2434, %v2486
  %v2507 = vmul.f32 %v2435, %v2482
  %v2508 = vmul.f32 %v2436, %v2486
  %v2509 = vmul.f32 %v2437, %v2482
  %v2510 = vmul.f32 %v2438, %v2486
  %v2511 = vmul.f32 %v2439, %v2482
  %v2512 = vmul.f32 %v2440, %v2486
  %v2513 = vmul.f32 %v2441, %v2482
  %v2514 = vmul.f32 %v2442, %v2486
  %v2515 = vmul.f32 %v2443, %v2482
  %v2516 = vmul.f32 %v2444, %v2486
  %v2517 = vmul.f32 %v2445, %v2482
  %v2518 = vmul.f32 %v2446, %v2486
  %v2519 = vmul.f32 %v2447, %v2482
  %v2520 = vmul.f32 %v2448, %v2486
  %v2521 = vmul.f32 %v2449, %v2482
  %v2522 = vmul.f32 %v2450, %v2486
  %v2523 = vmul.f32 %v2451, %v2482
  %v2524 = vmul.f32 %v2452, %v2486
  %v2525 = vmul.f32 %v2453, %v2482
  %v2526 = vmul.f32 %v2454, %v2486
  %v2527 = vmul.f32 %v2455, %v2482
  %v2528 = vmul.f32 %v2456, %v2486
  %v2529 = vmul.f32 %v2457, %v2482
  %v2530 = vmul.f32 %v2458, %v2486
  %v2531 = vmul.f32 %v2459, %v2482
  %v2532 = vmul.f32 %v2460, %v2486
  %v2533 = vmul.f32 %v2461, %v2482
  %v2534 = vmul.f32 %v2462, %v2486
  %v2535 = vmul.f32 %v2463, %v2482
  %v2536 = vmul.f32 %v2464, %v2486
  %v2537 = vmul.f32 %v2465, %v2482
  %v2538 = vmul.f32 %v2466, %v2486
  %v2539 = vmul.f32 %v2467, %v2482
  %v2540 = vmul.f32 %v2468, %v2486
  %v2541 = vmul.f32 %v2469, %v2482
  %v2542 = vmul.f32 %v2470, %v2486
  %v2543 = vmul.f32 %v2471, %v2482
  %v2544 = vmul.f32 %v2472, %v2486
  %v2545 = vmul.f32 %v2473, %v2482
  %v2546 = vmul.f32 %v2474, %v2486
  %v2547 = vmul.f32 %v2475, %v2482
  %v2548 = vmul.f32 %v2476, %v2486
  %v2549 = vmul.f32 %v2477, %v2482
  %v2550 = vmul.f32 %v2478, %v2486
  %2551 = vst [vmem:[%s164] sm:$0xff] %v2487
  %2552 = vst [vmem:[%s164 + $0x8] sm:$0xff] %v2488
  %2553 = vst [vmem:[%s164 + $0x10] sm:$0xff] %v2489
  %2554 = vst [vmem:[%s164 + $0x18] sm:$0xff] %v2490
  %2555 = vst [vmem:[%s164 + $0x20] sm:$0xff] %v2491
  %2556 = vst [vmem:[%s164 + $0x28] sm:$0xff] %v2492
  %2557 = vst [vmem:[%s164 + $0x30] sm:$0xff] %v2493
  %2558 = vst [vmem:[%s164 + $0x38] sm:$0xff] %v2494
  %2559 = vst [vmem:[%s164 + $0x40] sm:$0xff] %v2495
  %2560 = vst [vmem:[%s164 + $0x48] sm:$0xff] %v2496
  %2561 = vst [vmem:[%s164 + $0x50] sm:$0xff] %v2497
  %2562 = vst [vmem:[%s164 + $0x58] sm:$0xff] %v2498
  %2563 = vst [vmem:[%s164 + $0x60] sm:$0xff] %v2499
  %2564 = vst [vmem:[%s164 + $0x68] sm:$0xff] %v2500
  %2565 = vst [vmem:[%s164 + $0x70] sm:$0xff] %v2501
  %2566 = vst [vmem:[%s164 + $0x78] sm:$0xff] %v2502
  %2567 = vst [vmem:[%s164 + $0x80] sm:$0xff] %v2503
  %2568 = vst [vmem:[%s164 + $0x88] sm:$0xff] %v2504
  %2569 = vst [vmem:[%s164 + $0x90] sm:$0xff] %v2505
  %2570 = vst [vmem:[%s164 + $0x98] sm:$0xff] %v2506
  %2571 = vst [vmem:[%s164 + $0xa0] sm:$0xff] %v2507
  %2572 = vst [vmem:[%s164 + $0xa8] sm:$0xff] %v2508
  %2573 = vst [vmem:[%s164 + $0xb0] sm:$0xff] %v2509
  %2574 = vst [vmem:[%s164 + $0xb8] sm:$0xff] %v2510
  %2575 = vst [vmem:[%s164 + $0xc0] sm:$0xff] %v2511
  %2576 = vst [vmem:[%s164 + $0xc8] sm:$0xff] %v2512
  %2577 = vst [vmem:[%s164 + $0xd0] sm:$0xff] %v2513
  %2578 = vst [vmem:[%s164 + $0xd8] sm:$0xff] %v2514
  %2579 = vst [vmem:[%s164 + $0xe0] sm:$0xff] %v2515
  %2580 = vst [vmem:[%s164 + $0xe8] sm:$0xff] %v2516
  %2581 = vst [vmem:[%s164 + $0xf0] sm:$0xff] %v2517
  %2582 = vst [vmem:[%s164 + $0xf8] sm:$0xff] %v2518
  %2583 = vst [vmem:[%s164 + $0x100] sm:$0xff] %v2519
  %2584 = vst [vmem:[%s164 + $0x108] sm:$0xff] %v2520
  %2585 = vst [vmem:[%s164 + $0x110] sm:$0xff] %v2521
  %2586 = vst [vmem:[%s164 + $0x118] sm:$0xff] %v2522
  %2587 = vst [vmem:[%s164 + $0x120] sm:$0xff] %v2523
  %2588 = vst [vmem:[%s164 + $0x128] sm:$0xff] %v2524
  %2589 = vst [vmem:[%s164 + $0x130] sm:$0xff] %v2525
  %2590 = vst [vmem:[%s164 + $0x138] sm:$0xff] %v2526
  %2591 = vst [vmem:[%s164 + $0x140] sm:$0xff] %v2527
  %2592 = vst [vmem:[%s164 + $0x148] sm:$0xff] %v2528
  %2593 = vst [vmem:[%s164 + $0x150] sm:$0xff] %v2529
  %2594 = vst [vmem:[%s164 + $0x158] sm:$0xff] %v2530
  %2595 = vst [vmem:[%s164 + $0x160] sm:$0xff] %v2531
  %2596 = vst [vmem:[%s164 + $0x168] sm:$0xff] %v2532
  %2597 = vst [vmem:[%s164 + $0x170] sm:$0xff] %v2533
  %2598 = vst [vmem:[%s164 + $0x178] sm:$0xff] %v2534
  %2599 = vst [vmem:[%s164 + $0x180] sm:$0xff] %v2535
  %2600 = vst [vmem:[%s164 + $0x188] sm:$0xff] %v2536
  %2601 = vst [vmem:[%s164 + $0x190] sm:$0xff] %v2537
  %2602 = vst [vmem:[%s164 + $0x198] sm:$0xff] %v2538
  %2603 = vst [vmem:[%s164 + $0x1a0] sm:$0xff] %v2539
  %2604 = vst [vmem:[%s164 + $0x1a8] sm:$0xff] %v2540
  %2605 = vst [vmem:[%s164 + $0x1b0] sm:$0xff] %v2541
  %2606 = vst [vmem:[%s164 + $0x1b8] sm:$0xff] %v2542
  %2607 = vst [vmem:[%s164 + $0x1c0] sm:$0xff] %v2543
  %2608 = vst [vmem:[%s164 + $0x1c8] sm:$0xff] %v2544
  %2609 = vst [vmem:[%s164 + $0x1d0] sm:$0xff] %v2545
  %2610 = vst [vmem:[%s164 + $0x1d8] sm:$0xff] %v2546
  %2611 = vst [vmem:[%s164 + $0x1e0] sm:$0xff] %v2547
  %2612 = vst [vmem:[%s164 + $0x1e8] sm:$0xff] %v2548
  %2613 = vst [vmem:[%s164 + $0x1f0] sm:$0xff] %v2549
  %2614 = vst [vmem:[%s164 + $0x1f8] sm:$0xff] %v2550
  %v2615 = vld [vmem:[%s150] sm:$0xff]
  %v2616 = vld [vmem:[%s150 + $0x8] sm:$0xff]
  %v2617 = vlaneseq
  %v2618 = vshrl.u32 %v2617, 7
  %v2619 = vsub.s32 2, %v2618
  %v2620 = vrot.slane %v2397, %v2619
  %v2621 = vlaneseq
  %v2622 = vshrl.u32 %v2621, 7
  %v2623 = vsub.s32 2, %v2622
  %v2624 = vrot.slane %v2398, %v2623
  %v2625 = vmul.f32 %v2615, %v2620
  %v2626 = vmul.f32 %v2616, %v2624
  %2627 = vst [vmem:[%s171] sm:$0xff] %v2625
  %2628 = vst [vmem:[%s171 + $0x8] sm:$0xff] %v2626
  %s2629 = sadd.s32 0, 1
  %p2630 = scmp.lt.s32.totalorder %s2629, 1
  %s2631 = scalar_select %p2630, %s2629, 1
  %s2632 = smul.addr %s2631, 2
  %s2633 = smul.addr %s2632, 8
  %s2634 = scalar_lea.vmem %s16, %s2633
  %s2635 = sadd.s32 0, 1
  %p2636 = scmp.lt.s32.totalorder %s2635, 1
  %s2637 = scalar_select %p2636, %s2635, 1
  %s2638 = smul.addr %s2637, 64
  %s2639 = smul.addr %s2638, 8
  %s2640 = scalar_lea.vmem %s17, %s2639
  %s2641 = sadd.s32 0, 1
  %p2642 = scmp.lt.s32.totalorder %s2641, 1
  %s2643 = scalar_select %p2642, %s2641, 1
  %s2644 = smul.addr %s2643, 2
  %s2645 = smul.addr %s2644, 8
  %s2646 = scalar_lea.vmem %s18, %s2645
  // Predicated region
  $region62: #{advanced_communication_forward.3} parent=0 // pred_check
    _
  $region63: #{advanced_communication_forward.3} parent=0 // pred_check_branch
    %2648 = sbr.rel (0) target = $region65
  $region64: #{advanced_communication_forward.3} parent=0 // pred_region
    _
  $region65: #{advanced_communication_forward.3} parent=0 // pred_fallthru
    _
  // Predicated region
  $region66: #{advanced_communication_forward.3} parent=0 // pred_check
    _
  $region67: #{advanced_communication_forward.3} parent=0 // pred_check_branch
    %2650 = sbr.rel (0) target = $region69
  $region68: #{advanced_communication_forward.3} parent=0 // pred_region
    %s2651 = sadd.s32 0, 1
  $region69: #{advanced_communication_forward.3} parent=0 // pred_fallthru
    _
  // Predicated region
  $region70: #{advanced_communication_forward.3} parent=0 // pred_check
    _
  $region71: #{advanced_communication_forward.3} parent=0 // pred_check_branch
    %2653 = sbr.rel (0) target = $region73
  $region72: #{advanced_communication_forward.3} parent=0 // pred_region
    %s2654 = sadd.s32 0, 1
  $region73: #{advanced_communication_forward.3} parent=0 // pred_fallthru
    _
  // Predicated region
  $region74: #{advanced_communication_forward.3} parent=0 // pred_check
    _
  $region75: #{advanced_communication_forward.3} parent=0 // pred_check_branch
    %2656 = sbr.rel (0) target = $region77
  $region76: #{advanced_communication_forward.3} parent=0 // pred_region
    %s2657 = sadd.s32 0, 1
  $region77: #{advanced_communication_forward.3} parent=0 // pred_fallthru
    _
  // Predicated region
  $region78: #{advanced_communication_forward.3} parent=0 // pred_check
    _
  $region79: #{advanced_communication_forward.3} parent=0 // pred_check_branch
    %2659 = sbr.rel (0) target = $region81
  $region80: #{advanced_communication_forward.3} parent=0 // pred_region
    _
  $region81: #{advanced_communication_forward.3} parent=0 // pred_fallthru
    _
  // Predicated region
  $region82: #{advanced_communication_forward.3} parent=0 // pred_check
    _
  $region83: #{advanced_communication_forward.3} parent=0 // pred_check_branch
    %2661 = sbr.rel (0) target = $region85
  $region84: #{advanced_communication_forward.3} parent=0 // pred_region
    %s2662 = sadd.s32 0, 1
    %p2663 = scmp.lt.s32.totalorder %s2662, 1
    %s2664 = scalar_select %p2663, %s2662, 1
    %s2665 = smul.addr %s2664, 2
    %s2666 = smul.addr %s2665, 8
    %s2667 = scalar_lea.vmem %s16, %s2666
  $region85: #{advanced_communication_forward.3} parent=0 // pred_fallthru
    _
  // Predicated region
  $region86: #{advanced_communication_forward.3} parent=0 // pred_check
    _
  $region87: #{advanced_communication_forward.3} parent=0 // pred_check_branch
    %2669 = sbr.rel (0) target = $region89
  $region88: #{advanced_communication_forward.3} parent=0 // pred_region
    %s2670 = sadd.s32 0, 1
    %p2671 = scmp.lt.s32.totalorder %s2670, 1
    %s2672 = scalar_select %p2671, %s2670, 1
    %s2673 = smul.addr %s2672, 64
    %s2674 = smul.addr %s2673, 8
    %s2675 = scalar_lea.vmem %s17, %s2674
  $region89: #{advanced_communication_forward.3} parent=0 // pred_fallthru
    _
  // Predicated region
  $region90: #{advanced_communication_forward.3} parent=0 // pred_check
    _
  $region91: #{advanced_communication_forward.3} parent=0 // pred_check_branch
    %2677 = sbr.rel (0) target = $region93
  $region92: #{advanced_communication_forward.3} parent=0 // pred_region
    %s2678 = sadd.s32 0, 1
    %p2679 = scmp.lt.s32.totalorder %s2678, 1
    %s2680 = scalar_select %p2679, %s2678, 1
    %s2681 = smul.addr %s2680, 2
    %s2682 = smul.addr %s2681, 8
    %s2683 = scalar_lea.vmem %s18, %s2682
  $region93: #{advanced_communication_forward.3} parent=0 // pred_fallthru
    _

</llo_original>
